<compile_context>
chip_gen: v5e
topology: v5e:2x2
jax: 0.10.0
libtpu: 0.0.40
codegen_flags: <defaults>
</compile_context>

<pallas_src>
import functools

import jax
import jax.numpy as jnp
from jax import lax
from jax.experimental import pallas as pl
from jax.experimental.pallas import tpu as pltpu


LRELU_SLOPE = 0.2
IN_EPS = 1e-5

_COMPILER_PARAMS = pltpu.CompilerParams(
    dimension_semantics=("parallel",),
    vmem_limit_bytes=32 * 1024 * 1024,   # explicit; safe on v5e/v6e/v7x
)

_TAPS = ((0, 0), (0, 1), (1, 0), (1, 1))     # tap index t = dh*2 + dw


# ---------------------------------------------------------------------------
# In-kernel helpers
# ---------------------------------------------------------------------------
def _leaky_relu(y):
    return jnp.where(y >= 0.0, y, LRELU_SLOPE * y)


def _conv_taps(x, w_ref, Ho, Wo, Kc):
    """4x4/stride-2 conv on a space-to-depth'd block as 4 whole-block matmuls.

    x     : (Ho+1, Wo+1, 4*Cin) bf16 value (padded + space-to-depth'd input)
    w_ref : (4, 4*Cin, Cout)    tap-major weights, tap t = dh*2 + dw (bf16)
    returns (Ho*Wo, Cout) f32
    """
    acc = None
    for t, (dh, dw) in enumerate(_TAPS):
        xt = x[dh:dh + Ho, dw:dw + Wo, :].reshape(Ho * Wo, Kc)
        p = jnp.dot(xt, w_ref[t], preferred_element_type=jnp.float32)
        acc = p if acc is None else acc + p
    return acc


def _instance_norm_lrelu(y, g, b, m):
    """y: (M, C) f32; per-channel mean / biased variance over the M spatial axis."""
    inv_m = 1.0 / float(m)
    mean = jnp.sum(y, axis=0, keepdims=True) * inv_m
    d = y - mean
    var = jnp.sum(d * d, axis=0, keepdims=True) * inv_m
    return _leaky_relu(d * lax.rsqrt(var + IN_EPS) * g + b)


# ---------------------------------------------------------------------------
# Pallas kernels (grid = (N,), one sample per step)
# ---------------------------------------------------------------------------
def _conv1_bias_lrelu_kernel(x_ref, w_ref, b_ref, o_ref, *, Ho, Wo, K):
    # Layer 1: Conv2d(k=4,s=2,p=1,bias=True) + LeakyReLU(0.2); full im2col input.
    x = x_ref[0].reshape(Ho * Wo, K)                                  # (M, 16*Cin) bf16
    y = jnp.dot(x, w_ref[...], preferred_element_type=jnp.float32)    # (M, Cout) f32
    y = _leaky_relu(y + b_ref[...])
    o_ref[0] = y.T.astype(o_ref.dtype)                                # (Cout, M) lane-dense


def _conv_in_lrelu_kernel(x_ref, w_ref, g_ref, b_ref, o_ref, *, Ho, Wo, Kc):
    # _block: Conv2d(no bias) + InstanceNorm2d(affine) + LeakyReLU(0.2), fused.
    y = _conv_taps(x_ref[0], w_ref, Ho, Wo, Kc)                       # (M, Cout) f32
    y = _instance_norm_lrelu(y, g_ref[...], b_ref[...], Ho * Wo)
    o_ref[0] = y.T.astype(o_ref.dtype)                                # (Cout, M) lane-dense


def _conv_in_lrelu_head_kernel(x_ref, w_ref, g_ref, b_ref, w5_ref, b5_ref,
                               o_ref, *, Ho, Wo, Kc):
    # Last _block fused with the final Conv2d(8f -> 1, k=4, s=2, p=0):
    # on a 4x4 map the head is a full contraction with its (16, Cin5) weight.
    y = _conv_taps(x_ref[0], w_ref, Ho, Wo, Kc)                       # (16, 8f) f32
    y = _instance_norm_lrelu(y, g_ref[...], b_ref[...], Ho * Wo)
    s = jnp.sum(jnp.sum(y * w5_ref[...], axis=1, keepdims=True), axis=0, keepdims=True)
    o_ref[0] = (s + b5_ref[...]).astype(o_ref.dtype)                  # (1, 1)


# ---------------------------------------------------------------------------
# Host-side layout prep (cheap XLA reshapes; ~1x activation volume)
# ---------------------------------------------------------------------------
def _pad_space_to_depth(x_nhwc, pad):
    """(N,H,W,C) -> pad spatially -> (N, Hp/2, Wp/2, 4C); channel = a*2C + b*C + c."""
    N, H, W, C = x_nhwc.shape
    assert H % 2 == 0 and W % 2 == 0
    xp = jnp.pad(x_nhwc, ((0, 0), (pad, pad), (pad, pad), (0, 0)))
    Hp, Wp = H + 2 * pad, W + 2 * pad
    xs = xp.reshape(N, Hp // 2, 2, Wp // 2, 2, C)       # (n, i, a, j, b, c)
    xs = xs.transpose(0, 1, 3, 2, 4, 5)                 # (n, i, j, a, b, c)
    return xs.reshape(N, Hp // 2, Wp // 2, 4 * C)


def _s2d_weight(w_kkio):
    """(4,4,Cin,Cout) -> (4 taps, 4*Cin, Cout); tap t = dh*2+dw, row = a*2Cin + b*Cin + cin."""
    K, _, Cin, Cout = w_kkio.shape
    assert K == 4
    wt = w_kkio.reshape(2, 2, 2, 2, Cin, Cout)          # (dh, a, dw, b, cin, cout)
    wt = wt.transpose(0, 2, 1, 3, 4, 5)                 # (dh, dw, a, b, cin, cout)
    return wt.reshape(4, 4 * Cin, Cout)


def _chw_to_s2d(x_chw, C, H, W):
    """(N, C, H*W) lane-dense kernel output -> padded space-to-depth (N, H/2+1, W/2+1, 4C)."""
    N = x_chw.shape[0]
    x = x_chw.reshape(N, C, H, W).transpose(0, 2, 3, 1)  # -> NHWC
    return _pad_space_to_depth(x, pad=1)


# ---------------------------------------------------------------------------
# Layer wrappers
# ---------------------------------------------------------------------------
def conv1_bias_lrelu(x_nhwc, w, b):
    """Conv2d(k=4,s=2,p=1,bias) + LeakyReLU; one dense K=16*Cin dot per sample."""
    N, H, W, Cin = x_nhwc.shape
    Cout = w.shape[-1]
    Ho, Wo = H // 2, W // 2
    K = 16 * Cin
    xs = _pad_space_to_depth(x_nhwc.astype(jnp.bfloat16), pad=1)       # (N, Ho+1, Wo+1, 4Cin)
    xcol = jnp.concatenate(
        [xs[:, 0:Ho, 0:Wo], xs[:, 0:Ho, 1:Wo + 1],
         xs[:, 1:Ho + 1, 0:Wo], xs[:, 1:Ho + 1, 1:Wo + 1]], axis=-1)   # (N, Ho, Wo, 16Cin)
    wt = _s2d_weight(w).reshape(K, Cout).astype(jnp.bfloat16)
    bb = b.reshape(1, Cout).astype(jnp.float32)
    return pl.pallas_call(
        functools.partial(_conv1_bias_lrelu_kernel, Ho=Ho, Wo=Wo, K=K),
        out_shape=jax.ShapeDtypeStruct((N, Cout, Ho * Wo), jnp.bfloat16),
        grid_spec=pltpu.PrefetchScalarGridSpec(
            num_scalar_prefetch=0,
            grid=(N,),
            in_specs=[
                pl.BlockSpec((1, Ho, Wo, K), lambda n: (n, 0, 0, 0)),
                pl.BlockSpec((K, Cout), lambda n: (0, 0)),
                pl.BlockSpec((1, Cout), lambda n: (0, 0)),
            ],
            out_specs=pl.BlockSpec((1, Cout, Ho * Wo), lambda n: (n, 0, 0)),
        ),
        compiler_params=_COMPILER_PARAMS,
    )(xcol, wt, bb)


def conv_block_in_lrelu(x_chw, Cin, H, W, w, gamma, beta):
    """_block: Conv2d(k=4,s=2,p=1,no bias) + InstanceNorm2d(affine) + LeakyReLU, fused."""
    N = x_chw.shape[0]
    Cout = w.shape[-1]
    Ho, Wo = H // 2, W // 2
    xs = _chw_to_s2d(x_chw, Cin, H, W)                                  # (N, Ho+1, Wo+1, 4Cin) bf16
    wt = _s2d_weight(w).astype(jnp.bfloat16)
    g = gamma.reshape(1, Cout).astype(jnp.float32)
    be = beta.reshape(1, Cout).astype(jnp.float32)
    return pl.pallas_call(
        functools.partial(_conv_in_lrelu_kernel, Ho=Ho, Wo=Wo, Kc=4 * Cin),
        out_shape=jax.ShapeDtypeStruct((N, Cout, Ho * Wo), jnp.bfloat16),
        grid_spec=pltpu.PrefetchScalarGridSpec(
            num_scalar_prefetch=0,
            grid=(N,),
            in_specs=[
                pl.BlockSpec((1, Ho + 1, Wo + 1, 4 * Cin), lambda n: (n, 0, 0, 0)),
                pl.BlockSpec((4, 4 * Cin, Cout), lambda n: (0, 0, 0)),
                pl.BlockSpec((1, Cout), lambda n: (0, 0)),
                pl.BlockSpec((1, Cout), lambda n: (0, 0)),
            ],
            out_specs=pl.BlockSpec((1, Cout, Ho * Wo), lambda n: (n, 0, 0)),
        ),
        compiler_params=_COMPILER_PARAMS,
    )(xs, wt, g, be)


def conv_block_head(x_chw, Cin, H, W, w, gamma, beta, w5, b5):
    """Last _block fused with the final Conv2d(8f->1, k=4, s=2, p=0)."""
    N = x_chw.shape[0]
    Cout = w.shape[-1]
    Ho, Wo = H // 2, W // 2
    assert Ho == 4 and Wo == 4, "fused final conv assumes img_size=64 (4x4 feature map)"
    xs = _chw_to_s2d(x_chw, Cin, H, W)                                  # (N, 5, 5, 4Cin) bf16
    wt = _s2d_weight(w).astype(jnp.bfloat16)
    g = gamma.reshape(1, Cout).astype(jnp.float32)
    be = beta.reshape(1, Cout).astype(jnp.float32)
    w5m = w5.reshape(Ho * Wo, Cout).astype(jnp.float32)                 # (16, 8f), row = kh*4+kw
    b5m = b5.reshape(1, 1).astype(jnp.float32)
    return pl.pallas_call(
        functools.partial(_conv_in_lrelu_head_kernel, Ho=Ho, Wo=Wo, Kc=4 * Cin),
        out_shape=jax.ShapeDtypeStruct((N, 1, 1), jnp.float32),
        grid_spec=pltpu.PrefetchScalarGridSpec(
            num_scalar_prefetch=0,
            grid=(N,),
            in_specs=[
                pl.BlockSpec((1, Ho + 1, Wo + 1, 4 * Cin), lambda n: (n, 0, 0, 0)),
                pl.BlockSpec((4, 4 * Cin, Cout), lambda n: (0, 0, 0)),
                pl.BlockSpec((1, Cout), lambda n: (0, 0)),
                pl.BlockSpec((1, Cout), lambda n: (0, 0)),
                pl.BlockSpec((Ho * Wo, Cout), lambda n: (0, 0)),
                pl.BlockSpec((1, 1), lambda n: (0, 0)),
            ],
            out_specs=pl.BlockSpec((1, 1, 1), lambda n: (n, 0, 0)),
        ),
        compiler_params=_COMPILER_PARAMS,
    )(xs, wt, g, be, w5m, b5m)


# ---------------------------------------------------------------------------
# Discriminator
# ---------------------------------------------------------------------------
def init_params(key, channels_img, features):
    ks = jax.random.split(key, 8)

    def conv_w(k, cin, cout, ksz=4):
        fan_in = ksz * ksz * cin
        return jax.random.normal(k, (ksz, ksz, cin, cout), jnp.float32) / jnp.sqrt(fan_in)

    f = features
    return {
        "w1": conv_w(ks[0], channels_img, f),
        "b1": 0.01 * jax.random.normal(ks[1], (f,), jnp.float32),
        "w2": conv_w(ks[2], f, 2 * f),
        "g2": jnp.ones((2 * f,), jnp.float32),
        "be2": jnp.zeros((2 * f,), jnp.float32),
        "w3": conv_w(ks[3], 2 * f, 4 * f),
        "g3": jnp.ones((4 * f,), jnp.float32),
        "be3": jnp.zeros((4 * f,), jnp.float32),
        "w4": conv_w(ks[4], 4 * f, 8 * f),
        "g4": jnp.ones((8 * f,), jnp.float32),
        "be4": jnp.zeros((8 * f,), jnp.float32),
        "w5": conv_w(ks[5], 8 * f, 1),
        "b5": 0.01 * jax.random.normal(ks[6], (1,), jnp.float32),
    }


def discriminator_forward(params, x_nchw):
    N, _, H, W = x_nchw.shape
    f = params["w1"].shape[-1]
    x = jnp.transpose(x_nchw, (0, 2, 3, 1))                        # NCHW -> NHWC

    # Conv(k=4,s=2,p=1,bias) + LeakyReLU(0.2)                       (fused kernel 1)
    a1 = conv1_bias_lrelu(x, params["w1"], params["b1"])           # (N, f, (H/2)*(W/2))
    # _block x2: Conv(no bias) + InstanceNorm(affine) + LeakyReLU   (fused kernels 2, 3)
    a2 = conv_block_in_lrelu(a1, f, H // 2, W // 2,
                             params["w2"], params["g2"], params["be2"])
    a3 = conv_block_in_lrelu(a2, 2 * f, H // 4, W // 4,
                             params["w3"], params["g3"], params["be3"])
    # last _block fused with the final Conv(8f->1,k=4,s=2,p=0)      (fused kernel 4)
    out = conv_block_head(a3, 4 * f, H // 8, W // 8,
                          params["w4"], params["g4"], params["be4"],
                          params["w5"], params["b5"])              # (N, 1, 1)
    return out.reshape(N, 1, 1, 1)                                 # NCHW (N,1,1,1)


if __name__ == "__main__":
    batch, channels_img, img_size, features = 2, 3, 64, 8

    key = jax.random.PRNGKey(0)
    k_param, k_x = jax.random.split(key)
    params = init_params(k_param, channels_img, features)
    x = jax.random.normal(k_x, (batch, channels_img, img_size, img_size), jnp.float32)

    fwd = jax.jit(discriminator_forward)
    out = jax.block_until_ready(fwd(params, x))
    assert out.shape == (batch, 1, 1, 1), out.shape
    assert jnp.all(jnp.isfinite(out))
    print("KERNEL_OK")
</pallas_src>

<mosaic_0001>
module attributes {stable_mosaic.version = 11 : i64} {
  func.func @_conv1_bias_lrelu_kernel(%arg0: i32, %arg1: memref<1x32x32x48xbf16, #tpu.memory_space<vmem>>, %arg2: memref<48x8xbf16, #tpu.memory_space<vmem>>, %arg3: memref<1x8xf32, #tpu.memory_space<vmem>>, %arg4: memref<1x8x1024xbf16, #tpu.memory_space<vmem>>) attributes {dimension_semantics = [#tpu.dimension_semantics<parallel>], iteration_bounds = array<i64: 2>, scalar_prefetch = 0 : i64, scratch_operands = 0 : i64, tpu.core_type = #tpu.core_type<tc>, window_params = [{transform_indices = @transform_0, window_bounds = array<i64: 1, 32, 32, 48>}, {pipeline_mode = #tpu.pipeline_mode<synchronous>, transform_indices = @transform_1, window_bounds = array<i64: 48, 8>}, {pipeline_mode = #tpu.pipeline_mode<synchronous>, transform_indices = @transform_2, window_bounds = array<i64: 1, 8>}, {transform_indices = @transform_3, window_bounds = array<i64: 1, 8, 1024>}]} {
    %c0 = arith.constant 0 : index
    %c0_0 = arith.constant 0 : index
    %c0_1 = arith.constant 0 : index
    %c0_2 = arith.constant 0 : index
    %0 = vector.load %arg1[%c0, %c0_0, %c0_1, %c0_2] : memref<1x32x32x48xbf16, #tpu.memory_space<vmem>>, vector<1x32x32x48xbf16>
    %1 = vector.shape_cast %0 : vector<1x32x32x48xbf16> to vector<32x32x48xbf16>
    %2 = vector.shape_cast %1 : vector<32x32x48xbf16> to vector<1024x48xbf16>
    %c0_3 = arith.constant 0 : index
    %c0_4 = arith.constant 0 : index
    %3 = vector.load %arg2[%c0_3, %c0_4] : memref<48x8xbf16, #tpu.memory_space<vmem>>, vector<48x8xbf16>
    %cst = arith.constant dense<0.000000e+00> : vector<1024x8xf32>
    %4 = tpu.matmul %2, %3, %cst {dimension_numbers = #tpu.dot_dimension_numbers<[1], [0], [0], [1], [0, 0, 1, 1], [], []>} : vector<1024x48xbf16>, vector<48x8xbf16>, vector<1024x8xf32> -> vector<1024x8xf32>
    %c0_5 = arith.constant 0 : index
    %c0_6 = arith.constant 0 : index
    %5 = vector.load %arg3[%c0_5, %c0_6] : memref<1x8xf32, #tpu.memory_space<vmem>>, vector<1x8xf32>
    %6 = vector.broadcast %5 : vector<1x8xf32> to vector<1024x8xf32>
    %7 = arith.addf %4, %6 : vector<1024x8xf32>
    %cst_7 = arith.constant 0.000000e+00 : f32
    %8 = vector.broadcast %cst_7 : f32 to vector<1024x8xf32>
    %9 = arith.cmpf oge, %7, %8 : vector<1024x8xf32>
    %cst_8 = arith.constant 2.000000e-01 : f32
    %10 = vector.broadcast %cst_8 : f32 to vector<1024x8xf32>
    %11 = arith.mulf %10, %7 : vector<1024x8xf32>
    %12 = arith.select %9, %7, %11 : vector<1024x8xi1>, vector<1024x8xf32>
    %13 = tpu.transpose %12, [1, 0] : vector<1024x8xf32> -> vector<8x1024xf32>
    %14 = arith.truncf %13 : vector<8x1024xf32> to vector<8x1024xbf16>
    %c0_9 = arith.constant 0 : index
    %c0_10 = arith.constant 0 : index
    %c0_11 = arith.constant 0 : index
    %15 = vector.load %arg4[%c0_9, %c0_10, %c0_11] : memref<1x8x1024xbf16, #tpu.memory_space<vmem>>, vector<1x8x1024xbf16>
    %16 = vector.shape_cast %15 : vector<1x8x1024xbf16> to vector<8x1024xbf16>
    %17 = vector.shape_cast %14 : vector<8x1024xbf16> to vector<1x8x1024xbf16>
    tpu.vector_store %arg4[%c0_9, %c0_10, %c0_11], %17 {strides = array<i32>} : memref<1x8x1024xbf16, #tpu.memory_space<vmem>>, vector<1x8x1024xbf16>,
    return
  }
  func.func @transform_0(%arg0: i32) -> (i32, i32, i32, i32) {
    %c0_i32 = arith.constant 0 : i32
    %c0_i32_0 = arith.constant 0 : i32
    %c0_i32_1 = arith.constant 0 : i32
    %c0_i32_2 = arith.constant 0 : i32
    return %arg0, %c0_i32, %c0_i32_0, %c0_i32_1 : i32, i32, i32, i32
  }
  func.func @transform_1(%arg0: i32) -> (i32, i32) {
    %c0_i32 = arith.constant 0 : i32
    %c0_i32_0 = arith.constant 0 : i32
    %c0_i32_1 = arith.constant 0 : i32
    return %c0_i32, %c0_i32_0 : i32, i32
  }
  func.func @transform_2(%arg0: i32) -> (i32, i32) {
    %c0_i32 = arith.constant 0 : i32
    %c0_i32_0 = arith.constant 0 : i32
    %c0_i32_1 = arith.constant 0 : i32
    return %c0_i32, %c0_i32_0 : i32, i32
  }
  func.func @transform_3(%arg0: i32) -> (i32, i32, i32) {
    %c0_i32 = arith.constant 0 : i32
    %c0_i32_0 = arith.constant 0 : i32
    %c0_i32_1 = arith.constant 0 : i32
    return %arg0, %c0_i32, %c0_i32_0 : i32, i32, i32
  }
}

module attributes {stable_mosaic.version = 11 : i64} {
  func.func @_conv_in_lrelu_kernel(%arg0: i32, %arg1: memref<1x17x17x32xbf16, #tpu.memory_space<vmem>>, %arg2: memref<4x32x16xbf16, #tpu.memory_space<vmem>>, %arg3: memref<1x16xf32, #tpu.memory_space<vmem>>, %arg4: memref<1x16xf32, #tpu.memory_space<vmem>>, %arg5: memref<1x16x256xbf16, #tpu.memory_space<vmem>>) attributes {dimension_semantics = [#tpu.dimension_semantics<parallel>], iteration_bounds = array<i64: 2>, scalar_prefetch = 0 : i64, scratch_operands = 0 : i64, tpu.core_type = #tpu.core_type<tc>, window_params = [{transform_indices = @transform_0, window_bounds = array<i64: 1, 17, 17, 32>}, {pipeline_mode = #tpu.pipeline_mode<synchronous>, transform_indices = @transform_1, window_bounds = array<i64: 4, 32, 16>}, {pipeline_mode = #tpu.pipeline_mode<synchronous>, transform_indices = @transform_2, window_bounds = array<i64: 1, 16>}, {pipeline_mode = #tpu.pipeline_mode<synchronous>, transform_indices = @transform_3, window_bounds = array<i64: 1, 16>}, {transform_indices = @transform_4, window_bounds = array<i64: 1, 16, 256>}]} {
    %c0 = arith.constant 0 : index
    %c0_0 = arith.constant 0 : index
    %c0_1 = arith.constant 0 : index
    %c0_2 = arith.constant 0 : index
    %0 = vector.load %arg1[%c0, %c0_0, %c0_1, %c0_2] : memref<1x17x17x32xbf16, #tpu.memory_space<vmem>>, vector<1x17x17x32xbf16>
    %1 = vector.shape_cast %0 : vector<1x17x17x32xbf16> to vector<17x17x32xbf16>
    %2 = vector.extract_strided_slice %1 {offsets = [0, 0, 0], sizes = [16, 16, 32], strides = [1, 1, 1]} : vector<17x17x32xbf16> to vector<16x16x32xbf16>
    %3 = vector.shape_cast %2 : vector<16x16x32xbf16> to vector<256x32xbf16>
    %c0_3 = arith.constant 0 : index
    %c0_4 = arith.constant 0 : index
    %c0_5 = arith.constant 0 : index
    %4 = vector.load %arg2[%c0_3, %c0_4, %c0_5] : memref<4x32x16xbf16, #tpu.memory_space<vmem>>, vector<1x32x16xbf16>
    %5 = vector.shape_cast %4 : vector<1x32x16xbf16> to vector<32x16xbf16>
    %cst = arith.constant dense<0.000000e+00> : vector<256x16xf32>
    %6 = tpu.matmul %3, %5, %cst {dimension_numbers = #tpu.dot_dimension_numbers<[1], [0], [0], [1], [0, 0, 1, 1], [], []>} : vector<256x32xbf16>, vector<32x16xbf16>, vector<256x16xf32> -> vector<256x16xf32>
    %7 = vector.extract_strided_slice %1 {offsets = [0, 1, 0], sizes = [16, 16, 32], strides = [1, 1, 1]} : vector<17x17x32xbf16> to vector<16x16x32xbf16>
    %8 = vector.shape_cast %7 : vector<16x16x32xbf16> to vector<256x32xbf16>
    %c1 = arith.constant 1 : index
    %c0_6 = arith.constant 0 : index
    %c0_7 = arith.constant 0 : index
    %9 = vector.load %arg2[%c1, %c0_6, %c0_7] : memref<4x32x16xbf16, #tpu.memory_space<vmem>>, vector<1x32x16xbf16>
    %10 = vector.shape_cast %9 : vector<1x32x16xbf16> to vector<32x16xbf16>
    %cst_8 = arith.constant dense<0.000000e+00> : vector<256x16xf32>
    %11 = tpu.matmul %8, %10, %cst_8 {dimension_numbers = #tpu.dot_dimension_numbers<[1], [0], [0], [1], [0, 0, 1, 1], [], []>} : vector<256x32xbf16>, vector<32x16xbf16>, vector<256x16xf32> -> vector<256x16xf32>
    %12 = arith.addf %6, %11 : vector<256x16xf32>
    %13 = vector.extract_strided_slice %1 {offsets = [1, 0, 0], sizes = [16, 16, 32], strides = [1, 1, 1]} : vector<17x17x32xbf16> to vector<16x16x32xbf16>
    %14 = vector.shape_cast %13 : vector<16x16x32xbf16> to vector<256x32xbf16>
    %c2 = arith.constant 2 : index
    %c0_9 = arith.constant 0 : index
    %c0_10 = arith.constant 0 : index
    %15 = vector.load %arg2[%c2, %c0_9, %c0_10] : memref<4x32x16xbf16, #tpu.memory_space<vmem>>, vector<1x32x16xbf16>
    %16 = vector.shape_cast %15 : vector<1x32x16xbf16> to vector<32x16xbf16>
    %cst_11 = arith.constant dense<0.000000e+00> : vector<256x16xf32>
    %17 = tpu.matmul %14, %16, %cst_11 {dimension_numbers = #tpu.dot_dimension_numbers<[1], [0], [0], [1], [0, 0, 1, 1], [], []>} : vector<256x32xbf16>, vector<32x16xbf16>, vector<256x16xf32> -> vector<256x16xf32>
    %18 = arith.addf %12, %17 : vector<256x16xf32>
    %19 = vector.extract_strided_slice %1 {offsets = [1, 1, 0], sizes = [16, 16, 32], strides = [1, 1, 1]} : vector<17x17x32xbf16> to vector<16x16x32xbf16>
    %20 = vector.shape_cast %19 : vector<16x16x32xbf16> to vector<256x32xbf16>
    %c3 = arith.constant 3 : index
    %c0_12 = arith.constant 0 : index
    %c0_13 = arith.constant 0 : index
    %21 = vector.load %arg2[%c3, %c0_12, %c0_13] : memref<4x32x16xbf16, #tpu.memory_space<vmem>>, vector<1x32x16xbf16>
    %22 = vector.shape_cast %21 : vector<1x32x16xbf16> to vector<32x16xbf16>
    %cst_14 = arith.constant dense<0.000000e+00> : vector<256x16xf32>
    %23 = tpu.matmul %20, %22, %cst_14 {dimension_numbers = #tpu.dot_dimension_numbers<[1], [0], [0], [1], [0, 0, 1, 1], [], []>} : vector<256x32xbf16>, vector<32x16xbf16>, vector<256x16xf32> -> vector<256x16xf32>
    %24 = arith.addf %18, %23 : vector<256x16xf32>
    %c0_15 = arith.constant 0 : index
    %c0_16 = arith.constant 0 : index
    %25 = vector.load %arg3[%c0_15, %c0_16] : memref<1x16xf32, #tpu.memory_space<vmem>>, vector<1x16xf32>
    %c0_17 = arith.constant 0 : index
    %c0_18 = arith.constant 0 : index
    %26 = vector.load %arg4[%c0_17, %c0_18] : memref<1x16xf32, #tpu.memory_space<vmem>>, vector<1x16xf32>
    %cst_19 = arith.constant dense<0.000000e+00> : vector<16xf32>
    %27 = vector.multi_reduction <add>, %24, %cst_19 [0] : vector<256x16xf32> to vector<16xf32>
    %28 = vector.shape_cast %27 : vector<16xf32> to vector<1x16xf32>
    %cst_20 = arith.constant 3.906250e-03 : f32
    %29 = vector.broadcast %cst_20 : f32 to vector<1x16xf32>
    %30 = arith.mulf %28, %29 : vector<1x16xf32>
    %31 = vector.broadcast %30 : vector<1x16xf32> to vector<256x16xf32>
    %32 = arith.subf %24, %31 : vector<256x16xf32>
    %33 = arith.mulf %32, %32 : vector<256x16xf32>
    %cst_21 = arith.constant dense<0.000000e+00> : vector<16xf32>
    %34 = vector.multi_reduction <add>, %33, %cst_21 [0] : vector<256x16xf32> to vector<16xf32>
    %35 = vector.shape_cast %34 : vector<16xf32> to vector<1x16xf32>
    %cst_22 = arith.constant 3.906250e-03 : f32
    %36 = vector.broadcast %cst_22 : f32 to vector<1x16xf32>
    %37 = arith.mulf %35, %36 : vector<1x16xf32>
    %cst_23 = arith.constant 9.99999974E-6 : f32
    %38 = vector.broadcast %cst_23 : f32 to vector<1x16xf32>
    %39 = arith.addf %37, %38 : vector<1x16xf32>
    %40 = math.rsqrt %39 : vector<1x16xf32>
    %41 = vector.broadcast %40 : vector<1x16xf32> to vector<256x16xf32>
    %42 = arith.mulf %32, %41 : vector<256x16xf32>
    %43 = vector.broadcast %25 : vector<1x16xf32> to vector<256x16xf32>
    %44 = arith.mulf %42, %43 : vector<256x16xf32>
    %45 = vector.broadcast %26 : vector<1x16xf32> to vector<256x16xf32>
    %46 = arith.addf %44, %45 : vector<256x16xf32>
    %cst_24 = arith.constant 0.000000e+00 : f32
    %47 = vector.broadcast %cst_24 : f32 to vector<256x16xf32>
    %48 = arith.cmpf oge, %46, %47 : vector<256x16xf32>
    %cst_25 = arith.constant 2.000000e-01 : f32
    %49 = vector.broadcast %cst_25 : f32 to vector<256x16xf32>
    %50 = arith.mulf %49, %46 : vector<256x16xf32>
    %51 = arith.select %48, %46, %50 : vector<256x16xi1>, vector<256x16xf32>
    %52 = tpu.transpose %51, [1, 0] : vector<256x16xf32> -> vector<16x256xf32>
    %53 = arith.truncf %52 : vector<16x256xf32> to vector<16x256xbf16>
    %c0_26 = arith.constant 0 : index
    %c0_27 = arith.constant 0 : index
    %c0_28 = arith.constant 0 : index
    %54 = vector.load %arg5[%c0_26, %c0_27, %c0_28] : memref<1x16x256xbf16, #tpu.memory_space<vmem>>, vector<1x16x256xbf16>
    %55 = vector.shape_cast %54 : vector<1x16x256xbf16> to vector<16x256xbf16>
    %56 = vector.shape_cast %53 : vector<16x256xbf16> to vector<1x16x256xbf16>
    tpu.vector_store %arg5[%c0_26, %c0_27, %c0_28], %56 {strides = array<i32>} : memref<1x16x256xbf16, #tpu.memory_space<vmem>>, vector<1x16x256xbf16>,
    return
  }
  func.func @transform_0(%arg0: i32) -> (i32, i32, i32, i32) {
    %c0_i32 = arith.constant 0 : i32
    %c0_i32_0 = arith.constant 0 : i32
    %c0_i32_1 = arith.constant 0 : i32
    %c0_i32_2 = arith.constant 0 : i32
    return %arg0, %c0_i32, %c0_i32_0, %c0_i32_1 : i32, i32, i32, i32
  }
  func.func @transform_1(%arg0: i32) -> (i32, i32, i32) {
    %c0_i32 = arith.constant 0 : i32
    %c0_i32_0 = arith.constant 0 : i32
    %c0_i32_1 = arith.constant 0 : i32
    %c0_i32_2 = arith.constant 0 : i32
    return %c0_i32, %c0_i32_0, %c0_i32_1 : i32, i32, i32
  }
  func.func @transform_2(%arg0: i32) -> (i32, i32) {
    %c0_i32 = arith.constant 0 : i32
    %c0_i32_0 = arith.constant 0 : i32
    %c0_i32_1 = arith.constant 0 : i32
    return %c0_i32, %c0_i32_0 : i32, i32
  }
  func.func @transform_3(%arg0: i32) -> (i32, i32) {
    %c0_i32 = arith.constant 0 : i32
    %c0_i32_0 = arith.constant 0 : i32
    %c0_i32_1 = arith.constant 0 : i32
    return %c0_i32, %c0_i32_0 : i32, i32
  }
  func.func @transform_4(%arg0: i32) -> (i32, i32, i32) {
    %c0_i32 = arith.constant 0 : i32
    %c0_i32_0 = arith.constant 0 : i32
    %c0_i32_1 = arith.constant 0 : i32
    return %arg0, %c0_i32, %c0_i32_0 : i32, i32, i32
  }
}

module attributes {stable_mosaic.version = 11 : i64} {
  func.func @_conv_in_lrelu_kernel(%arg0: i32, %arg1: memref<1x9x9x64xbf16, #tpu.memory_space<vmem>>, %arg2: memref<4x64x32xbf16, #tpu.memory_space<vmem>>, %arg3: memref<1x32xf32, #tpu.memory_space<vmem>>, %arg4: memref<1x32xf32, #tpu.memory_space<vmem>>, %arg5: memref<1x32x64xbf16, #tpu.memory_space<vmem>>) attributes {dimension_semantics = [#tpu.dimension_semantics<parallel>], iteration_bounds = array<i64: 2>, scalar_prefetch = 0 : i64, scratch_operands = 0 : i64, tpu.core_type = #tpu.core_type<tc>, window_params = [{transform_indices = @transform_0, window_bounds = array<i64: 1, 9, 9, 64>}, {pipeline_mode = #tpu.pipeline_mode<synchronous>, transform_indices = @transform_1, window_bounds = array<i64: 4, 64, 32>}, {pipeline_mode = #tpu.pipeline_mode<synchronous>, transform_indices = @transform_2, window_bounds = array<i64: 1, 32>}, {pipeline_mode = #tpu.pipeline_mode<synchronous>, transform_indices = @transform_3, window_bounds = array<i64: 1, 32>}, {transform_indices = @transform_4, window_bounds = array<i64: 1, 32, 64>}]} {
    %c0 = arith.constant 0 : index
    %c0_0 = arith.constant 0 : index
    %c0_1 = arith.constant 0 : index
    %c0_2 = arith.constant 0 : index
    %0 = vector.load %arg1[%c0, %c0_0, %c0_1, %c0_2] : memref<1x9x9x64xbf16, #tpu.memory_space<vmem>>, vector<1x9x9x64xbf16>
    %1 = vector.shape_cast %0 : vector<1x9x9x64xbf16> to vector<9x9x64xbf16>
    %2 = vector.extract_strided_slice %1 {offsets = [0, 0, 0], sizes = [8, 8, 64], strides = [1, 1, 1]} : vector<9x9x64xbf16> to vector<8x8x64xbf16>
    %3 = vector.shape_cast %2 : vector<8x8x64xbf16> to vector<64x64xbf16>
    %c0_3 = arith.constant 0 : index
    %c0_4 = arith.constant 0 : index
    %c0_5 = arith.constant 0 : index
    %4 = vector.load %arg2[%c0_3, %c0_4, %c0_5] : memref<4x64x32xbf16, #tpu.memory_space<vmem>>, vector<1x64x32xbf16>
    %5 = vector.shape_cast %4 : vector<1x64x32xbf16> to vector<64x32xbf16>
    %cst = arith.constant dense<0.000000e+00> : vector<64x32xf32>
    %6 = tpu.matmul %3, %5, %cst {dimension_numbers = #tpu.dot_dimension_numbers<[1], [0], [0], [1], [0, 0, 1, 1], [], []>} : vector<64x64xbf16>, vector<64x32xbf16>, vector<64x32xf32> -> vector<64x32xf32>
    %7 = vector.extract_strided_slice %1 {offsets = [0, 1, 0], sizes = [8, 8, 64], strides = [1, 1, 1]} : vector<9x9x64xbf16> to vector<8x8x64xbf16>
    %8 = vector.shape_cast %7 : vector<8x8x64xbf16> to vector<64x64xbf16>
    %c1 = arith.constant 1 : index
    %c0_6 = arith.constant 0 : index
    %c0_7 = arith.constant 0 : index
    %9 = vector.load %arg2[%c1, %c0_6, %c0_7] : memref<4x64x32xbf16, #tpu.memory_space<vmem>>, vector<1x64x32xbf16>
    %10 = vector.shape_cast %9 : vector<1x64x32xbf16> to vector<64x32xbf16>
    %cst_8 = arith.constant dense<0.000000e+00> : vector<64x32xf32>
    %11 = tpu.matmul %8, %10, %cst_8 {dimension_numbers = #tpu.dot_dimension_numbers<[1], [0], [0], [1], [0, 0, 1, 1], [], []>} : vector<64x64xbf16>, vector<64x32xbf16>, vector<64x32xf32> -> vector<64x32xf32>
    %12 = arith.addf %6, %11 : vector<64x32xf32>
    %13 = vector.extract_strided_slice %1 {offsets = [1, 0, 0], sizes = [8, 8, 64], strides = [1, 1, 1]} : vector<9x9x64xbf16> to vector<8x8x64xbf16>
    %14 = vector.shape_cast %13 : vector<8x8x64xbf16> to vector<64x64xbf16>
    %c2 = arith.constant 2 : index
    %c0_9 = arith.constant 0 : index
    %c0_10 = arith.constant 0 : index
    %15 = vector.load %arg2[%c2, %c0_9, %c0_10] : memref<4x64x32xbf16, #tpu.memory_space<vmem>>, vector<1x64x32xbf16>
    %16 = vector.shape_cast %15 : vector<1x64x32xbf16> to vector<64x32xbf16>
    %cst_11 = arith.constant dense<0.000000e+00> : vector<64x32xf32>
    %17 = tpu.matmul %14, %16, %cst_11 {dimension_numbers = #tpu.dot_dimension_numbers<[1], [0], [0], [1], [0, 0, 1, 1], [], []>} : vector<64x64xbf16>, vector<64x32xbf16>, vector<64x32xf32> -> vector<64x32xf32>
    %18 = arith.addf %12, %17 : vector<64x32xf32>
    %19 = vector.extract_strided_slice %1 {offsets = [1, 1, 0], sizes = [8, 8, 64], strides = [1, 1, 1]} : vector<9x9x64xbf16> to vector<8x8x64xbf16>
    %20 = vector.shape_cast %19 : vector<8x8x64xbf16> to vector<64x64xbf16>
    %c3 = arith.constant 3 : index
    %c0_12 = arith.constant 0 : index
    %c0_13 = arith.constant 0 : index
    %21 = vector.load %arg2[%c3, %c0_12, %c0_13] : memref<4x64x32xbf16, #tpu.memory_space<vmem>>, vector<1x64x32xbf16>
    %22 = vector.shape_cast %21 : vector<1x64x32xbf16> to vector<64x32xbf16>
    %cst_14 = arith.constant dense<0.000000e+00> : vector<64x32xf32>
    %23 = tpu.matmul %20, %22, %cst_14 {dimension_numbers = #tpu.dot_dimension_numbers<[1], [0], [0], [1], [0, 0, 1, 1], [], []>} : vector<64x64xbf16>, vector<64x32xbf16>, vector<64x32xf32> -> vector<64x32xf32>
    %24 = arith.addf %18, %23 : vector<64x32xf32>
    %c0_15 = arith.constant 0 : index
    %c0_16 = arith.constant 0 : index
    %25 = vector.load %arg3[%c0_15, %c0_16] : memref<1x32xf32, #tpu.memory_space<vmem>>, vector<1x32xf32>
    %c0_17 = arith.constant 0 : index
    %c0_18 = arith.constant 0 : index
    %26 = vector.load %arg4[%c0_17, %c0_18] : memref<1x32xf32, #tpu.memory_space<vmem>>, vector<1x32xf32>
    %cst_19 = arith.constant dense<0.000000e+00> : vector<32xf32>
    %27 = vector.multi_reduction <add>, %24, %cst_19 [0] : vector<64x32xf32> to vector<32xf32>
    %28 = vector.shape_cast %27 : vector<32xf32> to vector<1x32xf32>
    %cst_20 = arith.constant 1.562500e-02 : f32
    %29 = vector.broadcast %cst_20 : f32 to vector<1x32xf32>
    %30 = arith.mulf %28, %29 : vector<1x32xf32>
    %31 = vector.broadcast %30 : vector<1x32xf32> to vector<64x32xf32>
    %32 = arith.subf %24, %31 : vector<64x32xf32>
    %33 = arith.mulf %32, %32 : vector<64x32xf32>
    %cst_21 = arith.constant dense<0.000000e+00> : vector<32xf32>
    %34 = vector.multi_reduction <add>, %33, %cst_21 [0] : vector<64x32xf32> to vector<32xf32>
    %35 = vector.shape_cast %34 : vector<32xf32> to vector<1x32xf32>
    %cst_22 = arith.constant 1.562500e-02 : f32
    %36 = vector.broadcast %cst_22 : f32 to vector<1x32xf32>
    %37 = arith.mulf %35, %36 : vector<1x32xf32>
    %cst_23 = arith.constant 9.99999974E-6 : f32
    %38 = vector.broadcast %cst_23 : f32 to vector<1x32xf32>
    %39 = arith.addf %37, %38 : vector<1x32xf32>
    %40 = math.rsqrt %39 : vector<1x32xf32>
    %41 = vector.broadcast %40 : vector<1x32xf32> to vector<64x32xf32>
    %42 = arith.mulf %32, %41 : vector<64x32xf32>
    %43 = vector.broadcast %25 : vector<1x32xf32> to vector<64x32xf32>
    %44 = arith.mulf %42, %43 : vector<64x32xf32>
    %45 = vector.broadcast %26 : vector<1x32xf32> to vector<64x32xf32>
    %46 = arith.addf %44, %45 : vector<64x32xf32>
    %cst_24 = arith.constant 0.000000e+00 : f32
    %47 = vector.broadcast %cst_24 : f32 to vector<64x32xf32>
    %48 = arith.cmpf oge, %46, %47 : vector<64x32xf32>
    %cst_25 = arith.constant 2.000000e-01 : f32
    %49 = vector.broadcast %cst_25 : f32 to vector<64x32xf32>
    %50 = arith.mulf %49, %46 : vector<64x32xf32>
    %51 = arith.select %48, %46, %50 : vector<64x32xi1>, vector<64x32xf32>
    %52 = tpu.transpose %51, [1, 0] : vector<64x32xf32> -> vector<32x64xf32>
    %53 = arith.truncf %52 : vector<32x64xf32> to vector<32x64xbf16>
    %c0_26 = arith.constant 0 : index
    %c0_27 = arith.constant 0 : index
    %c0_28 = arith.constant 0 : index
    %54 = vector.load %arg5[%c0_26, %c0_27, %c0_28] : memref<1x32x64xbf16, #tpu.memory_space<vmem>>, vector<1x32x64xbf16>
    %55 = vector.shape_cast %54 : vector<1x32x64xbf16> to vector<32x64xbf16>
    %56 = vector.shape_cast %53 : vector<32x64xbf16> to vector<1x32x64xbf16>
    tpu.vector_store %arg5[%c0_26, %c0_27, %c0_28], %56 {strides = array<i32>} : memref<1x32x64xbf16, #tpu.memory_space<vmem>>, vector<1x32x64xbf16>,
    return
  }
  func.func @transform_0(%arg0: i32) -> (i32, i32, i32, i32) {
    %c0_i32 = arith.constant 0 : i32
    %c0_i32_0 = arith.constant 0 : i32
    %c0_i32_1 = arith.constant 0 : i32
    %c0_i32_2 = arith.constant 0 : i32
    return %arg0, %c0_i32, %c0_i32_0, %c0_i32_1 : i32, i32, i32, i32
  }
  func.func @transform_1(%arg0: i32) -> (i32, i32, i32) {
    %c0_i32 = arith.constant 0 : i32
    %c0_i32_0 = arith.constant 0 : i32
    %c0_i32_1 = arith.constant 0 : i32
    %c0_i32_2 = arith.constant 0 : i32
    return %c0_i32, %c0_i32_0, %c0_i32_1 : i32, i32, i32
  }
  func.func @transform_2(%arg0: i32) -> (i32, i32) {
    %c0_i32 = arith.constant 0 : i32
    %c0_i32_0 = arith.constant 0 : i32
    %c0_i32_1 = arith.constant 0 : i32
    return %c0_i32, %c0_i32_0 : i32, i32
  }
  func.func @transform_3(%arg0: i32) -> (i32, i32) {
    %c0_i32 = arith.constant 0 : i32
    %c0_i32_0 = arith.constant 0 : i32
    %c0_i32_1 = arith.constant 0 : i32
    return %c0_i32, %c0_i32_0 : i32, i32
  }
  func.func @transform_4(%arg0: i32) -> (i32, i32, i32) {
    %c0_i32 = arith.constant 0 : i32
    %c0_i32_0 = arith.constant 0 : i32
    %c0_i32_1 = arith.constant 0 : i32
    return %arg0, %c0_i32, %c0_i32_0 : i32, i32, i32
  }
}

module attributes {stable_mosaic.version = 11 : i64} {
  func.func @_conv_in_lrelu_head_kernel(%arg0: i32, %arg1: memref<1x5x5x128xbf16, #tpu.memory_space<vmem>>, %arg2: memref<4x128x64xbf16, #tpu.memory_space<vmem>>, %arg3: memref<1x64xf32, #tpu.memory_space<vmem>>, %arg4: memref<1x64xf32, #tpu.memory_space<vmem>>, %arg5: memref<16x64xf32, #tpu.memory_space<vmem>>, %arg6: memref<1x1xf32, #tpu.memory_space<vmem>>, %arg7: memref<1x1x1xf32, #tpu.memory_space<vmem>>) attributes {dimension_semantics = [#tpu.dimension_semantics<parallel>], iteration_bounds = array<i64: 2>, scalar_prefetch = 0 : i64, scratch_operands = 0 : i64, tpu.core_type = #tpu.core_type<tc>, window_params = [{transform_indices = @transform_0, window_bounds = array<i64: 1, 5, 5, 128>}, {pipeline_mode = #tpu.pipeline_mode<synchronous>, transform_indices = @transform_1, window_bounds = array<i64: 4, 128, 64>}, {pipeline_mode = #tpu.pipeline_mode<synchronous>, transform_indices = @transform_2, window_bounds = array<i64: 1, 64>}, {pipeline_mode = #tpu.pipeline_mode<synchronous>, transform_indices = @transform_3, window_bounds = array<i64: 1, 64>}, {pipeline_mode = #tpu.pipeline_mode<synchronous>, transform_indices = @transform_4, window_bounds = array<i64: 16, 64>}, {pipeline_mode = #tpu.pipeline_mode<synchronous>, transform_indices = @transform_5, window_bounds = array<i64: 1, 1>}, {transform_indices = @transform_6, window_bounds = array<i64: 1, 1, 1>}]} {
    %c0 = arith.constant 0 : index
    %c0_0 = arith.constant 0 : index
    %c0_1 = arith.constant 0 : index
    %c0_2 = arith.constant 0 : index
    %0 = vector.load %arg1[%c0, %c0_0, %c0_1, %c0_2] : memref<1x5x5x128xbf16, #tpu.memory_space<vmem>>, vector<1x5x5x128xbf16>
    %1 = vector.shape_cast %0 : vector<1x5x5x128xbf16> to vector<5x5x128xbf16>
    %2 = vector.extract_strided_slice %1 {offsets = [0, 0, 0], sizes = [4, 4, 128], strides = [1, 1, 1]} : vector<5x5x128xbf16> to vector<4x4x128xbf16>
    %3 = vector.shape_cast %2 : vector<4x4x128xbf16> to vector<16x128xbf16>
    %c0_3 = arith.constant 0 : index
    %c0_4 = arith.constant 0 : index
    %c0_5 = arith.constant 0 : index
    %4 = vector.load %arg2[%c0_3, %c0_4, %c0_5] : memref<4x128x64xbf16, #tpu.memory_space<vmem>>, vector<1x128x64xbf16>
    %5 = vector.shape_cast %4 : vector<1x128x64xbf16> to vector<128x64xbf16>
    %cst = arith.constant dense<0.000000e+00> : vector<16x64xf32>
    %6 = tpu.matmul %3, %5, %cst {dimension_numbers = #tpu.dot_dimension_numbers<[1], [0], [0], [1], [0, 0, 1, 1], [], []>} : vector<16x128xbf16>, vector<128x64xbf16>, vector<16x64xf32> -> vector<16x64xf32>
    %7 = vector.extract_strided_slice %1 {offsets = [0, 1, 0], sizes = [4, 4, 128], strides = [1, 1, 1]} : vector<5x5x128xbf16> to vector<4x4x128xbf16>
    %8 = vector.shape_cast %7 : vector<4x4x128xbf16> to vector<16x128xbf16>
    %c1 = arith.constant 1 : index
    %c0_6 = arith.constant 0 : index
    %c0_7 = arith.constant 0 : index
    %9 = vector.load %arg2[%c1, %c0_6, %c0_7] : memref<4x128x64xbf16, #tpu.memory_space<vmem>>, vector<1x128x64xbf16>
    %10 = vector.shape_cast %9 : vector<1x128x64xbf16> to vector<128x64xbf16>
    %cst_8 = arith.constant dense<0.000000e+00> : vector<16x64xf32>
    %11 = tpu.matmul %8, %10, %cst_8 {dimension_numbers = #tpu.dot_dimension_numbers<[1], [0], [0], [1], [0, 0, 1, 1], [], []>} : vector<16x128xbf16>, vector<128x64xbf16>, vector<16x64xf32> -> vector<16x64xf32>
    %12 = arith.addf %6, %11 : vector<16x64xf32>
    %13 = vector.extract_strided_slice %1 {offsets = [1, 0, 0], sizes = [4, 4, 128], strides = [1, 1, 1]} : vector<5x5x128xbf16> to vector<4x4x128xbf16>
    %14 = vector.shape_cast %13 : vector<4x4x128xbf16> to vector<16x128xbf16>
    %c2 = arith.constant 2 : index
    %c0_9 = arith.constant 0 : index
    %c0_10 = arith.constant 0 : index
    %15 = vector.load %arg2[%c2, %c0_9, %c0_10] : memref<4x128x64xbf16, #tpu.memory_space<vmem>>, vector<1x128x64xbf16>
    %16 = vector.shape_cast %15 : vector<1x128x64xbf16> to vector<128x64xbf16>
    %cst_11 = arith.constant dense<0.000000e+00> : vector<16x64xf32>
    %17 = tpu.matmul %14, %16, %cst_11 {dimension_numbers = #tpu.dot_dimension_numbers<[1], [0], [0], [1], [0, 0, 1, 1], [], []>} : vector<16x128xbf16>, vector<128x64xbf16>, vector<16x64xf32> -> vector<16x64xf32>
    %18 = arith.addf %12, %17 : vector<16x64xf32>
    %19 = vector.extract_strided_slice %1 {offsets = [1, 1, 0], sizes = [4, 4, 128], strides = [1, 1, 1]} : vector<5x5x128xbf16> to vector<4x4x128xbf16>
    %20 = vector.shape_cast %19 : vector<4x4x128xbf16> to vector<16x128xbf16>
    %c3 = arith.constant 3 : index
    %c0_12 = arith.constant 0 : index
    %c0_13 = arith.constant 0 : index
    %21 = vector.load %arg2[%c3, %c0_12, %c0_13] : memref<4x128x64xbf16, #tpu.memory_space<vmem>>, vector<1x128x64xbf16>
    %22 = vector.shape_cast %21 : vector<1x128x64xbf16> to vector<128x64xbf16>
    %cst_14 = arith.constant dense<0.000000e+00> : vector<16x64xf32>
    %23 = tpu.matmul %20, %22, %cst_14 {dimension_numbers = #tpu.dot_dimension_numbers<[1], [0], [0], [1], [0, 0, 1, 1], [], []>} : vector<16x128xbf16>, vector<128x64xbf16>, vector<16x64xf32> -> vector<16x64xf32>
    %24 = arith.addf %18, %23 : vector<16x64xf32>
    %c0_15 = arith.constant 0 : index
    %c0_16 = arith.constant 0 : index
    %25 = vector.load %arg3[%c0_15, %c0_16] : memref<1x64xf32, #tpu.memory_space<vmem>>, vector<1x64xf32>
    %c0_17 = arith.constant 0 : index
    %c0_18 = arith.constant 0 : index
    %26 = vector.load %arg4[%c0_17, %c0_18] : memref<1x64xf32, #tpu.memory_space<vmem>>, vector<1x64xf32>
    %cst_19 = arith.constant dense<0.000000e+00> : vector<64xf32>
    %27 = vector.multi_reduction <add>, %24, %cst_19 [0] : vector<16x64xf32> to vector<64xf32>
    %28 = vector.shape_cast %27 : vector<64xf32> to vector<1x64xf32>
    %cst_20 = arith.constant 6.250000e-02 : f32
    %29 = vector.broadcast %cst_20 : f32 to vector<1x64xf32>
    %30 = arith.mulf %28, %29 : vector<1x64xf32>
    %31 = vector.broadcast %30 : vector<1x64xf32> to vector<16x64xf32>
    %32 = arith.subf %24, %31 : vector<16x64xf32>
    %33 = arith.mulf %32, %32 : vector<16x64xf32>
    %cst_21 = arith.constant dense<0.000000e+00> : vector<64xf32>
    %34 = vector.multi_reduction <add>, %33, %cst_21 [0] : vector<16x64xf32> to vector<64xf32>
    %35 = vector.shape_cast %34 : vector<64xf32> to vector<1x64xf32>
    %cst_22 = arith.constant 6.250000e-02 : f32
    %36 = vector.broadcast %cst_22 : f32 to vector<1x64xf32>
    %37 = arith.mulf %35, %36 : vector<1x64xf32>
    %cst_23 = arith.constant 9.99999974E-6 : f32
    %38 = vector.broadcast %cst_23 : f32 to vector<1x64xf32>
    %39 = arith.addf %37, %38 : vector<1x64xf32>
    %40 = math.rsqrt %39 : vector<1x64xf32>
    %41 = vector.broadcast %40 : vector<1x64xf32> to vector<16x64xf32>
    %42 = arith.mulf %32, %41 : vector<16x64xf32>
    %43 = vector.broadcast %25 : vector<1x64xf32> to vector<16x64xf32>
    %44 = arith.mulf %42, %43 : vector<16x64xf32>
    %45 = vector.broadcast %26 : vector<1x64xf32> to vector<16x64xf32>
    %46 = arith.addf %44, %45 : vector<16x64xf32>
    %cst_24 = arith.constant 0.000000e+00 : f32
    %47 = vector.broadcast %cst_24 : f32 to vector<16x64xf32>
    %48 = arith.cmpf oge, %46, %47 : vector<16x64xf32>
    %cst_25 = arith.constant 2.000000e-01 : f32
    %49 = vector.broadcast %cst_25 : f32 to vector<16x64xf32>
    %50 = arith.mulf %49, %46 : vector<16x64xf32>
    %51 = arith.select %48, %46, %50 : vector<16x64xi1>, vector<16x64xf32>
    %c0_26 = arith.constant 0 : index
    %c0_27 = arith.constant 0 : index
    %52 = vector.load %arg5[%c0_26, %c0_27] : memref<16x64xf32, #tpu.memory_space<vmem>>, vector<16x64xf32>
    %53 = arith.mulf %51, %52 : vector<16x64xf32>
    %cst_28 = arith.constant dense<0.000000e+00> : vector<16xf32>
    %54 = vector.multi_reduction <add>, %53, %cst_28 [1] : vector<16x64xf32> to vector<16xf32>
    %55 = vector.shape_cast %54 : vector<16xf32> to vector<16x1xf32>
    %cst_29 = arith.constant dense<0.000000e+00> : vector<1xf32>
    %56 = vector.multi_reduction <add>, %55, %cst_29 [0] : vector<16x1xf32> to vector<1xf32>
    %57 = vector.shape_cast %56 : vector<1xf32> to vector<1x1xf32>
    %c0_30 = arith.constant 0 : index
    %c0_31 = arith.constant 0 : index
    %58 = vector.load %arg6[%c0_30, %c0_31] : memref<1x1xf32, #tpu.memory_space<vmem>>, vector<1x1xf32>
    %59 = arith.addf %57, %58 : vector<1x1xf32>
    %c0_32 = arith.constant 0 : index
    %c0_33 = arith.constant 0 : index
    %c0_34 = arith.constant 0 : index
    %60 = vector.load %arg7[%c0_32, %c0_33, %c0_34] : memref<1x1x1xf32, #tpu.memory_space<vmem>>, vector<1x1x1xf32>
    %61 = vector.shape_cast %60 : vector<1x1x1xf32> to vector<1x1xf32>
    %62 = vector.shape_cast %59 : vector<1x1xf32> to vector<1x1x1xf32>
    tpu.vector_store %arg7[%c0_32, %c0_33, %c0_34], %62 {strides = array<i32>} : memref<1x1x1xf32, #tpu.memory_space<vmem>>, vector<1x1x1xf32>,
    return
  }
  func.func @transform_0(%arg0: i32) -> (i32, i32, i32, i32) {
    %c0_i32 = arith.constant 0 : i32
    %c0_i32_0 = arith.constant 0 : i32
    %c0_i32_1 = arith.constant 0 : i32
    %c0_i32_2 = arith.constant 0 : i32
    return %arg0, %c0_i32, %c0_i32_0, %c0_i32_1 : i32, i32, i32, i32
  }
  func.func @transform_1(%arg0: i32) -> (i32, i32, i32) {
    %c0_i32 = arith.constant 0 : i32
    %c0_i32_0 = arith.constant 0 : i32
    %c0_i32_1 = arith.constant 0 : i32
    %c0_i32_2 = arith.constant 0 : i32
    return %c0_i32, %c0_i32_0, %c0_i32_1 : i32, i32, i32
  }
  func.func @transform_2(%arg0: i32) -> (i32, i32) {
    %c0_i32 = arith.constant 0 : i32
    %c0_i32_0 = arith.constant 0 : i32
    %c0_i32_1 = arith.constant 0 : i32
    return %c0_i32, %c0_i32_0 : i32, i32
  }
  func.func @transform_3(%arg0: i32) -> (i32, i32) {
    %c0_i32 = arith.constant 0 : i32
    %c0_i32_0 = arith.constant 0 : i32
    %c0_i32_1 = arith.constant 0 : i32
    return %c0_i32, %c0_i32_0 : i32, i32
  }
  func.func @transform_4(%arg0: i32) -> (i32, i32) {
    %c0_i32 = arith.constant 0 : i32
    %c0_i32_0 = arith.constant 0 : i32
    %c0_i32_1 = arith.constant 0 : i32
    return %c0_i32, %c0_i32_0 : i32, i32
  }
  func.func @transform_5(%arg0: i32) -> (i32, i32) {
    %c0_i32 = arith.constant 0 : i32
    %c0_i32_0 = arith.constant 0 : i32
    %c0_i32_1 = arith.constant 0 : i32
    return %c0_i32, %c0_i32_0 : i32, i32
  }
  func.func @transform_6(%arg0: i32) -> (i32, i32, i32) {
    %c0_i32 = arith.constant 0 : i32
    %c0_i32_0 = arith.constant 0 : i32
    %c0_i32_1 = arith.constant 0 : i32
    return %arg0, %c0_i32, %c0_i32_0 : i32, i32, i32
  }
}

</mosaic_0001>

<llo_original>
// kernel: discriminator_forward.4
$region0: #{discriminator_forward.4}
  #allocation0 [shape = 'u32[]', space=smem, size = 0x4, offset = 0x4, fixed_abs, tag = 'smem constant byte address 0x4 - core index']
  #allocation1 [shape = 'u32[72,128]{1,0:T(1,128)}', space=vmem, size = 0x9000, scoped, tag = 'internal scratch']
  %s0 = inlined_call_operand.vmem [shape: bf16[2,32,32,48], index: 0, kind: input, shape index: {}]
  %s1 = inlined_call_operand.vmem [shape: bf16[48,8], index: 1, kind: input, shape index: {}]
  %s2 = inlined_call_operand.vmem [shape: f32[1,8], index: 2, kind: input, shape index: {}]
  %s3 = inlined_call_operand.vmem [shape: bf16[2,8,1024], index: 3, kind: output, shape index: {}]
  %s4 = sld [smem:[#allocation0]]
  $region45: #{discriminator_forward.4} parent=0
    _
  %s6 = ssub.s32 1, %s4
  %s7 = scalar_select 0, %s6, %s4
  loop: start=0, step=1, limit=4
  $region2: #{discriminator_forward.4} parent=0 // loop_pre_header
    _
  $region3: #{discriminator_forward.4} parent=0 // loop_header
    %s9 = sphi 0, %s13
    %p10 = scmp.ge.s32.totalorder %s9, 4
    %s19 = sphi 0, %s21
    %s22 = sphi 0, %s19
    %s23 = sphi 0, %s22
    %s39 = sphi 0, %s23
    %s43 = sphi 0, %s43
    %s45 = sphi 0, %s43
    %s46 = sphi 0, %s45
    %s60 = sphi 0, %s46
    %s64 = sphi 0, %s64
    %s66 = sphi 0, %s64
    %s67 = sphi 0, %s66
    %s81 = sphi 0, %s67
    %s87 = sphi 0, %s89
    %s90 = sphi 0, %s87
    %s91 = sphi 0, %s90
    %s107 = sphi 0, %s91
  $region4: #{discriminator_forward.4} parent=0 // loop_header_branch
    %12 = sbr.rel (%p10) target = $region8
  $region5: #{discriminator_forward.4} parent=0 // loop_body
    %s14 = ssub.s32 %s9, 1
    %s15 = ssub.s32 %s9, 2
    %s16 = sadd.s32 %s9, 1
    %s17 = ssub.s32 %s9, %s16
    %p18 = scmp.eq.s32.totalorder %s17, 0
    %s20 = sadd.s32 %s19, 1
    %s21 = scalar_select %p18, %s19, %s20
    %p24 = pneg %p18
    %p25 = scmp.eq.s32.totalorder %s9, 1
    %p26 = por %p24, %p25
    %p27 = scmp.ne.s32.totalorder %s19, %s22
    %p28 = scmp.eq.s32.totalorder %s9, 0
    %p29 = por %p27, %p28
    %p30 = scmp.ne.s32.totalorder %s19, %s22
    %p31 = scmp.eq.s32.totalorder %s14, 1
    %p32 = por %p30, %p31
    %p33 = scmp.ne.s32.totalorder %s22, %s23
    %p34 = scmp.eq.s32.totalorder %s14, 0
    %p35 = por %p33, %p34
    %p36 = scmp.ne.s32.totalorder %s22, %s23
    %p37 = scmp.eq.s32.totalorder %s15, 1
    %p38 = por %p36, %p37
    %p40 = scmp.ne.s32.totalorder %s23, %s39
    %p41 = scmp.eq.s32.totalorder %s15, 0
    %p42 = por %p40, %p41
    %s44 = sadd.s32 %s43, 1
    %p47 = scmp.eq.s32.totalorder %s9, 1
    %p48 = scmp.ne.s32.totalorder %s43, %s45
    %p49 = scmp.eq.s32.totalorder %s9, 0
    %p50 = por %p48, %p49
    %p51 = scmp.ne.s32.totalorder %s43, %s45
    %p52 = scmp.eq.s32.totalorder %s14, 1
    %p53 = por %p51, %p52
    %p54 = scmp.ne.s32.totalorder %s45, %s46
    %p55 = scmp.eq.s32.totalorder %s14, 0
    %p56 = por %p54, %p55
    %p57 = scmp.ne.s32.totalorder %s45, %s46
    %p58 = scmp.eq.s32.totalorder %s15, 1
    %p59 = por %p57, %p58
    %p61 = scmp.ne.s32.totalorder %s46, %s60
    %p62 = scmp.eq.s32.totalorder %s15, 0
    %p63 = por %p61, %p62
    %s65 = sadd.s32 %s64, 1
    %p68 = scmp.eq.s32.totalorder %s9, 1
    %p69 = scmp.ne.s32.totalorder %s64, %s66
    %p70 = scmp.eq.s32.totalorder %s9, 0
    %p71 = por %p69, %p70
    %p72 = scmp.ne.s32.totalorder %s64, %s66
    %p73 = scmp.eq.s32.totalorder %s14, 1
    %p74 = por %p72, %p73
    %p75 = scmp.ne.s32.totalorder %s66, %s67
    %p76 = scmp.eq.s32.totalorder %s14, 0
    %p77 = por %p75, %p76
    %p78 = scmp.ne.s32.totalorder %s66, %s67
    %p79 = scmp.eq.s32.totalorder %s15, 1
    %p80 = por %p78, %p79
    %p82 = scmp.ne.s32.totalorder %s67, %s81
    %p83 = scmp.eq.s32.totalorder %s15, 0
    %p84 = por %p82, %p83
    %s85 = ssub.s32 %s9, %s16
    %p86 = scmp.eq.s32.totalorder %s85, 0
    %s88 = sadd.s32 %s87, 1
    %s89 = scalar_select %p86, %s87, %s88
    %p92 = pneg %p86
    %p93 = scmp.eq.s32.totalorder %s9, 1
    %p94 = por %p92, %p93
    %p95 = scmp.ne.s32.totalorder %s87, %s90
    %p96 = scmp.eq.s32.totalorder %s9, 0
    %p97 = por %p95, %p96
    %p98 = scmp.ne.s32.totalorder %s87, %s90
    %p99 = scmp.eq.s32.totalorder %s14, 1
    %p100 = por %p98, %p99
    %p101 = scmp.ne.s32.totalorder %s90, %s91
    %p102 = scmp.eq.s32.totalorder %s14, 0
    %p103 = por %p101, %p102
    %p104 = scmp.ne.s32.totalorder %s90, %s91
    %p105 = scmp.eq.s32.totalorder %s15, 1
    %p106 = por %p104, %p105
    %p108 = scmp.ne.s32.totalorder %s91, %s107
    %p109 = scmp.eq.s32.totalorder %s15, 0
    %p110 = por %p108, %p109
    %p111 = scmp.le.s32.totalorder 1, %s9
    %p112 = scmp.lt.s32.totalorder %s9, 3
    %p113 = pnand %p111, %p112
    %p114 = pneg %p113
    // Predicated region
    $region9: #{discriminator_forward.4} parent=5 // pred_check
      _
    $region10: #{discriminator_forward.4} parent=5 // pred_check_branch
      %116 = sbr.rel (%p113) target = $region12
    $region11: #{discriminator_forward.4} parent=5 // pred_region
      %s117 = ssub.s32 %s9, 1
      // Predicated region
      $region13: #{discriminator_forward.4} parent=11 // pred_check
        %p118 = pneg %p56
      $region14: #{discriminator_forward.4} parent=11 // pred_check_branch
        %120 = sbr.rel (%p118) target = $region16
      $region15: #{discriminator_forward.4} parent=11 // pred_region
        _
      $region16: #{discriminator_forward.4} parent=11 // pred_fallthru
        _
      // Predicated region
      $region17: #{discriminator_forward.4} parent=11 // pred_check
        %p121 = pneg %p77
      $region18: #{discriminator_forward.4} parent=11 // pred_check_branch
        %123 = sbr.rel (%p121) target = $region20
      $region19: #{discriminator_forward.4} parent=11 // pred_region
        _
      $region20: #{discriminator_forward.4} parent=11 // pred_fallthru
        _
    $region12: #{discriminator_forward.4} parent=5 // pred_fallthru
      _
    %p124 = scmp.lt.s32.totalorder %s9, 2
    // Predicated region
    $region21: #{discriminator_forward.4} parent=5 // pred_check
      %p125 = pneg %p124
    $region22: #{discriminator_forward.4} parent=5 // pred_check_branch
      %127 = sbr.rel (%p125) target = $region24
    $region23: #{discriminator_forward.4} parent=5 // pred_region
      // Predicated region
      $region25: #{discriminator_forward.4} parent=23 // pred_check
        %p128 = pneg %p29
      $region26: #{discriminator_forward.4} parent=23 // pred_check_branch
        %130 = sbr.rel (%p128) target = $region28
      $region27: #{discriminator_forward.4} parent=23 // pred_region
        %p131 = scmp.lt.s32.totalorder %s9, 1
        %s132 = scalar_select %p131, %s9, 1
        %s133 = smul.addr %s132, 128
        %s134 = smul.addr %s133, 4
        %s135 = scalar_lea.vmem %s0, %s134
      $region28: #{discriminator_forward.4} parent=23 // pred_fallthru
        _
    $region24: #{discriminator_forward.4} parent=5 // pred_fallthru
      _
    %p136 = scmp.le.s32.totalorder 1, %s9
    %p137 = scmp.lt.s32.totalorder %s9, 3
    %p138 = pnand %p136, %p137
    %p139 = pneg %p138
    // Predicated region
    $region29: #{discriminator_forward.4} parent=5 // pred_check
      _
    $region30: #{discriminator_forward.4} parent=5 // pred_check_branch
      %141 = sbr.rel (%p138) target = $region32
    $region31: #{discriminator_forward.4} parent=5 // pred_region
      %s142 = ssub.s32 %s9, 1
      %p143 = scmp.lt.s32.totalorder %s14, 1
      %s144 = scalar_select %p143, %s14, 1
      %s145 = smul.addr %s144, 128
      %s146 = smul.addr %s145, 4
      %s147 = scalar_lea.vmem %s0, %s146
      %p148 = pneg %p35
      %p149 = pneg %p32
      %p150 = pneg %p56
      %p151 = pneg %p53
      %p152 = pneg %p77
      %p153 = pneg %p74
      %p154 = pneg %p103
      %p155 = pneg %p100
      %p156 = scmp.lt.s32.totalorder %s14, 1
      %s157 = scalar_select %p156, %s14, 1
      %s158 = smul.addr %s157, 8
      %s159 = smul.addr %s158, 4
      %s160 = scalar_lea.vmem %s3, %s159
      %p161 = scmp.lt.s32.totalorder %s14, 1
      %s162 = scalar_select %p161, %s14, 1
      %s163 = smul.addr %s162, 128
      %s164 = smul.addr %s163, 4
      %s165 = scalar_lea.vmem %s0, %s164
      %p166 = scmp.lt.s32.totalorder %s14, 1
      %s167 = scalar_select %p166, %s14, 1
      %s168 = smul.addr %s167, 8
      %s169 = smul.addr %s168, 4
      %s170 = scalar_lea.vmem %s3, %s169
      %v172 = vld [vmem:[%s165] sm:$0xf]
      %v173 = vld [vmem:[%s165 + $0x4] sm:$0xf]
      %v174 = vld [vmem:[%s165 + $0x8] sm:$0xf]
      %v175 = vld [vmem:[%s165 + $0xc] sm:$0xf]
      %v176 = vld [vmem:[%s165 + $0x10] sm:$0xf]
      %v177 = vld [vmem:[%s165 + $0x14] sm:$0xf]
      %v178 = vld [vmem:[%s165 + $0x18] sm:$0xf]
      %v179 = vld [vmem:[%s165 + $0x1c] sm:$0xf]
      %v180 = vld [vmem:[%s165 + $0x20] sm:$0xf]
      %v181 = vld [vmem:[%s165 + $0x24] sm:$0xf]
      %v182 = vld [vmem:[%s165 + $0x28] sm:$0xf]
      %v183 = vld [vmem:[%s165 + $0x2c] sm:$0xf]
      %v184 = vld [vmem:[%s165 + $0x30] sm:$0xf]
      %v185 = vld [vmem:[%s165 + $0x34] sm:$0xf]
      %v186 = vld [vmem:[%s165 + $0x38] sm:$0xf]
      %v187 = vld [vmem:[%s165 + $0x3c] sm:$0xf]
      %v188 = vld [vmem:[%s165 + $0x40] sm:$0xf]
      %v189 = vld [vmem:[%s165 + $0x44] sm:$0xf]
      %v190 = vld [vmem:[%s165 + $0x48] sm:$0xf]
      %v191 = vld [vmem:[%s165 + $0x4c] sm:$0xf]
      %v192 = vld [vmem:[%s165 + $0x50] sm:$0xf]
      %v193 = vld [vmem:[%s165 + $0x54] sm:$0xf]
      %v194 = vld [vmem:[%s165 + $0x58] sm:$0xf]
      %v195 = vld [vmem:[%s165 + $0x5c] sm:$0xf]
      %v196 = vld [vmem:[%s165 + $0x60] sm:$0xf]
      %v197 = vld [vmem:[%s165 + $0x64] sm:$0xf]
      %v198 = vld [vmem:[%s165 + $0x68] sm:$0xf]
      %v199 = vld [vmem:[%s165 + $0x6c] sm:$0xf]
      %v200 = vld [vmem:[%s165 + $0x70] sm:$0xf]
      %v201 = vld [vmem:[%s165 + $0x74] sm:$0xf]
      %v202 = vld [vmem:[%s165 + $0x78] sm:$0xf]
      %v203 = vld [vmem:[%s165 + $0x7c] sm:$0xf]
      %v204 = vld [vmem:[%s165 + $0x80] sm:$0xf]
      %v205 = vld [vmem:[%s165 + $0x84] sm:$0xf]
      %v206 = vld [vmem:[%s165 + $0x88] sm:$0xf]
      %v207 = vld [vmem:[%s165 + $0x8c] sm:$0xf]
      %v208 = vld [vmem:[%s165 + $0x90] sm:$0xf]
      %v209 = vld [vmem:[%s165 + $0x94] sm:$0xf]
      %v210 = vld [vmem:[%s165 + $0x98] sm:$0xf]
      %v211 = vld [vmem:[%s165 + $0x9c] sm:$0xf]
      %v212 = vld [vmem:[%s165 + $0xa0] sm:$0xf]
      %v213 = vld [vmem:[%s165 + $0xa4] sm:$0xf]
      %v214 = vld [vmem:[%s165 + $0xa8] sm:$0xf]
      %v215 = vld [vmem:[%s165 + $0xac] sm:$0xf]
      %v216 = vld [vmem:[%s165 + $0xb0] sm:$0xf]
      %v217 = vld [vmem:[%s165 + $0xb4] sm:$0xf]
      %v218 = vld [vmem:[%s165 + $0xb8] sm:$0xf]
      %v219 = vld [vmem:[%s165 + $0xbc] sm:$0xf]
      %v220 = vld [vmem:[%s165 + $0xc0] sm:$0xf]
      %v221 = vld [vmem:[%s165 + $0xc4] sm:$0xf]
      %v222 = vld [vmem:[%s165 + $0xc8] sm:$0xf]
      %v223 = vld [vmem:[%s165 + $0xcc] sm:$0xf]
      %v224 = vld [vmem:[%s165 + $0xd0] sm:$0xf]
      %v225 = vld [vmem:[%s165 + $0xd4] sm:$0xf]
      %v226 = vld [vmem:[%s165 + $0xd8] sm:$0xf]
      %v227 = vld [vmem:[%s165 + $0xdc] sm:$0xf]
      %v228 = vld [vmem:[%s165 + $0xe0] sm:$0xf]
      %v229 = vld [vmem:[%s165 + $0xe4] sm:$0xf]
      %v230 = vld [vmem:[%s165 + $0xe8] sm:$0xf]
      %v231 = vld [vmem:[%s165 + $0xec] sm:$0xf]
      %v232 = vld [vmem:[%s165 + $0xf0] sm:$0xf]
      %v233 = vld [vmem:[%s165 + $0xf4] sm:$0xf]
      %v234 = vld [vmem:[%s165 + $0xf8] sm:$0xf]
      %v235 = vld [vmem:[%s165 + $0xfc] sm:$0xf]
      %v236 = vld [vmem:[%s165 + $0x100] sm:$0xf]
      %v237 = vld [vmem:[%s165 + $0x104] sm:$0xf]
      %v238 = vld [vmem:[%s165 + $0x108] sm:$0xf]
      %v239 = vld [vmem:[%s165 + $0x10c] sm:$0xf]
      %v240 = vld [vmem:[%s165 + $0x110] sm:$0xf]
      %v241 = vld [vmem:[%s165 + $0x114] sm:$0xf]
      %v242 = vld [vmem:[%s165 + $0x118] sm:$0xf]
      %v243 = vld [vmem:[%s165 + $0x11c] sm:$0xf]
      %v244 = vld [vmem:[%s165 + $0x120] sm:$0xf]
      %v245 = vld [vmem:[%s165 + $0x124] sm:$0xf]
      %v246 = vld [vmem:[%s165 + $0x128] sm:$0xf]
      %v247 = vld [vmem:[%s165 + $0x12c] sm:$0xf]
      %v248 = vld [vmem:[%s165 + $0x130] sm:$0xf]
      %v249 = vld [vmem:[%s165 + $0x134] sm:$0xf]
      %v250 = vld [vmem:[%s165 + $0x138] sm:$0xf]
      %v251 = vld [vmem:[%s165 + $0x13c] sm:$0xf]
      %v252 = vld [vmem:[%s165 + $0x140] sm:$0xf]
      %v253 = vld [vmem:[%s165 + $0x144] sm:$0xf]
      %v254 = vld [vmem:[%s165 + $0x148] sm:$0xf]
      %v255 = vld [vmem:[%s165 + $0x14c] sm:$0xf]
      %v256 = vld [vmem:[%s165 + $0x150] sm:$0xf]
      %v257 = vld [vmem:[%s165 + $0x154] sm:$0xf]
      %v258 = vld [vmem:[%s165 + $0x158] sm:$0xf]
      %v259 = vld [vmem:[%s165 + $0x15c] sm:$0xf]
      %v260 = vld [vmem:[%s165 + $0x160] sm:$0xf]
      %v261 = vld [vmem:[%s165 + $0x164] sm:$0xf]
      %v262 = vld [vmem:[%s165 + $0x168] sm:$0xf]
      %v263 = vld [vmem:[%s165 + $0x16c] sm:$0xf]
      %v264 = vld [vmem:[%s165 + $0x170] sm:$0xf]
      %v265 = vld [vmem:[%s165 + $0x174] sm:$0xf]
      %v266 = vld [vmem:[%s165 + $0x178] sm:$0xf]
      %v267 = vld [vmem:[%s165 + $0x17c] sm:$0xf]
      %v268 = vld [vmem:[%s165 + $0x180] sm:$0xf]
      %v269 = vld [vmem:[%s165 + $0x184] sm:$0xf]
      %v270 = vld [vmem:[%s165 + $0x188] sm:$0xf]
      %v271 = vld [vmem:[%s165 + $0x18c] sm:$0xf]
      %v272 = vld [vmem:[%s165 + $0x190] sm:$0xf]
      %v273 = vld [vmem:[%s165 + $0x194] sm:$0xf]
      %v274 = vld [vmem:[%s165 + $0x198] sm:$0xf]
      %v275 = vld [vmem:[%s165 + $0x19c] sm:$0xf]
      %v276 = vld [vmem:[%s165 + $0x1a0] sm:$0xf]
      %v277 = vld [vmem:[%s165 + $0x1a4] sm:$0xf]
      %v278 = vld [vmem:[%s165 + $0x1a8] sm:$0xf]
      %v279 = vld [vmem:[%s165 + $0x1ac] sm:$0xf]
      %v280 = vld [vmem:[%s165 + $0x1b0] sm:$0xf]
      %v281 = vld [vmem:[%s165 + $0x1b4] sm:$0xf]
      %v282 = vld [vmem:[%s165 + $0x1b8] sm:$0xf]
      %v283 = vld [vmem:[%s165 + $0x1bc] sm:$0xf]
      %v284 = vld [vmem:[%s165 + $0x1c0] sm:$0xf]
      %v285 = vld [vmem:[%s165 + $0x1c4] sm:$0xf]
      %v286 = vld [vmem:[%s165 + $0x1c8] sm:$0xf]
      %v287 = vld [vmem:[%s165 + $0x1cc] sm:$0xf]
      %v288 = vld [vmem:[%s165 + $0x1d0] sm:$0xf]
      %v289 = vld [vmem:[%s165 + $0x1d4] sm:$0xf]
      %v290 = vld [vmem:[%s165 + $0x1d8] sm:$0xf]
      %v291 = vld [vmem:[%s165 + $0x1dc] sm:$0xf]
      %v292 = vld [vmem:[%s165 + $0x1e0] sm:$0xf]
      %v293 = vld [vmem:[%s165 + $0x1e4] sm:$0xf]
      %v294 = vld [vmem:[%s165 + $0x1e8] sm:$0xf]
      %v295 = vld [vmem:[%s165 + $0x1ec] sm:$0xf]
      %v296 = vld [vmem:[%s165 + $0x1f0] sm:$0xf]
      %v297 = vld [vmem:[%s165 + $0x1f4] sm:$0xf]
      %v298 = vld [vmem:[%s165 + $0x1f8] sm:$0xf]
      %v299 = vld [vmem:[%s165 + $0x1fc] sm:$0xf]
      %v300 = vld [vmem:[%s1] sm:$0xf]
      %v301 = vld [vmem:[%s1 + $0x4] sm:$0xf]
      %v302 = vld [vmem:[%s1 + $0x8] sm:$0xf]
      %v303 = vld [vmem:[%s1 + $0xc] sm:$0xf]
      %v304 = vld [vmem:[%s1 + $0x10] sm:$0xf]
      %v305 = vld [vmem:[%s1 + $0x14] sm:$0xf]
      %v306 = vld [vmem:[%s2] sm:$0x1]
      %v308 = vperm.slane %v306, 0
      %v438 = vunpack.c.l.b16 %v172
      %v439 = vunpack.c.l.b16 %v173
      %v440 = vunpack.c.l.b16 %v174
      %v441 = vunpack.c.l.b16 %v175
      %v442 = vunpack.c.l.b16 %v176
      %v443 = vunpack.c.l.b16 %v177
      %v444 = vunpack.c.l.b16 %v178
      %v445 = vunpack.c.l.b16 %v179
      %v446 = vunpack.c.l.b16 %v180
      %v447 = vunpack.c.l.b16 %v181
      %v448 = vunpack.c.l.b16 %v182
      %v449 = vunpack.c.l.b16 %v183
      %v450 = vunpack.c.l.b16 %v184
      %v451 = vunpack.c.l.b16 %v185
      %v452 = vunpack.c.l.b16 %v186
      %v453 = vunpack.c.l.b16 %v187
      %v454 = vunpack.c.l.b16 %v188
      %v455 = vunpack.c.l.b16 %v189
      %v456 = vunpack.c.l.b16 %v190
      %v457 = vunpack.c.l.b16 %v191
      %v458 = vunpack.c.l.b16 %v192
      %v459 = vunpack.c.l.b16 %v193
      %v460 = vunpack.c.l.b16 %v194
      %v461 = vunpack.c.l.b16 %v195
      %v462 = vunpack.c.l.b16 %v196
      %v463 = vunpack.c.l.b16 %v197
      %v464 = vunpack.c.l.b16 %v198
      %v465 = vunpack.c.l.b16 %v199
      %v466 = vunpack.c.l.b16 %v200
      %v467 = vunpack.c.l.b16 %v201
      %v468 = vunpack.c.l.b16 %v202
      %v469 = vunpack.c.l.b16 %v203
      %v470 = vunpack.c.l.b16 %v204
      %v471 = vunpack.c.l.b16 %v205
      %v472 = vunpack.c.l.b16 %v206
      %v473 = vunpack.c.l.b16 %v207
      %v474 = vunpack.c.l.b16 %v208
      %v475 = vunpack.c.l.b16 %v209
      %v476 = vunpack.c.l.b16 %v210
      %v477 = vunpack.c.l.b16 %v211
      %v478 = vunpack.c.l.b16 %v212
      %v479 = vunpack.c.l.b16 %v213
      %v480 = vunpack.c.l.b16 %v214
      %v481 = vunpack.c.l.b16 %v215
      %v482 = vunpack.c.l.b16 %v216
      %v483 = vunpack.c.l.b16 %v217
      %v484 = vunpack.c.l.b16 %v218
      %v485 = vunpack.c.l.b16 %v219
      %v486 = vunpack.c.l.b16 %v220
      %v487 = vunpack.c.l.b16 %v221
      %v488 = vunpack.c.l.b16 %v222
      %v489 = vunpack.c.l.b16 %v223
      %v490 = vunpack.c.l.b16 %v224
      %v491 = vunpack.c.l.b16 %v225
      %v492 = vunpack.c.l.b16 %v226
      %v493 = vunpack.c.l.b16 %v227
      %v494 = vunpack.c.l.b16 %v228
      %v495 = vunpack.c.l.b16 %v229
      %v496 = vunpack.c.l.b16 %v230
      %v497 = vunpack.c.l.b16 %v231
      %v498 = vunpack.c.l.b16 %v232
      %v499 = vunpack.c.l.b16 %v233
      %v500 = vunpack.c.l.b16 %v234
      %v501 = vunpack.c.l.b16 %v235
      %v502 = vunpack.c.l.b16 %v236
      %v503 = vunpack.c.l.b16 %v237
      %v504 = vunpack.c.l.b16 %v238
      %v505 = vunpack.c.l.b16 %v239
      %v506 = vunpack.c.l.b16 %v240
      %v507 = vunpack.c.l.b16 %v241
      %v508 = vunpack.c.l.b16 %v242
      %v509 = vunpack.c.l.b16 %v243
      %v510 = vunpack.c.l.b16 %v244
      %v511 = vunpack.c.l.b16 %v245
      %v512 = vunpack.c.l.b16 %v246
      %v513 = vunpack.c.l.b16 %v247
      %v514 = vunpack.c.l.b16 %v248
      %v515 = vunpack.c.l.b16 %v249
      %v516 = vunpack.c.l.b16 %v250
      %v517 = vunpack.c.l.b16 %v251
      %v518 = vunpack.c.l.b16 %v252
      %v519 = vunpack.c.l.b16 %v253
      %v520 = vunpack.c.l.b16 %v254
      %v521 = vunpack.c.l.b16 %v255
      %v522 = vunpack.c.l.b16 %v256
      %v523 = vunpack.c.l.b16 %v257
      %v524 = vunpack.c.l.b16 %v258
      %v525 = vunpack.c.l.b16 %v259
      %v526 = vunpack.c.l.b16 %v260
      %v527 = vunpack.c.l.b16 %v261
      %v528 = vunpack.c.l.b16 %v262
      %v529 = vunpack.c.l.b16 %v263
      %v530 = vunpack.c.l.b16 %v264
      %v531 = vunpack.c.l.b16 %v265
      %v532 = vunpack.c.l.b16 %v266
      %v533 = vunpack.c.l.b16 %v267
      %v534 = vunpack.c.l.b16 %v268
      %v535 = vunpack.c.l.b16 %v269
      %v536 = vunpack.c.l.b16 %v270
      %v537 = vunpack.c.l.b16 %v271
      %v538 = vunpack.c.l.b16 %v272
      %v539 = vunpack.c.l.b16 %v273
      %v540 = vunpack.c.l.b16 %v274
      %v541 = vunpack.c.l.b16 %v275
      %v542 = vunpack.c.l.b16 %v276
      %v543 = vunpack.c.l.b16 %v277
      %v544 = vunpack.c.l.b16 %v278
      %v545 = vunpack.c.l.b16 %v279
      %v546 = vunpack.c.l.b16 %v280
      %v547 = vunpack.c.l.b16 %v281
      %v548 = vunpack.c.l.b16 %v282
      %v549 = vunpack.c.l.b16 %v283
      %v550 = vunpack.c.l.b16 %v284
      %v551 = vunpack.c.l.b16 %v285
      %v552 = vunpack.c.l.b16 %v286
      %v553 = vunpack.c.l.b16 %v287
      %v554 = vunpack.c.l.b16 %v288
      %v555 = vunpack.c.l.b16 %v289
      %v556 = vunpack.c.l.b16 %v290
      %v557 = vunpack.c.l.b16 %v291
      %v558 = vunpack.c.l.b16 %v292
      %v559 = vunpack.c.l.b16 %v293
      %v560 = vunpack.c.l.b16 %v294
      %v561 = vunpack.c.l.b16 %v295
      %v562 = vunpack.c.l.b16 %v296
      %v563 = vunpack.c.l.b16 %v297
      %v564 = vunpack.c.l.b16 %v298
      %v565 = vunpack.c.l.b16 %v299
      %v566 = vpack.c.b16 %v439, %v438
      %v567 = vpack.c.b16 %v441, %v440
      %v568 = vpack.c.b16 %v443, %v442
      %v569 = vpack.c.b16 %v445, %v444
      %v570 = vpack.c.b16 %v447, %v446
      %v571 = vpack.c.b16 %v449, %v448
      %v572 = vpack.c.b16 %v451, %v450
      %v573 = vpack.c.b16 %v453, %v452
      %v574 = vpack.c.b16 %v455, %v454
      %v575 = vpack.c.b16 %v457, %v456
      %v576 = vpack.c.b16 %v459, %v458
      %v577 = vpack.c.b16 %v461, %v460
      %v578 = vpack.c.b16 %v463, %v462
      %v579 = vpack.c.b16 %v465, %v464
      %v580 = vpack.c.b16 %v467, %v466
      %v581 = vpack.c.b16 %v469, %v468
      %v582 = vpack.c.b16 %v471, %v470
      %v583 = vpack.c.b16 %v473, %v472
      %v584 = vpack.c.b16 %v475, %v474
      %v585 = vpack.c.b16 %v477, %v476
      %v586 = vpack.c.b16 %v479, %v478
      %v587 = vpack.c.b16 %v481, %v480
      %v588 = vpack.c.b16 %v483, %v482
      %v589 = vpack.c.b16 %v485, %v484
      %v590 = vpack.c.b16 %v487, %v486
      %v591 = vpack.c.b16 %v489, %v488
      %v592 = vpack.c.b16 %v491, %v490
      %v593 = vpack.c.b16 %v493, %v492
      %v594 = vpack.c.b16 %v495, %v494
      %v595 = vpack.c.b16 %v497, %v496
      %v596 = vpack.c.b16 %v499, %v498
      %v597 = vpack.c.b16 %v501, %v500
      %v598 = vpack.c.b16 %v503, %v502
      %v599 = vpack.c.b16 %v505, %v504
      %v600 = vpack.c.b16 %v507, %v506
      %v601 = vpack.c.b16 %v509, %v508
      %v602 = vpack.c.b16 %v511, %v510
      %v603 = vpack.c.b16 %v513, %v512
      %v604 = vpack.c.b16 %v515, %v514
      %v605 = vpack.c.b16 %v517, %v516
      %v606 = vpack.c.b16 %v519, %v518
      %v607 = vpack.c.b16 %v521, %v520
      %v608 = vpack.c.b16 %v523, %v522
      %v609 = vpack.c.b16 %v525, %v524
      %v610 = vpack.c.b16 %v527, %v526
      %v611 = vpack.c.b16 %v529, %v528
      %v612 = vpack.c.b16 %v531, %v530
      %v613 = vpack.c.b16 %v533, %v532
      %v614 = vpack.c.b16 %v535, %v534
      %v615 = vpack.c.b16 %v537, %v536
      %v616 = vpack.c.b16 %v539, %v538
      %v617 = vpack.c.b16 %v541, %v540
      %v618 = vpack.c.b16 %v543, %v542
      %v619 = vpack.c.b16 %v545, %v544
      %v620 = vpack.c.b16 %v547, %v546
      %v621 = vpack.c.b16 %v549, %v548
      %v622 = vpack.c.b16 %v551, %v550
      %v623 = vpack.c.b16 %v553, %v552
      %v624 = vpack.c.b16 %v555, %v554
      %v625 = vpack.c.b16 %v557, %v556
      %v626 = vpack.c.b16 %v559, %v558
      %v627 = vpack.c.b16 %v561, %v560
      %v628 = vpack.c.b16 %v563, %v562
      %v629 = vpack.c.b16 %v565, %v564
      %v636 = vunpack.c.l.b16 %v300
      %v637 = vunpack.c.l.b16 %v301
      %v638 = vunpack.c.l.b16 %v302
      %v639 = vunpack.c.l.b16 %v303
      %v640 = vunpack.c.l.b16 %v304
      %v641 = vunpack.c.l.b16 %v305
      %v642 = vpack.c.b16 %v637, %v636
      %v643 = vpack.c.b16 %v639, %v638
      %v644 = vpack.c.b16 %v641, %v640
      %vm648 = vcmask 392192
      %v650 = vsel %vm648, %v566, 0
      %v653 = vsel %vm648, %v567, 0
      %v656 = vsel %vm648, %v568, 0
      %v659 = vsel %vm648, %v569, 0
      %v662 = vsel %vm648, %v570, 0
      %v665 = vsel %vm648, %v571, 0
      %v668 = vsel %vm648, %v572, 0
      %v671 = vsel %vm648, %v573, 0
      %v674 = vsel %vm648, %v574, 0
      %v677 = vsel %vm648, %v575, 0
      %v680 = vsel %vm648, %v576, 0
      %v683 = vsel %vm648, %v577, 0
      %v686 = vsel %vm648, %v578, 0
      %v689 = vsel %vm648, %v579, 0
      %v692 = vsel %vm648, %v580, 0
      %v695 = vsel %vm648, %v581, 0
      %v698 = vsel %vm648, %v582, 0
      %v701 = vsel %vm648, %v583, 0
      %v704 = vsel %vm648, %v584, 0
      %v707 = vsel %vm648, %v585, 0
      %v710 = vsel %vm648, %v586, 0
      %v713 = vsel %vm648, %v587, 0
      %v716 = vsel %vm648, %v588, 0
      %v719 = vsel %vm648, %v589, 0
      %v722 = vsel %vm648, %v590, 0
      %v725 = vsel %vm648, %v591, 0
      %v728 = vsel %vm648, %v592, 0
      %v731 = vsel %vm648, %v593, 0
      %v734 = vsel %vm648, %v594, 0
      %v737 = vsel %vm648, %v595, 0
      %v740 = vsel %vm648, %v596, 0
      %v743 = vsel %vm648, %v597, 0
      %v746 = vsel %vm648, %v598, 0
      %v749 = vsel %vm648, %v599, 0
      %v752 = vsel %vm648, %v600, 0
      %v755 = vsel %vm648, %v601, 0
      %v758 = vsel %vm648, %v602, 0
      %v761 = vsel %vm648, %v603, 0
      %v764 = vsel %vm648, %v604, 0
      %v767 = vsel %vm648, %v605, 0
      %v770 = vsel %vm648, %v606, 0
      %v773 = vsel %vm648, %v607, 0
      %v776 = vsel %vm648, %v608, 0
      %v779 = vsel %vm648, %v609, 0
      %v782 = vsel %vm648, %v610, 0
      %v785 = vsel %vm648, %v611, 0
      %v788 = vsel %vm648, %v612, 0
      %v791 = vsel %vm648, %v613, 0
      %v794 = vsel %vm648, %v614, 0
      %v797 = vsel %vm648, %v615, 0
      %v800 = vsel %vm648, %v616, 0
      %v803 = vsel %vm648, %v617, 0
      %v806 = vsel %vm648, %v618, 0
      %v809 = vsel %vm648, %v619, 0
      %v812 = vsel %vm648, %v620, 0
      %v815 = vsel %vm648, %v621, 0
      %v818 = vsel %vm648, %v622, 0
      %v821 = vsel %vm648, %v623, 0
      %v824 = vsel %vm648, %v624, 0
      %v827 = vsel %vm648, %v625, 0
      %v830 = vsel %vm648, %v626, 0
      %v833 = vsel %vm648, %v627, 0
      %v836 = vsel %vm648, %v628, 0
      %v839 = vsel %vm648, %v629, 0
      %841 = vmatpush.bf16.msra.mxu0 0
      %842 = vmatpush.bf16.msra.mxu0 0
      %843 = vmatpush.bf16.msra.mxu0 0
      %844 = vmatpush.bf16.msra.mxu0 0
      %845 = vmatpush.bf16.msra.mxu0 0
      %846 = vmatpush.bf16.msra.mxu0 %v644
      %847 = vmatpush.bf16.msra.mxu0 %v643
      %848 = vmatpush.bf16.msra.mxu0 %v642
      %849 = vmatmul.bf16.gmra.mxu0 %v650
      %v850 = vpop.f32.mrf.mxu0
      %v851 = vadd.f32 %v308, %v850
      %v852 = vpop.f32.mrf.mxu0
      %v853 = vadd.f32 %v308, %v852
      %854 = vmatmul.bf16.gmra.mxu0 %v653
      %v855 = vpop.f32.mrf.mxu0
      %v856 = vadd.f32 %v308, %v855
      %v857 = vpop.f32.mrf.mxu0
      %v858 = vadd.f32 %v308, %v857
      %859 = vmatmul.bf16.gmra.mxu0 %v656
      %v860 = vpop.f32.mrf.mxu0
      %v861 = vadd.f32 %v308, %v860
      %v862 = vpop.f32.mrf.mxu0
      %v863 = vadd.f32 %v308, %v862
      %864 = vmatmul.bf16.gmra.mxu0 %v659
      %v865 = vpop.f32.mrf.mxu0
      %v866 = vadd.f32 %v308, %v865
      %v867 = vpop.f32.mrf.mxu0
      %v868 = vadd.f32 %v308, %v867
      %869 = vmatmul.bf16.gmra.mxu0 %v662
      %v870 = vpop.f32.mrf.mxu0
      %v871 = vadd.f32 %v308, %v870
      %v872 = vpop.f32.mrf.mxu0
      %v873 = vadd.f32 %v308, %v872
      %874 = vmatmul.bf16.gmra.mxu0 %v665
      %v875 = vpop.f32.mrf.mxu0
      %v876 = vadd.f32 %v308, %v875
      %v877 = vpop.f32.mrf.mxu0
      %v878 = vadd.f32 %v308, %v877
      %879 = vmatmul.bf16.gmra.mxu0 %v668
      %v880 = vpop.f32.mrf.mxu0
      %v881 = vadd.f32 %v308, %v880
      %v882 = vpop.f32.mrf.mxu0
      %v883 = vadd.f32 %v308, %v882
      %884 = vmatmul.bf16.gmra.mxu0 %v671
      %v885 = vpop.f32.mrf.mxu0
      %v886 = vadd.f32 %v308, %v885
      %v887 = vpop.f32.mrf.mxu0
      %v888 = vadd.f32 %v308, %v887
      %889 = vmatmul.bf16.gmra.mxu0 %v674
      %v890 = vpop.f32.mrf.mxu0
      %v891 = vadd.f32 %v308, %v890
      %v892 = vpop.f32.mrf.mxu0
      %v893 = vadd.f32 %v308, %v892
      %894 = vmatmul.bf16.gmra.mxu0 %v677
      %v895 = vpop.f32.mrf.mxu0
      %v896 = vadd.f32 %v308, %v895
      %v897 = vpop.f32.mrf.mxu0
      %v898 = vadd.f32 %v308, %v897
      %899 = vmatmul.bf16.gmra.mxu0 %v680
      %v900 = vpop.f32.mrf.mxu0
      %v901 = vadd.f32 %v308, %v900
      %v902 = vpop.f32.mrf.mxu0
      %v903 = vadd.f32 %v308, %v902
      %904 = vmatmul.bf16.gmra.mxu0 %v683
      %v905 = vpop.f32.mrf.mxu0
      %v906 = vadd.f32 %v308, %v905
      %v907 = vpop.f32.mrf.mxu0
      %v908 = vadd.f32 %v308, %v907
      %909 = vmatmul.bf16.gmra.mxu0 %v686
      %v910 = vpop.f32.mrf.mxu0
      %v911 = vadd.f32 %v308, %v910
      %v912 = vpop.f32.mrf.mxu0
      %v913 = vadd.f32 %v308, %v912
      %914 = vmatmul.bf16.gmra.mxu0 %v689
      %v915 = vpop.f32.mrf.mxu0
      %v916 = vadd.f32 %v308, %v915
      %v917 = vpop.f32.mrf.mxu0
      %v918 = vadd.f32 %v308, %v917
      %919 = vmatmul.bf16.gmra.mxu0 %v692
      %v920 = vpop.f32.mrf.mxu0
      %v921 = vadd.f32 %v308, %v920
      %v922 = vpop.f32.mrf.mxu0
      %v923 = vadd.f32 %v308, %v922
      %924 = vmatmul.bf16.gmra.mxu0 %v695
      %v925 = vpop.f32.mrf.mxu0
      %v926 = vadd.f32 %v308, %v925
      %v927 = vpop.f32.mrf.mxu0
      %v928 = vadd.f32 %v308, %v927
      %929 = vmatmul.bf16.gmra.mxu0 %v698
      %v930 = vpop.f32.mrf.mxu0
      %v931 = vadd.f32 %v308, %v930
      %v932 = vpop.f32.mrf.mxu0
      %v933 = vadd.f32 %v308, %v932
      %934 = vmatmul.bf16.gmra.mxu0 %v701
      %v935 = vpop.f32.mrf.mxu0
      %v936 = vadd.f32 %v308, %v935
      %v937 = vpop.f32.mrf.mxu0
      %v938 = vadd.f32 %v308, %v937
      %939 = vmatmul.bf16.gmra.mxu0 %v704
      %v940 = vpop.f32.mrf.mxu0
      %v941 = vadd.f32 %v308, %v940
      %v942 = vpop.f32.mrf.mxu0
      %v943 = vadd.f32 %v308, %v942
      %944 = vmatmul.bf16.gmra.mxu0 %v707
      %v945 = vpop.f32.mrf.mxu0
      %v946 = vadd.f32 %v308, %v945
      %v947 = vpop.f32.mrf.mxu0
      %v948 = vadd.f32 %v308, %v947
      %949 = vmatmul.bf16.gmra.mxu0 %v710
      %v950 = vpop.f32.mrf.mxu0
      %v951 = vadd.f32 %v308, %v950
      %v952 = vpop.f32.mrf.mxu0
      %v953 = vadd.f32 %v308, %v952
      %954 = vmatmul.bf16.gmra.mxu0 %v713
      %v955 = vpop.f32.mrf.mxu0
      %v956 = vadd.f32 %v308, %v955
      %v957 = vpop.f32.mrf.mxu0
      %v958 = vadd.f32 %v308, %v957
      %959 = vmatmul.bf16.gmra.mxu0 %v716
      %v960 = vpop.f32.mrf.mxu0
      %v961 = vadd.f32 %v308, %v960
      %v962 = vpop.f32.mrf.mxu0
      %v963 = vadd.f32 %v308, %v962
      %964 = vmatmul.bf16.gmra.mxu0 %v719
      %v965 = vpop.f32.mrf.mxu0
      %v966 = vadd.f32 %v308, %v965
      %v967 = vpop.f32.mrf.mxu0
      %v968 = vadd.f32 %v308, %v967
      %969 = vmatmul.bf16.gmra.mxu0 %v722
      %v970 = vpop.f32.mrf.mxu0
      %v971 = vadd.f32 %v308, %v970
      %v972 = vpop.f32.mrf.mxu0
      %v973 = vadd.f32 %v308, %v972
      %974 = vmatmul.bf16.gmra.mxu0 %v725
      %v975 = vpop.f32.mrf.mxu0
      %v976 = vadd.f32 %v308, %v975
      %v977 = vpop.f32.mrf.mxu0
      %v978 = vadd.f32 %v308, %v977
      %979 = vmatmul.bf16.gmra.mxu0 %v728
      %v980 = vpop.f32.mrf.mxu0
      %v981 = vadd.f32 %v308, %v980
      %v982 = vpop.f32.mrf.mxu0
      %v983 = vadd.f32 %v308, %v982
      %984 = vmatmul.bf16.gmra.mxu0 %v731
      %v985 = vpop.f32.mrf.mxu0
      %v986 = vadd.f32 %v308, %v985
      %v987 = vpop.f32.mrf.mxu0
      %v988 = vadd.f32 %v308, %v987
      %989 = vmatmul.bf16.gmra.mxu0 %v734
      %v990 = vpop.f32.mrf.mxu0
      %v991 = vadd.f32 %v308, %v990
      %v992 = vpop.f32.mrf.mxu0
      %v993 = vadd.f32 %v308, %v992
      %994 = vmatmul.bf16.gmra.mxu0 %v737
      %v995 = vpop.f32.mrf.mxu0
      %v996 = vadd.f32 %v308, %v995
      %v997 = vpop.f32.mrf.mxu0
      %v998 = vadd.f32 %v308, %v997
      %999 = vmatmul.bf16.gmra.mxu0 %v740
      %v1000 = vpop.f32.mrf.mxu0
      %v1001 = vadd.f32 %v308, %v1000
      %v1002 = vpop.f32.mrf.mxu0
      %v1003 = vadd.f32 %v308, %v1002
      %1004 = vmatmul.bf16.gmra.mxu0 %v743
      %v1005 = vpop.f32.mrf.mxu0
      %v1006 = vadd.f32 %v308, %v1005
      %v1007 = vpop.f32.mrf.mxu0
      %v1008 = vadd.f32 %v308, %v1007
      %1009 = vmatmul.bf16.gmra.mxu0 %v746
      %v1010 = vpop.f32.mrf.mxu0
      %v1011 = vadd.f32 %v308, %v1010
      %v1012 = vpop.f32.mrf.mxu0
      %v1013 = vadd.f32 %v308, %v1012
      %1014 = vmatmul.bf16.gmra.mxu0 %v749
      %v1015 = vpop.f32.mrf.mxu0
      %v1016 = vadd.f32 %v308, %v1015
      %v1017 = vpop.f32.mrf.mxu0
      %v1018 = vadd.f32 %v308, %v1017
      %1019 = vmatmul.bf16.gmra.mxu0 %v752
      %v1020 = vpop.f32.mrf.mxu0
      %v1021 = vadd.f32 %v308, %v1020
      %v1022 = vpop.f32.mrf.mxu0
      %v1023 = vadd.f32 %v308, %v1022
      %1024 = vmatmul.bf16.gmra.mxu0 %v755
      %v1025 = vpop.f32.mrf.mxu0
      %v1026 = vadd.f32 %v308, %v1025
      %v1027 = vpop.f32.mrf.mxu0
      %v1028 = vadd.f32 %v308, %v1027
      %1029 = vmatmul.bf16.gmra.mxu0 %v758
      %v1030 = vpop.f32.mrf.mxu0
      %v1031 = vadd.f32 %v308, %v1030
      %v1032 = vpop.f32.mrf.mxu0
      %v1033 = vadd.f32 %v308, %v1032
      %1034 = vmatmul.bf16.gmra.mxu0 %v761
      %v1035 = vpop.f32.mrf.mxu0
      %v1036 = vadd.f32 %v308, %v1035
      %v1037 = vpop.f32.mrf.mxu0
      %v1038 = vadd.f32 %v308, %v1037
      %1039 = vmatmul.bf16.gmra.mxu0 %v764
      %v1040 = vpop.f32.mrf.mxu0
      %v1041 = vadd.f32 %v308, %v1040
      %v1042 = vpop.f32.mrf.mxu0
      %v1043 = vadd.f32 %v308, %v1042
      %1044 = vmatmul.bf16.gmra.mxu0 %v767
      %v1045 = vpop.f32.mrf.mxu0
      %v1046 = vadd.f32 %v308, %v1045
      %v1047 = vpop.f32.mrf.mxu0
      %v1048 = vadd.f32 %v308, %v1047
      %1049 = vmatmul.bf16.gmra.mxu0 %v770
      %v1050 = vpop.f32.mrf.mxu0
      %v1051 = vadd.f32 %v308, %v1050
      %v1052 = vpop.f32.mrf.mxu0
      %v1053 = vadd.f32 %v308, %v1052
      %1054 = vmatmul.bf16.gmra.mxu0 %v773
      %v1055 = vpop.f32.mrf.mxu0
      %v1056 = vadd.f32 %v308, %v1055
      %v1057 = vpop.f32.mrf.mxu0
      %v1058 = vadd.f32 %v308, %v1057
      %1059 = vmatmul.bf16.gmra.mxu0 %v776
      %v1060 = vpop.f32.mrf.mxu0
      %v1061 = vadd.f32 %v308, %v1060
      %v1062 = vpop.f32.mrf.mxu0
      %v1063 = vadd.f32 %v308, %v1062
      %1064 = vmatmul.bf16.gmra.mxu0 %v779
      %v1065 = vpop.f32.mrf.mxu0
      %v1066 = vadd.f32 %v308, %v1065
      %v1067 = vpop.f32.mrf.mxu0
      %v1068 = vadd.f32 %v308, %v1067
      %1069 = vmatmul.bf16.gmra.mxu0 %v782
      %v1070 = vpop.f32.mrf.mxu0
      %v1071 = vadd.f32 %v308, %v1070
      %v1072 = vpop.f32.mrf.mxu0
      %v1073 = vadd.f32 %v308, %v1072
      %1074 = vmatmul.bf16.gmra.mxu0 %v785
      %v1075 = vpop.f32.mrf.mxu0
      %v1076 = vadd.f32 %v308, %v1075
      %v1077 = vpop.f32.mrf.mxu0
      %v1078 = vadd.f32 %v308, %v1077
      %1079 = vmatmul.bf16.gmra.mxu0 %v788
      %v1080 = vpop.f32.mrf.mxu0
      %v1081 = vadd.f32 %v308, %v1080
      %v1082 = vpop.f32.mrf.mxu0
      %v1083 = vadd.f32 %v308, %v1082
      %1084 = vmatmul.bf16.gmra.mxu0 %v791
      %v1085 = vpop.f32.mrf.mxu0
      %v1086 = vadd.f32 %v308, %v1085
      %v1087 = vpop.f32.mrf.mxu0
      %v1088 = vadd.f32 %v308, %v1087
      %1089 = vmatmul.bf16.gmra.mxu0 %v794
      %v1090 = vpop.f32.mrf.mxu0
      %v1091 = vadd.f32 %v308, %v1090
      %v1092 = vpop.f32.mrf.mxu0
      %v1093 = vadd.f32 %v308, %v1092
      %1094 = vmatmul.bf16.gmra.mxu0 %v797
      %v1095 = vpop.f32.mrf.mxu0
      %v1096 = vadd.f32 %v308, %v1095
      %v1097 = vpop.f32.mrf.mxu0
      %v1098 = vadd.f32 %v308, %v1097
      %1099 = vmatmul.bf16.gmra.mxu0 %v800
      %v1100 = vpop.f32.mrf.mxu0
      %v1101 = vadd.f32 %v308, %v1100
      %v1102 = vpop.f32.mrf.mxu0
      %v1103 = vadd.f32 %v308, %v1102
      %1104 = vmatmul.bf16.gmra.mxu0 %v803
      %v1105 = vpop.f32.mrf.mxu0
      %v1106 = vadd.f32 %v308, %v1105
      %v1107 = vpop.f32.mrf.mxu0
      %v1108 = vadd.f32 %v308, %v1107
      %1109 = vmatmul.bf16.gmra.mxu0 %v806
      %v1110 = vpop.f32.mrf.mxu0
      %v1111 = vadd.f32 %v308, %v1110
      %v1112 = vpop.f32.mrf.mxu0
      %v1113 = vadd.f32 %v308, %v1112
      %1114 = vmatmul.bf16.gmra.mxu0 %v809
      %v1115 = vpop.f32.mrf.mxu0
      %v1116 = vadd.f32 %v308, %v1115
      %v1117 = vpop.f32.mrf.mxu0
      %v1118 = vadd.f32 %v308, %v1117
      %1119 = vmatmul.bf16.gmra.mxu0 %v812
      %v1120 = vpop.f32.mrf.mxu0
      %v1121 = vadd.f32 %v308, %v1120
      %v1122 = vpop.f32.mrf.mxu0
      %v1123 = vadd.f32 %v308, %v1122
      %1124 = vmatmul.bf16.gmra.mxu0 %v815
      %v1125 = vpop.f32.mrf.mxu0
      %v1126 = vadd.f32 %v308, %v1125
      %v1127 = vpop.f32.mrf.mxu0
      %v1128 = vadd.f32 %v308, %v1127
      %1129 = vmatmul.bf16.gmra.mxu0 %v818
      %v1130 = vpop.f32.mrf.mxu0
      %v1131 = vadd.f32 %v308, %v1130
      %v1132 = vpop.f32.mrf.mxu0
      %v1133 = vadd.f32 %v308, %v1132
      %1134 = vmatmul.bf16.gmra.mxu0 %v821
      %v1135 = vpop.f32.mrf.mxu0
      %v1136 = vadd.f32 %v308, %v1135
      %v1137 = vpop.f32.mrf.mxu0
      %v1138 = vadd.f32 %v308, %v1137
      %1139 = vmatmul.bf16.gmra.mxu0 %v824
      %v1140 = vpop.f32.mrf.mxu0
      %v1141 = vadd.f32 %v308, %v1140
      %v1142 = vpop.f32.mrf.mxu0
      %v1143 = vadd.f32 %v308, %v1142
      %1144 = vmatmul.bf16.gmra.mxu0 %v827
      %v1145 = vpop.f32.mrf.mxu0
      %v1146 = vadd.f32 %v308, %v1145
      %v1147 = vpop.f32.mrf.mxu0
      %v1148 = vadd.f32 %v308, %v1147
      %1149 = vmatmul.bf16.gmra.mxu0 %v830
      %v1150 = vpop.f32.mrf.mxu0
      %v1151 = vadd.f32 %v308, %v1150
      %v1152 = vpop.f32.mrf.mxu0
      %v1153 = vadd.f32 %v308, %v1152
      %1154 = vmatmul.bf16.gmra.mxu0 %v833
      %v1155 = vpop.f32.mrf.mxu0
      %v1156 = vadd.f32 %v308, %v1155
      %v1157 = vpop.f32.mrf.mxu0
      %v1158 = vadd.f32 %v308, %v1157
      %1159 = vmatmul.bf16.gmra.mxu0 %v836
      %v1160 = vpop.f32.mrf.mxu0
      %v1161 = vadd.f32 %v308, %v1160
      %v1162 = vpop.f32.mrf.mxu0
      %v1163 = vadd.f32 %v308, %v1162
      %1164 = vmatmul.bf16.gmra.mxu0 %v839
      %v1165 = vpop.f32.mrf.mxu0
      %v1166 = vadd.f32 %v308, %v1165
      %v1167 = vpop.f32.mrf.mxu0
      %v1168 = vadd.f32 %v308, %v1167
      %1169 = vdwg.mxu0
      %vm1170 = vcmp.ge.f32.partialorder %v851, 0.0
      %vm1171 = vcmp.ge.f32.partialorder %v853, 0.0
      %vm1172 = vcmp.ge.f32.partialorder %v856, 0.0
      %vm1173 = vcmp.ge.f32.partialorder %v858, 0.0
      %vm1174 = vcmp.ge.f32.partialorder %v861, 0.0
      %vm1175 = vcmp.ge.f32.partialorder %v863, 0.0
      %vm1176 = vcmp.ge.f32.partialorder %v866, 0.0
      %vm1177 = vcmp.ge.f32.partialorder %v868, 0.0
      %vm1178 = vcmp.ge.f32.partialorder %v871, 0.0
      %vm1179 = vcmp.ge.f32.partialorder %v873, 0.0
      %vm1180 = vcmp.ge.f32.partialorder %v876, 0.0
      %vm1181 = vcmp.ge.f32.partialorder %v878, 0.0
      %vm1182 = vcmp.ge.f32.partialorder %v881, 0.0
      %vm1183 = vcmp.ge.f32.partialorder %v883, 0.0
      %vm1184 = vcmp.ge.f32.partialorder %v886, 0.0
      %vm1185 = vcmp.ge.f32.partialorder %v888, 0.0
      %vm1186 = vcmp.ge.f32.partialorder %v891, 0.0
      %vm1187 = vcmp.ge.f32.partialorder %v893, 0.0
      %vm1188 = vcmp.ge.f32.partialorder %v896, 0.0
      %vm1189 = vcmp.ge.f32.partialorder %v898, 0.0
      %vm1190 = vcmp.ge.f32.partialorder %v901, 0.0
      %vm1191 = vcmp.ge.f32.partialorder %v903, 0.0
      %vm1192 = vcmp.ge.f32.partialorder %v906, 0.0
      %vm1193 = vcmp.ge.f32.partialorder %v908, 0.0
      %vm1194 = vcmp.ge.f32.partialorder %v911, 0.0
      %vm1195 = vcmp.ge.f32.partialorder %v913, 0.0
      %vm1196 = vcmp.ge.f32.partialorder %v916, 0.0
      %vm1197 = vcmp.ge.f32.partialorder %v918, 0.0
      %vm1198 = vcmp.ge.f32.partialorder %v921, 0.0
      %vm1199 = vcmp.ge.f32.partialorder %v923, 0.0
      %vm1200 = vcmp.ge.f32.partialorder %v926, 0.0
      %vm1201 = vcmp.ge.f32.partialorder %v928, 0.0
      %vm1202 = vcmp.ge.f32.partialorder %v931, 0.0
      %vm1203 = vcmp.ge.f32.partialorder %v933, 0.0
      %vm1204 = vcmp.ge.f32.partialorder %v936, 0.0
      %vm1205 = vcmp.ge.f32.partialorder %v938, 0.0
      %vm1206 = vcmp.ge.f32.partialorder %v941, 0.0
      %vm1207 = vcmp.ge.f32.partialorder %v943, 0.0
      %vm1208 = vcmp.ge.f32.partialorder %v946, 0.0
      %vm1209 = vcmp.ge.f32.partialorder %v948, 0.0
      %vm1210 = vcmp.ge.f32.partialorder %v951, 0.0
      %vm1211 = vcmp.ge.f32.partialorder %v953, 0.0
      %vm1212 = vcmp.ge.f32.partialorder %v956, 0.0
      %vm1213 = vcmp.ge.f32.partialorder %v958, 0.0
      %vm1214 = vcmp.ge.f32.partialorder %v961, 0.0
      %vm1215 = vcmp.ge.f32.partialorder %v963, 0.0
      %vm1216 = vcmp.ge.f32.partialorder %v966, 0.0
      %vm1217 = vcmp.ge.f32.partialorder %v968, 0.0
      %vm1218 = vcmp.ge.f32.partialorder %v971, 0.0
      %vm1219 = vcmp.ge.f32.partialorder %v973, 0.0
      %vm1220 = vcmp.ge.f32.partialorder %v976, 0.0
      %vm1221 = vcmp.ge.f32.partialorder %v978, 0.0
      %vm1222 = vcmp.ge.f32.partialorder %v981, 0.0
      %vm1223 = vcmp.ge.f32.partialorder %v983, 0.0
      %vm1224 = vcmp.ge.f32.partialorder %v986, 0.0
      %vm1225 = vcmp.ge.f32.partialorder %v988, 0.0
      %vm1226 = vcmp.ge.f32.partialorder %v991, 0.0
      %vm1227 = vcmp.ge.f32.partialorder %v993, 0.0
      %vm1228 = vcmp.ge.f32.partialorder %v996, 0.0
      %vm1229 = vcmp.ge.f32.partialorder %v998, 0.0
      %vm1230 = vcmp.ge.f32.partialorder %v1001, 0.0
      %vm1231 = vcmp.ge.f32.partialorder %v1003, 0.0
      %vm1232 = vcmp.ge.f32.partialorder %v1006, 0.0
      %vm1233 = vcmp.ge.f32.partialorder %v1008, 0.0
      %vm1234 = vcmp.ge.f32.partialorder %v1011, 0.0
      %vm1235 = vcmp.ge.f32.partialorder %v1013, 0.0
      %vm1236 = vcmp.ge.f32.partialorder %v1016, 0.0
      %vm1237 = vcmp.ge.f32.partialorder %v1018, 0.0
      %vm1238 = vcmp.ge.f32.partialorder %v1021, 0.0
      %vm1239 = vcmp.ge.f32.partialorder %v1023, 0.0
      %vm1240 = vcmp.ge.f32.partialorder %v1026, 0.0
      %vm1241 = vcmp.ge.f32.partialorder %v1028, 0.0
      %vm1242 = vcmp.ge.f32.partialorder %v1031, 0.0
      %vm1243 = vcmp.ge.f32.partialorder %v1033, 0.0
      %vm1244 = vcmp.ge.f32.partialorder %v1036, 0.0
      %vm1245 = vcmp.ge.f32.partialorder %v1038, 0.0
      %vm1246 = vcmp.ge.f32.partialorder %v1041, 0.0
      %vm1247 = vcmp.ge.f32.partialorder %v1043, 0.0
      %vm1248 = vcmp.ge.f32.partialorder %v1046, 0.0
      %vm1249 = vcmp.ge.f32.partialorder %v1048, 0.0
      %vm1250 = vcmp.ge.f32.partialorder %v1051, 0.0
      %vm1251 = vcmp.ge.f32.partialorder %v1053, 0.0
      %vm1252 = vcmp.ge.f32.partialorder %v1056, 0.0
      %vm1253 = vcmp.ge.f32.partialorder %v1058, 0.0
      %vm1254 = vcmp.ge.f32.partialorder %v1061, 0.0
      %vm1255 = vcmp.ge.f32.partialorder %v1063, 0.0
      %vm1256 = vcmp.ge.f32.partialorder %v1066, 0.0
      %vm1257 = vcmp.ge.f32.partialorder %v1068, 0.0
      %vm1258 = vcmp.ge.f32.partialorder %v1071, 0.0
      %vm1259 = vcmp.ge.f32.partialorder %v1073, 0.0
      %vm1260 = vcmp.ge.f32.partialorder %v1076, 0.0
      %vm1261 = vcmp.ge.f32.partialorder %v1078, 0.0
      %vm1262 = vcmp.ge.f32.partialorder %v1081, 0.0
      %vm1263 = vcmp.ge.f32.partialorder %v1083, 0.0
      %vm1264 = vcmp.ge.f32.partialorder %v1086, 0.0
      %vm1265 = vcmp.ge.f32.partialorder %v1088, 0.0
      %vm1266 = vcmp.ge.f32.partialorder %v1091, 0.0
      %vm1267 = vcmp.ge.f32.partialorder %v1093, 0.0
      %vm1268 = vcmp.ge.f32.partialorder %v1096, 0.0
      %vm1269 = vcmp.ge.f32.partialorder %v1098, 0.0
      %vm1270 = vcmp.ge.f32.partialorder %v1101, 0.0
      %vm1271 = vcmp.ge.f32.partialorder %v1103, 0.0
      %vm1272 = vcmp.ge.f32.partialorder %v1106, 0.0
      %vm1273 = vcmp.ge.f32.partialorder %v1108, 0.0
      %vm1274 = vcmp.ge.f32.partialorder %v1111, 0.0
      %vm1275 = vcmp.ge.f32.partialorder %v1113, 0.0
      %vm1276 = vcmp.ge.f32.partialorder %v1116, 0.0
      %vm1277 = vcmp.ge.f32.partialorder %v1118, 0.0
      %vm1278 = vcmp.ge.f32.partialorder %v1121, 0.0
      %vm1279 = vcmp.ge.f32.partialorder %v1123, 0.0
      %vm1280 = vcmp.ge.f32.partialorder %v1126, 0.0
      %vm1281 = vcmp.ge.f32.partialorder %v1128, 0.0
      %vm1282 = vcmp.ge.f32.partialorder %v1131, 0.0
      %vm1283 = vcmp.ge.f32.partialorder %v1133, 0.0
      %vm1284 = vcmp.ge.f32.partialorder %v1136, 0.0
      %vm1285 = vcmp.ge.f32.partialorder %v1138, 0.0
      %vm1286 = vcmp.ge.f32.partialorder %v1141, 0.0
      %vm1287 = vcmp.ge.f32.partialorder %v1143, 0.0
      %vm1288 = vcmp.ge.f32.partialorder %v1146, 0.0
      %vm1289 = vcmp.ge.f32.partialorder %v1148, 0.0
      %vm1290 = vcmp.ge.f32.partialorder %v1151, 0.0
      %vm1291 = vcmp.ge.f32.partialorder %v1153, 0.0
      %vm1292 = vcmp.ge.f32.partialorder %v1156, 0.0
      %vm1293 = vcmp.ge.f32.partialorder %v1158, 0.0
      %vm1294 = vcmp.ge.f32.partialorder %v1161, 0.0
      %vm1295 = vcmp.ge.f32.partialorder %v1163, 0.0
      %vm1296 = vcmp.ge.f32.partialorder %v1166, 0.0
      %vm1297 = vcmp.ge.f32.partialorder %v1168, 0.0
      %v1298 = vmul.f32 %v851, 0.2
      %v1299 = vmul.f32 %v853, 0.2
      %v1300 = vmul.f32 %v856, 0.2
      %v1301 = vmul.f32 %v858, 0.2
      %v1302 = vmul.f32 %v861, 0.2
      %v1303 = vmul.f32 %v863, 0.2
      %v1304 = vmul.f32 %v866, 0.2
      %v1305 = vmul.f32 %v868, 0.2
      %v1306 = vmul.f32 %v871, 0.2
      %v1307 = vmul.f32 %v873, 0.2
      %v1308 = vmul.f32 %v876, 0.2
      %v1309 = vmul.f32 %v878, 0.2
      %v1310 = vmul.f32 %v881, 0.2
      %v1311 = vmul.f32 %v883, 0.2
      %v1312 = vmul.f32 %v886, 0.2
      %v1313 = vmul.f32 %v888, 0.2
      %v1314 = vmul.f32 %v891, 0.2
      %v1315 = vmul.f32 %v893, 0.2
      %v1316 = vmul.f32 %v896, 0.2
      %v1317 = vmul.f32 %v898, 0.2
      %v1318 = vmul.f32 %v901, 0.2
      %v1319 = vmul.f32 %v903, 0.2
      %v1320 = vmul.f32 %v906, 0.2
      %v1321 = vmul.f32 %v908, 0.2
      %v1322 = vmul.f32 %v911, 0.2
      %v1323 = vmul.f32 %v913, 0.2
      %v1324 = vmul.f32 %v916, 0.2
      %v1325 = vmul.f32 %v918, 0.2
      %v1326 = vmul.f32 %v921, 0.2
      %v1327 = vmul.f32 %v923, 0.2
      %v1328 = vmul.f32 %v926, 0.2
      %v1329 = vmul.f32 %v928, 0.2
      %v1330 = vmul.f32 %v931, 0.2
      %v1331 = vmul.f32 %v933, 0.2
      %v1332 = vmul.f32 %v936, 0.2
      %v1333 = vmul.f32 %v938, 0.2
      %v1334 = vmul.f32 %v941, 0.2
      %v1335 = vmul.f32 %v943, 0.2
      %v1336 = vmul.f32 %v946, 0.2
      %v1337 = vmul.f32 %v948, 0.2
      %v1338 = vmul.f32 %v951, 0.2
      %v1339 = vmul.f32 %v953, 0.2
      %v1340 = vmul.f32 %v956, 0.2
      %v1341 = vmul.f32 %v958, 0.2
      %v1342 = vmul.f32 %v961, 0.2
      %v1343 = vmul.f32 %v963, 0.2
      %v1344 = vmul.f32 %v966, 0.2
      %v1345 = vmul.f32 %v968, 0.2
      %v1346 = vmul.f32 %v971, 0.2
      %v1347 = vmul.f32 %v973, 0.2
      %v1348 = vmul.f32 %v976, 0.2
      %v1349 = vmul.f32 %v978, 0.2
      %v1350 = vmul.f32 %v981, 0.2
      %v1351 = vmul.f32 %v983, 0.2
      %v1352 = vmul.f32 %v986, 0.2
      %v1353 = vmul.f32 %v988, 0.2
      %v1354 = vmul.f32 %v991, 0.2
      %v1355 = vmul.f32 %v993, 0.2
      %v1356 = vmul.f32 %v996, 0.2
      %v1357 = vmul.f32 %v998, 0.2
      %v1358 = vmul.f32 %v1001, 0.2
      %v1359 = vmul.f32 %v1003, 0.2
      %v1360 = vmul.f32 %v1006, 0.2
      %v1361 = vmul.f32 %v1008, 0.2
      %v1362 = vmul.f32 %v1011, 0.2
      %v1363 = vmul.f32 %v1013, 0.2
      %v1364 = vmul.f32 %v1016, 0.2
      %v1365 = vmul.f32 %v1018, 0.2
      %v1366 = vmul.f32 %v1021, 0.2
      %v1367 = vmul.f32 %v1023, 0.2
      %v1368 = vmul.f32 %v1026, 0.2
      %v1369 = vmul.f32 %v1028, 0.2
      %v1370 = vmul.f32 %v1031, 0.2
      %v1371 = vmul.f32 %v1033, 0.2
      %v1372 = vmul.f32 %v1036, 0.2
      %v1373 = vmul.f32 %v1038, 0.2
      %v1374 = vmul.f32 %v1041, 0.2
      %v1375 = vmul.f32 %v1043, 0.2
      %v1376 = vmul.f32 %v1046, 0.2
      %v1377 = vmul.f32 %v1048, 0.2
      %v1378 = vmul.f32 %v1051, 0.2
      %v1379 = vmul.f32 %v1053, 0.2
      %v1380 = vmul.f32 %v1056, 0.2
      %v1381 = vmul.f32 %v1058, 0.2
      %v1382 = vmul.f32 %v1061, 0.2
      %v1383 = vmul.f32 %v1063, 0.2
      %v1384 = vmul.f32 %v1066, 0.2
      %v1385 = vmul.f32 %v1068, 0.2
      %v1386 = vmul.f32 %v1071, 0.2
      %v1387 = vmul.f32 %v1073, 0.2
      %v1388 = vmul.f32 %v1076, 0.2
      %v1389 = vmul.f32 %v1078, 0.2
      %v1390 = vmul.f32 %v1081, 0.2
      %v1391 = vmul.f32 %v1083, 0.2
      %v1392 = vmul.f32 %v1086, 0.2
      %v1393 = vmul.f32 %v1088, 0.2
      %v1394 = vmul.f32 %v1091, 0.2
      %v1395 = vmul.f32 %v1093, 0.2
      %v1396 = vmul.f32 %v1096, 0.2
      %v1397 = vmul.f32 %v1098, 0.2
      %v1398 = vmul.f32 %v1101, 0.2
      %v1399 = vmul.f32 %v1103, 0.2
      %v1400 = vmul.f32 %v1106, 0.2
      %v1401 = vmul.f32 %v1108, 0.2
      %v1402 = vmul.f32 %v1111, 0.2
      %v1403 = vmul.f32 %v1113, 0.2
      %v1404 = vmul.f32 %v1116, 0.2
      %v1405 = vmul.f32 %v1118, 0.2
      %v1406 = vmul.f32 %v1121, 0.2
      %v1407 = vmul.f32 %v1123, 0.2
      %v1408 = vmul.f32 %v1126, 0.2
      %v1409 = vmul.f32 %v1128, 0.2
      %v1410 = vmul.f32 %v1131, 0.2
      %v1411 = vmul.f32 %v1133, 0.2
      %v1412 = vmul.f32 %v1136, 0.2
      %v1413 = vmul.f32 %v1138, 0.2
      %v1414 = vmul.f32 %v1141, 0.2
      %v1415 = vmul.f32 %v1143, 0.2
      %v1416 = vmul.f32 %v1146, 0.2
      %v1417 = vmul.f32 %v1148, 0.2
      %v1418 = vmul.f32 %v1151, 0.2
      %v1419 = vmul.f32 %v1153, 0.2
      %v1420 = vmul.f32 %v1156, 0.2
      %v1421 = vmul.f32 %v1158, 0.2
      %v1422 = vmul.f32 %v1161, 0.2
      %v1423 = vmul.f32 %v1163, 0.2
      %v1424 = vmul.f32 %v1166, 0.2
      %v1425 = vmul.f32 %v1168, 0.2
      %v1426 = vsel %vm1170, %v851, %v1298
      %v1427 = vsel %vm1171, %v853, %v1299
      %v1428 = vsel %vm1172, %v856, %v1300
      %v1429 = vsel %vm1173, %v858, %v1301
      %v1430 = vsel %vm1174, %v861, %v1302
      %v1431 = vsel %vm1175, %v863, %v1303
      %v1432 = vsel %vm1176, %v866, %v1304
      %v1433 = vsel %vm1177, %v868, %v1305
      %v1434 = vsel %vm1178, %v871, %v1306
      %v1435 = vsel %vm1179, %v873, %v1307
      %v1436 = vsel %vm1180, %v876, %v1308
      %v1437 = vsel %vm1181, %v878, %v1309
      %v1438 = vsel %vm1182, %v881, %v1310
      %v1439 = vsel %vm1183, %v883, %v1311
      %v1440 = vsel %vm1184, %v886, %v1312
      %v1441 = vsel %vm1185, %v888, %v1313
      %v1442 = vsel %vm1186, %v891, %v1314
      %v1443 = vsel %vm1187, %v893, %v1315
      %v1444 = vsel %vm1188, %v896, %v1316
      %v1445 = vsel %vm1189, %v898, %v1317
      %v1446 = vsel %vm1190, %v901, %v1318
      %v1447 = vsel %vm1191, %v903, %v1319
      %v1448 = vsel %vm1192, %v906, %v1320
      %v1449 = vsel %vm1193, %v908, %v1321
      %v1450 = vsel %vm1194, %v911, %v1322
      %v1451 = vsel %vm1195, %v913, %v1323
      %v1452 = vsel %vm1196, %v916, %v1324
      %v1453 = vsel %vm1197, %v918, %v1325
      %v1454 = vsel %vm1198, %v921, %v1326
      %v1455 = vsel %vm1199, %v923, %v1327
      %v1456 = vsel %vm1200, %v926, %v1328
      %v1457 = vsel %vm1201, %v928, %v1329
      %v1458 = vsel %vm1202, %v931, %v1330
      %v1459 = vsel %vm1203, %v933, %v1331
      %v1460 = vsel %vm1204, %v936, %v1332
      %v1461 = vsel %vm1205, %v938, %v1333
      %v1462 = vsel %vm1206, %v941, %v1334
      %v1463 = vsel %vm1207, %v943, %v1335
      %v1464 = vsel %vm1208, %v946, %v1336
      %v1465 = vsel %vm1209, %v948, %v1337
      %v1466 = vsel %vm1210, %v951, %v1338
      %v1467 = vsel %vm1211, %v953, %v1339
      %v1468 = vsel %vm1212, %v956, %v1340
      %v1469 = vsel %vm1213, %v958, %v1341
      %v1470 = vsel %vm1214, %v961, %v1342
      %v1471 = vsel %vm1215, %v963, %v1343
      %v1472 = vsel %vm1216, %v966, %v1344
      %v1473 = vsel %vm1217, %v968, %v1345
      %v1474 = vsel %vm1218, %v971, %v1346
      %v1475 = vsel %vm1219, %v973, %v1347
      %v1476 = vsel %vm1220, %v976, %v1348
      %v1477 = vsel %vm1221, %v978, %v1349
      %v1478 = vsel %vm1222, %v981, %v1350
      %v1479 = vsel %vm1223, %v983, %v1351
      %v1480 = vsel %vm1224, %v986, %v1352
      %v1481 = vsel %vm1225, %v988, %v1353
      %v1482 = vsel %vm1226, %v991, %v1354
      %v1483 = vsel %vm1227, %v993, %v1355
      %v1484 = vsel %vm1228, %v996, %v1356
      %v1485 = vsel %vm1229, %v998, %v1357
      %v1486 = vsel %vm1230, %v1001, %v1358
      %v1487 = vsel %vm1231, %v1003, %v1359
      %v1488 = vsel %vm1232, %v1006, %v1360
      %v1489 = vsel %vm1233, %v1008, %v1361
      %v1490 = vsel %vm1234, %v1011, %v1362
      %v1491 = vsel %vm1235, %v1013, %v1363
      %v1492 = vsel %vm1236, %v1016, %v1364
      %v1493 = vsel %vm1237, %v1018, %v1365
      %v1494 = vsel %vm1238, %v1021, %v1366
      %v1495 = vsel %vm1239, %v1023, %v1367
      %v1496 = vsel %vm1240, %v1026, %v1368
      %v1497 = vsel %vm1241, %v1028, %v1369
      %v1498 = vsel %vm1242, %v1031, %v1370
      %v1499 = vsel %vm1243, %v1033, %v1371
      %v1500 = vsel %vm1244, %v1036, %v1372
      %v1501 = vsel %vm1245, %v1038, %v1373
      %v1502 = vsel %vm1246, %v1041, %v1374
      %v1503 = vsel %vm1247, %v1043, %v1375
      %v1504 = vsel %vm1248, %v1046, %v1376
      %v1505 = vsel %vm1249, %v1048, %v1377
      %v1506 = vsel %vm1250, %v1051, %v1378
      %v1507 = vsel %vm1251, %v1053, %v1379
      %v1508 = vsel %vm1252, %v1056, %v1380
      %v1509 = vsel %vm1253, %v1058, %v1381
      %v1510 = vsel %vm1254, %v1061, %v1382
      %v1511 = vsel %vm1255, %v1063, %v1383
      %v1512 = vsel %vm1256, %v1066, %v1384
      %v1513 = vsel %vm1257, %v1068, %v1385
      %v1514 = vsel %vm1258, %v1071, %v1386
      %v1515 = vsel %vm1259, %v1073, %v1387
      %v1516 = vsel %vm1260, %v1076, %v1388
      %v1517 = vsel %vm1261, %v1078, %v1389
      %v1518 = vsel %vm1262, %v1081, %v1390
      %v1519 = vsel %vm1263, %v1083, %v1391
      %v1520 = vsel %vm1264, %v1086, %v1392
      %v1521 = vsel %vm1265, %v1088, %v1393
      %v1522 = vsel %vm1266, %v1091, %v1394
      %v1523 = vsel %vm1267, %v1093, %v1395
      %v1524 = vsel %vm1268, %v1096, %v1396
      %v1525 = vsel %vm1269, %v1098, %v1397
      %v1526 = vsel %vm1270, %v1101, %v1398
      %v1527 = vsel %vm1271, %v1103, %v1399
      %v1528 = vsel %vm1272, %v1106, %v1400
      %v1529 = vsel %vm1273, %v1108, %v1401
      %v1530 = vsel %vm1274, %v1111, %v1402
      %v1531 = vsel %vm1275, %v1113, %v1403
      %v1532 = vsel %vm1276, %v1116, %v1404
      %v1533 = vsel %vm1277, %v1118, %v1405
      %v1534 = vsel %vm1278, %v1121, %v1406
      %v1535 = vsel %vm1279, %v1123, %v1407
      %v1536 = vsel %vm1280, %v1126, %v1408
      %v1537 = vsel %vm1281, %v1128, %v1409
      %v1538 = vsel %vm1282, %v1131, %v1410
      %v1539 = vsel %vm1283, %v1133, %v1411
      %v1540 = vsel %vm1284, %v1136, %v1412
      %v1541 = vsel %vm1285, %v1138, %v1413
      %v1542 = vsel %vm1286, %v1141, %v1414
      %v1543 = vsel %vm1287, %v1143, %v1415
      %v1544 = vsel %vm1288, %v1146, %v1416
      %v1545 = vsel %vm1289, %v1148, %v1417
      %v1546 = vsel %vm1290, %v1151, %v1418
      %v1547 = vsel %vm1291, %v1153, %v1419
      %v1548 = vsel %vm1292, %v1156, %v1420
      %v1549 = vsel %vm1293, %v1158, %v1421
      %v1550 = vsel %vm1294, %v1161, %v1422
      %v1551 = vsel %vm1295, %v1163, %v1423
      %v1552 = vsel %vm1296, %v1166, %v1424
      %v1553 = vsel %vm1297, %v1168, %v1425
      %1554 = vxpose.xlu0.b32.start [1/16] %v1426, 128
      %1555 = vxpose.xlu0.b32.cont [2/16] %v1427, 128
      %1556 = vxpose.xlu0.b32.cont [3/16] %v1428, 128
      %1557 = vxpose.xlu0.b32.cont [4/16] %v1429, 128
      %1558 = vxpose.xlu0.b32.cont [5/16] %v1430, 128
      %1559 = vxpose.xlu0.b32.cont [6/16] %v1431, 128
      %1560 = vxpose.xlu0.b32.cont [7/16] %v1432, 128
      %1561 = vxpose.xlu0.b32.cont [8/16] %v1433, 128
      %1562 = vxpose.xlu0.b32.cont [9/16] %v1434, 128
      %1563 = vxpose.xlu0.b32.cont [10/16] %v1435, 128
      %1564 = vxpose.xlu0.b32.cont [11/16] %v1436, 128
      %1565 = vxpose.xlu0.b32.cont [12/16] %v1437, 128
      %1566 = vxpose.xlu0.b32.cont [13/16] %v1438, 128
      %1567 = vxpose.xlu0.b32.cont [14/16] %v1439, 128
      %1568 = vxpose.xlu0.b32.cont [15/16] %v1440, 128
      %1569 = vxpose.xlu0.b32.end [16/16] %v1441, 128
      %v1570 = vpop.trf.xlu0
      %v1571 = vpop.trf.xlu0
      %v1572 = vpop.trf.xlu0
      %v1573 = vpop.trf.xlu0
      %v1574 = vpop.trf.xlu0
      %v1575 = vpop.trf.xlu0
      %v1576 = vpop.trf.xlu0
      %v1577 = vpop.trf.xlu0
      %v1578 = vpop.trf.xlu0
      %v1579 = vpop.trf.xlu0
      %v1580 = vpop.trf.xlu0
      %v1581 = vpop.trf.xlu0
      %v1582 = vpop.trf.xlu0
      %v1583 = vpop.trf.xlu0
      %v1584 = vpop.trf.xlu0
      %v1585 = vpop.trf.xlu0
      %1586 = vxpose.xlu0.b32.start [1/16] %v1442, 128
      %1587 = vxpose.xlu0.b32.cont [2/16] %v1443, 128
      %1588 = vxpose.xlu0.b32.cont [3/16] %v1444, 128
      %1589 = vxpose.xlu0.b32.cont [4/16] %v1445, 128
      %1590 = vxpose.xlu0.b32.cont [5/16] %v1446, 128
      %1591 = vxpose.xlu0.b32.cont [6/16] %v1447, 128
      %1592 = vxpose.xlu0.b32.cont [7/16] %v1448, 128
      %1593 = vxpose.xlu0.b32.cont [8/16] %v1449, 128
      %1594 = vxpose.xlu0.b32.cont [9/16] %v1450, 128
      %1595 = vxpose.xlu0.b32.cont [10/16] %v1451, 128
      %1596 = vxpose.xlu0.b32.cont [11/16] %v1452, 128
      %1597 = vxpose.xlu0.b32.cont [12/16] %v1453, 128
      %1598 = vxpose.xlu0.b32.cont [13/16] %v1454, 128
      %1599 = vxpose.xlu0.b32.cont [14/16] %v1455, 128
      %1600 = vxpose.xlu0.b32.cont [15/16] %v1456, 128
      %1601 = vxpose.xlu0.b32.end [16/16] %v1457, 128
      %v1602 = vpop.trf.xlu0
      %v1603 = vpop.trf.xlu0
      %v1604 = vpop.trf.xlu0
      %v1605 = vpop.trf.xlu0
      %v1606 = vpop.trf.xlu0
      %v1607 = vpop.trf.xlu0
      %v1608 = vpop.trf.xlu0
      %v1609 = vpop.trf.xlu0
      %v1610 = vpop.trf.xlu0
      %v1611 = vpop.trf.xlu0
      %v1612 = vpop.trf.xlu0
      %v1613 = vpop.trf.xlu0
      %v1614 = vpop.trf.xlu0
      %v1615 = vpop.trf.xlu0
      %v1616 = vpop.trf.xlu0
      %v1617 = vpop.trf.xlu0
      %1618 = vxpose.xlu0.b32.start [1/16] %v1458, 128
      %1619 = vxpose.xlu0.b32.cont [2/16] %v1459, 128
      %1620 = vxpose.xlu0.b32.cont [3/16] %v1460, 128
      %1621 = vxpose.xlu0.b32.cont [4/16] %v1461, 128
      %1622 = vxpose.xlu0.b32.cont [5/16] %v1462, 128
      %1623 = vxpose.xlu0.b32.cont [6/16] %v1463, 128
      %1624 = vxpose.xlu0.b32.cont [7/16] %v1464, 128
      %1625 = vxpose.xlu0.b32.cont [8/16] %v1465, 128
      %1626 = vxpose.xlu0.b32.cont [9/16] %v1466, 128
      %1627 = vxpose.xlu0.b32.cont [10/16] %v1467, 128
      %1628 = vxpose.xlu0.b32.cont [11/16] %v1468, 128
      %1629 = vxpose.xlu0.b32.cont [12/16] %v1469, 128
      %1630 = vxpose.xlu0.b32.cont [13/16] %v1470, 128
      %1631 = vxpose.xlu0.b32.cont [14/16] %v1471, 128
      %1632 = vxpose.xlu0.b32.cont [15/16] %v1472, 128
      %1633 = vxpose.xlu0.b32.end [16/16] %v1473, 128
      %v1634 = vpop.trf.xlu0
      %v1635 = vpop.trf.xlu0
      %v1636 = vpop.trf.xlu0
      %v1637 = vpop.trf.xlu0
      %v1638 = vpop.trf.xlu0
      %v1639 = vpop.trf.xlu0
      %v1640 = vpop.trf.xlu0
      %v1641 = vpop.trf.xlu0
      %v1642 = vpop.trf.xlu0
      %v1643 = vpop.trf.xlu0
      %v1644 = vpop.trf.xlu0
      %v1645 = vpop.trf.xlu0
      %v1646 = vpop.trf.xlu0
      %v1647 = vpop.trf.xlu0
      %v1648 = vpop.trf.xlu0
      %v1649 = vpop.trf.xlu0
      %1650 = vxpose.xlu0.b32.start [1/16] %v1474, 128
      %1651 = vxpose.xlu0.b32.cont [2/16] %v1475, 128
      %1652 = vxpose.xlu0.b32.cont [3/16] %v1476, 128
      %1653 = vxpose.xlu0.b32.cont [4/16] %v1477, 128
      %1654 = vxpose.xlu0.b32.cont [5/16] %v1478, 128
      %1655 = vxpose.xlu0.b32.cont [6/16] %v1479, 128
      %1656 = vxpose.xlu0.b32.cont [7/16] %v1480, 128
      %1657 = vxpose.xlu0.b32.cont [8/16] %v1481, 128
      %1658 = vxpose.xlu0.b32.cont [9/16] %v1482, 128
      %1659 = vxpose.xlu0.b32.cont [10/16] %v1483, 128
      %1660 = vxpose.xlu0.b32.cont [11/16] %v1484, 128
      %1661 = vxpose.xlu0.b32.cont [12/16] %v1485, 128
      %1662 = vxpose.xlu0.b32.cont [13/16] %v1486, 128
      %1663 = vxpose.xlu0.b32.cont [14/16] %v1487, 128
      %1664 = vxpose.xlu0.b32.cont [15/16] %v1488, 128
      %1665 = vxpose.xlu0.b32.end [16/16] %v1489, 128
      %v1666 = vpop.trf.xlu0
      %v1667 = vpop.trf.xlu0
      %v1668 = vpop.trf.xlu0
      %v1669 = vpop.trf.xlu0
      %v1670 = vpop.trf.xlu0
      %v1671 = vpop.trf.xlu0
      %v1672 = vpop.trf.xlu0
      %v1673 = vpop.trf.xlu0
      %v1674 = vpop.trf.xlu0
      %v1675 = vpop.trf.xlu0
      %v1676 = vpop.trf.xlu0
      %v1677 = vpop.trf.xlu0
      %v1678 = vpop.trf.xlu0
      %v1679 = vpop.trf.xlu0
      %v1680 = vpop.trf.xlu0
      %v1681 = vpop.trf.xlu0
      %1682 = vxpose.xlu0.b32.start [1/16] %v1490, 128
      %1683 = vxpose.xlu0.b32.cont [2/16] %v1491, 128
      %1684 = vxpose.xlu0.b32.cont [3/16] %v1492, 128
      %1685 = vxpose.xlu0.b32.cont [4/16] %v1493, 128
      %1686 = vxpose.xlu0.b32.cont [5/16] %v1494, 128
      %1687 = vxpose.xlu0.b32.cont [6/16] %v1495, 128
      %1688 = vxpose.xlu0.b32.cont [7/16] %v1496, 128
      %1689 = vxpose.xlu0.b32.cont [8/16] %v1497, 128
      %1690 = vxpose.xlu0.b32.cont [9/16] %v1498, 128
      %1691 = vxpose.xlu0.b32.cont [10/16] %v1499, 128
      %1692 = vxpose.xlu0.b32.cont [11/16] %v1500, 128
      %1693 = vxpose.xlu0.b32.cont [12/16] %v1501, 128
      %1694 = vxpose.xlu0.b32.cont [13/16] %v1502, 128
      %1695 = vxpose.xlu0.b32.cont [14/16] %v1503, 128
      %1696 = vxpose.xlu0.b32.cont [15/16] %v1504, 128
      %1697 = vxpose.xlu0.b32.end [16/16] %v1505, 128
      %v1698 = vpop.trf.xlu0
      %v1699 = vpop.trf.xlu0
      %v1700 = vpop.trf.xlu0
      %v1701 = vpop.trf.xlu0
      %v1702 = vpop.trf.xlu0
      %v1703 = vpop.trf.xlu0
      %v1704 = vpop.trf.xlu0
      %v1705 = vpop.trf.xlu0
      %v1706 = vpop.trf.xlu0
      %v1707 = vpop.trf.xlu0
      %v1708 = vpop.trf.xlu0
      %v1709 = vpop.trf.xlu0
      %v1710 = vpop.trf.xlu0
      %v1711 = vpop.trf.xlu0
      %v1712 = vpop.trf.xlu0
      %v1713 = vpop.trf.xlu0
      %1714 = vxpose.xlu0.b32.start [1/16] %v1506, 128
      %1715 = vxpose.xlu0.b32.cont [2/16] %v1507, 128
      %1716 = vxpose.xlu0.b32.cont [3/16] %v1508, 128
      %1717 = vxpose.xlu0.b32.cont [4/16] %v1509, 128
      %1718 = vxpose.xlu0.b32.cont [5/16] %v1510, 128
      %1719 = vxpose.xlu0.b32.cont [6/16] %v1511, 128
      %1720 = vxpose.xlu0.b32.cont [7/16] %v1512, 128
      %1721 = vxpose.xlu0.b32.cont [8/16] %v1513, 128
      %1722 = vxpose.xlu0.b32.cont [9/16] %v1514, 128
      %1723 = vxpose.xlu0.b32.cont [10/16] %v1515, 128
      %1724 = vxpose.xlu0.b32.cont [11/16] %v1516, 128
      %1725 = vxpose.xlu0.b32.cont [12/16] %v1517, 128
      %1726 = vxpose.xlu0.b32.cont [13/16] %v1518, 128
      %1727 = vxpose.xlu0.b32.cont [14/16] %v1519, 128
      %1728 = vxpose.xlu0.b32.cont [15/16] %v1520, 128
      %1729 = vxpose.xlu0.b32.end [16/16] %v1521, 128
      %v1730 = vpop.trf.xlu0
      %v1731 = vpop.trf.xlu0
      %v1732 = vpop.trf.xlu0
      %v1733 = vpop.trf.xlu0
      %v1734 = vpop.trf.xlu0
      %v1735 = vpop.trf.xlu0
      %v1736 = vpop.trf.xlu0
      %v1737 = vpop.trf.xlu0
      %v1738 = vpop.trf.xlu0
      %v1739 = vpop.trf.xlu0
      %v1740 = vpop.trf.xlu0
      %v1741 = vpop.trf.xlu0
      %v1742 = vpop.trf.xlu0
      %v1743 = vpop.trf.xlu0
      %v1744 = vpop.trf.xlu0
      %v1745 = vpop.trf.xlu0
      %1746 = vxpose.xlu0.b32.start [1/16] %v1522, 128
      %1747 = vxpose.xlu0.b32.cont [2/16] %v1523, 128
      %1748 = vxpose.xlu0.b32.cont [3/16] %v1524, 128
      %1749 = vxpose.xlu0.b32.cont [4/16] %v1525, 128
      %1750 = vxpose.xlu0.b32.cont [5/16] %v1526, 128
      %1751 = vxpose.xlu0.b32.cont [6/16] %v1527, 128
      %1752 = vxpose.xlu0.b32.cont [7/16] %v1528, 128
      %1753 = vxpose.xlu0.b32.cont [8/16] %v1529, 128
      %1754 = vxpose.xlu0.b32.cont [9/16] %v1530, 128
      %1755 = vxpose.xlu0.b32.cont [10/16] %v1531, 128
      %1756 = vxpose.xlu0.b32.cont [11/16] %v1532, 128
      %1757 = vxpose.xlu0.b32.cont [12/16] %v1533, 128
      %1758 = vxpose.xlu0.b32.cont [13/16] %v1534, 128
      %1759 = vxpose.xlu0.b32.cont [14/16] %v1535, 128
      %1760 = vxpose.xlu0.b32.cont [15/16] %v1536, 128
      %1761 = vxpose.xlu0.b32.end [16/16] %v1537, 128
      %v1762 = vpop.trf.xlu0
      %v1763 = vpop.trf.xlu0
      %v1764 = vpop.trf.xlu0
      %v1765 = vpop.trf.xlu0
      %v1766 = vpop.trf.xlu0
      %v1767 = vpop.trf.xlu0
      %v1768 = vpop.trf.xlu0
      %v1769 = vpop.trf.xlu0
      %v1770 = vpop.trf.xlu0
      %v1771 = vpop.trf.xlu0
      %v1772 = vpop.trf.xlu0
      %v1773 = vpop.trf.xlu0
      %v1774 = vpop.trf.xlu0
      %v1775 = vpop.trf.xlu0
      %v1776 = vpop.trf.xlu0
      %v1777 = vpop.trf.xlu0
      %1778 = vxpose.xlu0.b32.start [1/16] %v1538, 128
      %1779 = vxpose.xlu0.b32.cont [2/16] %v1539, 128
      %1780 = vxpose.xlu0.b32.cont [3/16] %v1540, 128
      %1781 = vxpose.xlu0.b32.cont [4/16] %v1541, 128
      %1782 = vxpose.xlu0.b32.cont [5/16] %v1542, 128
      %1783 = vxpose.xlu0.b32.cont [6/16] %v1543, 128
      %1784 = vxpose.xlu0.b32.cont [7/16] %v1544, 128
      %1785 = vxpose.xlu0.b32.cont [8/16] %v1545, 128
      %1786 = vxpose.xlu0.b32.cont [9/16] %v1546, 128
      %1787 = vxpose.xlu0.b32.cont [10/16] %v1547, 128
      %1788 = vxpose.xlu0.b32.cont [11/16] %v1548, 128
      %1789 = vxpose.xlu0.b32.cont [12/16] %v1549, 128
      %1790 = vxpose.xlu0.b32.cont [13/16] %v1550, 128
      %1791 = vxpose.xlu0.b32.cont [14/16] %v1551, 128
      %1792 = vxpose.xlu0.b32.cont [15/16] %v1552, 128
      %1793 = vxpose.xlu0.b32.end [16/16] %v1553, 128
      %v1794 = vpop.trf.xlu0
      %v1795 = vpop.trf.xlu0
      %v1796 = vpop.trf.xlu0
      %v1797 = vpop.trf.xlu0
      %v1798 = vpop.trf.xlu0
      %v1799 = vpop.trf.xlu0
      %v1800 = vpop.trf.xlu0
      %v1801 = vpop.trf.xlu0
      %v1802 = vpop.trf.xlu0
      %v1803 = vpop.trf.xlu0
      %v1804 = vpop.trf.xlu0
      %v1805 = vpop.trf.xlu0
      %v1806 = vpop.trf.xlu0
      %v1807 = vpop.trf.xlu0
      %v1808 = vpop.trf.xlu0
      %v1809 = vpop.trf.xlu0
      %v1810 = vpack.c.bf16 %v1602, %v1570
      %v1811 = vpack.c.bf16 %v1666, %v1634
      %v1812 = vpack.c.bf16 %v1730, %v1698
      %v1813 = vpack.c.bf16 %v1794, %v1762
      %1814 = vst [vmem:[%s170] sm:$0xff] %v1810
      %1815 = vst [vmem:[%s170 + $0x8] sm:$0xff] %v1811
      %1816 = vst [vmem:[%s170 + $0x10] sm:$0xff] %v1812
      %1817 = vst [vmem:[%s170 + $0x18] sm:$0xff] %v1813
      %p1818 = scmp.lt.s32.totalorder %s14, 1
      %s1819 = scalar_select %p1818, %s14, 1
      %s1820 = smul.addr %s1819, 8
      %s1821 = smul.addr %s1820, 4
      %s1822 = scalar_lea.vmem %s3, %s1821
      // Predicated region
      $region33: #{discriminator_forward.4} parent=31 // pred_check
        %p1823 = pneg %p100
      $region34: #{discriminator_forward.4} parent=31 // pred_check_branch
        %1825 = sbr.rel (%p1823) target = $region36
      $region35: #{discriminator_forward.4} parent=31 // pred_region
        _
      $region36: #{discriminator_forward.4} parent=31 // pred_fallthru
        _
    $region32: #{discriminator_forward.4} parent=5 // pred_fallthru
      _
    %p1826 = scmp.le.s32.totalorder 2, %s9
    // Predicated region
    $region37: #{discriminator_forward.4} parent=5 // pred_check
      %p1827 = pneg %p1826
    $region38: #{discriminator_forward.4} parent=5 // pred_check_branch
      %1829 = sbr.rel (%p1827) target = $region40
    $region39: #{discriminator_forward.4} parent=5 // pred_region
      %s1830 = ssub.s32 %s9, 2
      // Predicated region
      $region41: #{discriminator_forward.4} parent=39 // pred_check
        %p1831 = pneg %p106
      $region42: #{discriminator_forward.4} parent=39 // pred_check_branch
        %1833 = sbr.rel (%p1831) target = $region44
      $region43: #{discriminator_forward.4} parent=39 // pred_region
        %p1834 = scmp.lt.s32.totalorder %s15, 1
        %s1835 = scalar_select %p1834, %s15, 1
        %s1836 = smul.addr %s1835, 8
        %s1837 = smul.addr %s1836, 4
        %s1838 = scalar_lea.vmem %s3, %s1837
      $region44: #{discriminator_forward.4} parent=39 // pred_fallthru
        _
    $region40: #{discriminator_forward.4} parent=5 // pred_fallthru
      _
  $region6: #{discriminator_forward.4} parent=0 // loop_footer
    %s13 = sadd.s32 1, %s9
  $region7: #{discriminator_forward.4} parent=0 // loop_footer_branch
    %8 = sbr.rel target = $region3
  $region8: #{discriminator_forward.4} parent=0 // loop_exit
    _

// kernel: discriminator_forward.5
$region0: #{discriminator_forward.5}
  #allocation0 [shape = 'u32[]', space=smem, size = 0x4, offset = 0x4, fixed_abs, tag = 'smem constant byte address 0x4 - core index']
  #allocation1 [shape = 'u32[72,128]{1,0:T(1,128)}', space=vmem, size = 0x9000, scoped, tag = 'internal scratch']
  %s0 = inlined_call_operand.vmem [shape: bf16[2,17,17,32], index: 0, kind: input, shape index: {}]
  %s1 = inlined_call_operand.vmem [shape: bf16[4,32,16], index: 1, kind: input, shape index: {}]
  %s2 = inlined_call_operand.vmem [shape: f32[1,16], index: 2, kind: input, shape index: {}]
  %s3 = inlined_call_operand.vmem [shape: f32[1,16], index: 3, kind: input, shape index: {}]
  %s4 = inlined_call_operand.vmem [shape: bf16[2,16,256], index: 4, kind: output, shape index: {}]
  %s5 = sld [smem:[#allocation0]]
  $region49: #{discriminator_forward.5} parent=0
    _
  %s7 = ssub.s32 1, %s5
  %s8 = scalar_select 0, %s7, %s5
  loop: start=0, step=1, limit=4
  $region2: #{discriminator_forward.5} parent=0 // loop_pre_header
    _
  $region3: #{discriminator_forward.5} parent=0 // loop_header
    %s10 = sphi 0, %s14
    %p11 = scmp.ge.s32.totalorder %s10, 4
    %s20 = sphi 0, %s22
    %s23 = sphi 0, %s20
    %s24 = sphi 0, %s23
    %s40 = sphi 0, %s24
    %s44 = sphi 0, %s44
    %s46 = sphi 0, %s44
    %s47 = sphi 0, %s46
    %s61 = sphi 0, %s47
    %s65 = sphi 0, %s65
    %s67 = sphi 0, %s65
    %s68 = sphi 0, %s67
    %s82 = sphi 0, %s68
    %s86 = sphi 0, %s86
    %s88 = sphi 0, %s86
    %s89 = sphi 0, %s88
    %s103 = sphi 0, %s89
    %s109 = sphi 0, %s111
    %s112 = sphi 0, %s109
    %s113 = sphi 0, %s112
    %s129 = sphi 0, %s113
  $region4: #{discriminator_forward.5} parent=0 // loop_header_branch
    %13 = sbr.rel (%p11) target = $region8
  $region5: #{discriminator_forward.5} parent=0 // loop_body
    %s15 = ssub.s32 %s10, 1
    %s16 = ssub.s32 %s10, 2
    %s17 = sadd.s32 %s10, 1
    %s18 = ssub.s32 %s10, %s17
    %p19 = scmp.eq.s32.totalorder %s18, 0
    %s21 = sadd.s32 %s20, 1
    %s22 = scalar_select %p19, %s20, %s21
    %p25 = pneg %p19
    %p26 = scmp.eq.s32.totalorder %s10, 1
    %p27 = por %p25, %p26
    %p28 = scmp.ne.s32.totalorder %s20, %s23
    %p29 = scmp.eq.s32.totalorder %s10, 0
    %p30 = por %p28, %p29
    %p31 = scmp.ne.s32.totalorder %s20, %s23
    %p32 = scmp.eq.s32.totalorder %s15, 1
    %p33 = por %p31, %p32
    %p34 = scmp.ne.s32.totalorder %s23, %s24
    %p35 = scmp.eq.s32.totalorder %s15, 0
    %p36 = por %p34, %p35
    %p37 = scmp.ne.s32.totalorder %s23, %s24
    %p38 = scmp.eq.s32.totalorder %s16, 1
    %p39 = por %p37, %p38
    %p41 = scmp.ne.s32.totalorder %s24, %s40
    %p42 = scmp.eq.s32.totalorder %s16, 0
    %p43 = por %p41, %p42
    %s45 = sadd.s32 %s44, 1
    %p48 = scmp.eq.s32.totalorder %s10, 1
    %p49 = scmp.ne.s32.totalorder %s44, %s46
    %p50 = scmp.eq.s32.totalorder %s10, 0
    %p51 = por %p49, %p50
    %p52 = scmp.ne.s32.totalorder %s44, %s46
    %p53 = scmp.eq.s32.totalorder %s15, 1
    %p54 = por %p52, %p53
    %p55 = scmp.ne.s32.totalorder %s46, %s47
    %p56 = scmp.eq.s32.totalorder %s15, 0
    %p57 = por %p55, %p56
    %p58 = scmp.ne.s32.totalorder %s46, %s47
    %p59 = scmp.eq.s32.totalorder %s16, 1
    %p60 = por %p58, %p59
    %p62 = scmp.ne.s32.totalorder %s47, %s61
    %p63 = scmp.eq.s32.totalorder %s16, 0
    %p64 = por %p62, %p63
    %s66 = sadd.s32 %s65, 1
    %p69 = scmp.eq.s32.totalorder %s10, 1
    %p70 = scmp.ne.s32.totalorder %s65, %s67
    %p71 = scmp.eq.s32.totalorder %s10, 0
    %p72 = por %p70, %p71
    %p73 = scmp.ne.s32.totalorder %s65, %s67
    %p74 = scmp.eq.s32.totalorder %s15, 1
    %p75 = por %p73, %p74
    %p76 = scmp.ne.s32.totalorder %s67, %s68
    %p77 = scmp.eq.s32.totalorder %s15, 0
    %p78 = por %p76, %p77
    %p79 = scmp.ne.s32.totalorder %s67, %s68
    %p80 = scmp.eq.s32.totalorder %s16, 1
    %p81 = por %p79, %p80
    %p83 = scmp.ne.s32.totalorder %s68, %s82
    %p84 = scmp.eq.s32.totalorder %s16, 0
    %p85 = por %p83, %p84
    %s87 = sadd.s32 %s86, 1
    %p90 = scmp.eq.s32.totalorder %s10, 1
    %p91 = scmp.ne.s32.totalorder %s86, %s88
    %p92 = scmp.eq.s32.totalorder %s10, 0
    %p93 = por %p91, %p92
    %p94 = scmp.ne.s32.totalorder %s86, %s88
    %p95 = scmp.eq.s32.totalorder %s15, 1
    %p96 = por %p94, %p95
    %p97 = scmp.ne.s32.totalorder %s88, %s89
    %p98 = scmp.eq.s32.totalorder %s15, 0
    %p99 = por %p97, %p98
    %p100 = scmp.ne.s32.totalorder %s88, %s89
    %p101 = scmp.eq.s32.totalorder %s16, 1
    %p102 = por %p100, %p101
    %p104 = scmp.ne.s32.totalorder %s89, %s103
    %p105 = scmp.eq.s32.totalorder %s16, 0
    %p106 = por %p104, %p105
    %s107 = ssub.s32 %s10, %s17
    %p108 = scmp.eq.s32.totalorder %s107, 0
    %s110 = sadd.s32 %s109, 1
    %s111 = scalar_select %p108, %s109, %s110
    %p114 = pneg %p108
    %p115 = scmp.eq.s32.totalorder %s10, 1
    %p116 = por %p114, %p115
    %p117 = scmp.ne.s32.totalorder %s109, %s112
    %p118 = scmp.eq.s32.totalorder %s10, 0
    %p119 = por %p117, %p118
    %p120 = scmp.ne.s32.totalorder %s109, %s112
    %p121 = scmp.eq.s32.totalorder %s15, 1
    %p122 = por %p120, %p121
    %p123 = scmp.ne.s32.totalorder %s112, %s113
    %p124 = scmp.eq.s32.totalorder %s15, 0
    %p125 = por %p123, %p124
    %p126 = scmp.ne.s32.totalorder %s112, %s113
    %p127 = scmp.eq.s32.totalorder %s16, 1
    %p128 = por %p126, %p127
    %p130 = scmp.ne.s32.totalorder %s113, %s129
    %p131 = scmp.eq.s32.totalorder %s16, 0
    %p132 = por %p130, %p131
    %p133 = scmp.le.s32.totalorder 1, %s10
    %p134 = scmp.lt.s32.totalorder %s10, 3
    %p135 = pnand %p133, %p134
    %p136 = pneg %p135
    // Predicated region
    $region9: #{discriminator_forward.5} parent=5 // pred_check
      _
    $region10: #{discriminator_forward.5} parent=5 // pred_check_branch
      %138 = sbr.rel (%p135) target = $region12
    $region11: #{discriminator_forward.5} parent=5 // pred_region
      %s139 = ssub.s32 %s10, 1
      // Predicated region
      $region13: #{discriminator_forward.5} parent=11 // pred_check
        %p140 = pneg %p57
      $region14: #{discriminator_forward.5} parent=11 // pred_check_branch
        %142 = sbr.rel (%p140) target = $region16
      $region15: #{discriminator_forward.5} parent=11 // pred_region
        _
      $region16: #{discriminator_forward.5} parent=11 // pred_fallthru
        _
      // Predicated region
      $region17: #{discriminator_forward.5} parent=11 // pred_check
        %p143 = pneg %p78
      $region18: #{discriminator_forward.5} parent=11 // pred_check_branch
        %145 = sbr.rel (%p143) target = $region20
      $region19: #{discriminator_forward.5} parent=11 // pred_region
        _
      $region20: #{discriminator_forward.5} parent=11 // pred_fallthru
        _
      // Predicated region
      $region21: #{discriminator_forward.5} parent=11 // pred_check
        %p146 = pneg %p99
      $region22: #{discriminator_forward.5} parent=11 // pred_check_branch
        %148 = sbr.rel (%p146) target = $region24
      $region23: #{discriminator_forward.5} parent=11 // pred_region
        _
      $region24: #{discriminator_forward.5} parent=11 // pred_fallthru
        _
    $region12: #{discriminator_forward.5} parent=5 // pred_fallthru
      _
    %p149 = scmp.lt.s32.totalorder %s10, 2
    // Predicated region
    $region25: #{discriminator_forward.5} parent=5 // pred_check
      %p150 = pneg %p149
    $region26: #{discriminator_forward.5} parent=5 // pred_check_branch
      %152 = sbr.rel (%p150) target = $region28
    $region27: #{discriminator_forward.5} parent=5 // pred_region
      // Predicated region
      $region29: #{discriminator_forward.5} parent=27 // pred_check
        %p153 = pneg %p30
      $region30: #{discriminator_forward.5} parent=27 // pred_check_branch
        %155 = sbr.rel (%p153) target = $region32
      $region31: #{discriminator_forward.5} parent=27 // pred_region
        %p156 = scmp.lt.s32.totalorder %s10, 1
        %s157 = scalar_select %p156, %s10, 1
        %s158 = smul.addr %s157, 51
        %s159 = smul.addr %s158, 4
        %s160 = scalar_lea.vmem %s0, %s159
      $region32: #{discriminator_forward.5} parent=27 // pred_fallthru
        _
    $region28: #{discriminator_forward.5} parent=5 // pred_fallthru
      _
    %p161 = scmp.le.s32.totalorder 1, %s10
    %p162 = scmp.lt.s32.totalorder %s10, 3
    %p163 = pnand %p161, %p162
    %p164 = pneg %p163
    // Predicated region
    $region33: #{discriminator_forward.5} parent=5 // pred_check
      _
    $region34: #{discriminator_forward.5} parent=5 // pred_check_branch
      %166 = sbr.rel (%p163) target = $region36
    $region35: #{discriminator_forward.5} parent=5 // pred_region
      %s167 = ssub.s32 %s10, 1
      %p168 = scmp.lt.s32.totalorder %s15, 1
      %s169 = scalar_select %p168, %s15, 1
      %s170 = smul.addr %s169, 51
      %s171 = smul.addr %s170, 4
      %s172 = scalar_lea.vmem %s0, %s171
      %p173 = pneg %p36
      %p174 = pneg %p33
      %p175 = pneg %p57
      %p176 = pneg %p54
      %p177 = pneg %p78
      %p178 = pneg %p75
      %p179 = pneg %p99
      %p180 = pneg %p96
      %p181 = pneg %p125
      %p182 = pneg %p122
      %p183 = scmp.lt.s32.totalorder %s15, 1
      %s184 = scalar_select %p183, %s15, 1
      %s185 = smul.addr %s184, 4
      %s186 = smul.addr %s185, 4
      %s187 = scalar_lea.vmem %s4, %s186
      %p188 = scmp.lt.s32.totalorder %s15, 1
      %s189 = scalar_select %p188, %s15, 1
      %s190 = smul.addr %s189, 51
      %s191 = smul.addr %s190, 4
      %s192 = scalar_lea.vmem %s0, %s191
      %p193 = scmp.lt.s32.totalorder %s15, 1
      %s194 = scalar_select %p193, %s15, 1
      %s195 = smul.addr %s194, 4
      %s196 = smul.addr %s195, 4
      %s197 = scalar_lea.vmem %s4, %s196
      %v199 = vld [vmem:[%s192] sm:$0xf]
      %v200 = vld [vmem:[%s192 + $0x4] sm:$0xf]
      %v201 = vld [vmem:[%s192 + $0x8] sm:$0x1]
      %v202 = vld [vmem:[%s192 + $0xc] sm:$0xf]
      %v203 = vld [vmem:[%s192 + $0x10] sm:$0xf]
      %v204 = vld [vmem:[%s192 + $0x14] sm:$0x1]
      %v205 = vld [vmem:[%s192 + $0x18] sm:$0xf]
      %v206 = vld [vmem:[%s192 + $0x1c] sm:$0xf]
      %v207 = vld [vmem:[%s192 + $0x20] sm:$0x1]
      %v208 = vld [vmem:[%s192 + $0x24] sm:$0xf]
      %v209 = vld [vmem:[%s192 + $0x28] sm:$0xf]
      %v210 = vld [vmem:[%s192 + $0x2c] sm:$0x1]
      %v211 = vld [vmem:[%s192 + $0x30] sm:$0xf]
      %v212 = vld [vmem:[%s192 + $0x34] sm:$0xf]
      %v213 = vld [vmem:[%s192 + $0x38] sm:$0x1]
      %v214 = vld [vmem:[%s192 + $0x3c] sm:$0xf]
      %v215 = vld [vmem:[%s192 + $0x40] sm:$0xf]
      %v216 = vld [vmem:[%s192 + $0x44] sm:$0x1]
      %v217 = vld [vmem:[%s192 + $0x48] sm:$0xf]
      %v218 = vld [vmem:[%s192 + $0x4c] sm:$0xf]
      %v219 = vld [vmem:[%s192 + $0x50] sm:$0x1]
      %v220 = vld [vmem:[%s192 + $0x54] sm:$0xf]
      %v221 = vld [vmem:[%s192 + $0x58] sm:$0xf]
      %v222 = vld [vmem:[%s192 + $0x5c] sm:$0x1]
      %v223 = vld [vmem:[%s192 + $0x60] sm:$0xf]
      %v224 = vld [vmem:[%s192 + $0x64] sm:$0xf]
      %v225 = vld [vmem:[%s192 + $0x68] sm:$0x1]
      %v226 = vld [vmem:[%s192 + $0x6c] sm:$0xf]
      %v227 = vld [vmem:[%s192 + $0x70] sm:$0xf]
      %v228 = vld [vmem:[%s192 + $0x74] sm:$0x1]
      %v229 = vld [vmem:[%s192 + $0x78] sm:$0xf]
      %v230 = vld [vmem:[%s192 + $0x7c] sm:$0xf]
      %v231 = vld [vmem:[%s192 + $0x80] sm:$0x1]
      %v232 = vld [vmem:[%s192 + $0x84] sm:$0xf]
      %v233 = vld [vmem:[%s192 + $0x88] sm:$0xf]
      %v234 = vld [vmem:[%s192 + $0x8c] sm:$0x1]
      %v235 = vld [vmem:[%s192 + $0x90] sm:$0xf]
      %v236 = vld [vmem:[%s192 + $0x94] sm:$0xf]
      %v237 = vld [vmem:[%s192 + $0x98] sm:$0x1]
      %v238 = vld [vmem:[%s192 + $0x9c] sm:$0xf]
      %v239 = vld [vmem:[%s192 + $0xa0] sm:$0xf]
      %v240 = vld [vmem:[%s192 + $0xa4] sm:$0x1]
      %v241 = vld [vmem:[%s192 + $0xa8] sm:$0xf]
      %v242 = vld [vmem:[%s192 + $0xac] sm:$0xf]
      %v243 = vld [vmem:[%s192 + $0xb0] sm:$0x1]
      %v244 = vld [vmem:[%s192 + $0xb4] sm:$0xf]
      %v245 = vld [vmem:[%s192 + $0xb8] sm:$0xf]
      %v246 = vld [vmem:[%s192 + $0xbc] sm:$0x1]
      %v247 = vld [vmem:[%s192 + $0xc0] sm:$0xf]
      %v248 = vld [vmem:[%s192 + $0xc4] sm:$0xf]
      %v249 = vld [vmem:[%s192 + $0xc8] sm:$0x1]
      %v250 = vld [vmem:[%s1] sm:$0xf]
      %v251 = vld [vmem:[%s1 + $0x4] sm:$0xf]
      %v252 = vld [vmem:[%s1 + $0x8] sm:$0xf]
      %v253 = vld [vmem:[%s1 + $0xc] sm:$0xf]
      %vm254 = vsmask.f32 3328
      %vm255 = vsmask.f32 7440
      %vm256 = vmor %vm254, %vm255
      %v258 = vshrl.u32 %v199, 16
      %v260 = vrot.slane %v258, 4
      %v261 = vshll.u32 %v199, 16
      %v263 = vrot.slane %v261, 5
      %v264 = vor.u32 %v260, %v263
      %v265 = vrot.slane %v264, 4
      %v267 = vshll.u32 %v200, 16
      %v269 = vrot.slane %v267, 5
      %v270 = vsel %vm256, %v265, %v269
      %v271 = vshrl.u32 %v200, 16
      %v273 = vrot.slane %v271, 4
      %v274 = vor.u32 %v273, %v269
      %v275 = vrot.slane %v274, 4
      %v277 = vshll.u32 %v201, 16
      %v279 = vrot.slane %v277, 5
      %v280 = vsel %vm256, %v275, %v279
      %v282 = vshrl.u32 %v202, 16
      %v284 = vrot.slane %v282, 4
      %v285 = vshll.u32 %v202, 16
      %v287 = vrot.slane %v285, 5
      %v288 = vor.u32 %v284, %v287
      %v289 = vrot.slane %v288, 4
      %v291 = vshll.u32 %v203, 16
      %v293 = vrot.slane %v291, 5
      %v294 = vsel %vm256, %v289, %v293
      %v295 = vshrl.u32 %v203, 16
      %v297 = vrot.slane %v295, 4
      %v298 = vor.u32 %v297, %v293
      %v299 = vrot.slane %v298, 4
      %v301 = vshll.u32 %v204, 16
      %v303 = vrot.slane %v301, 5
      %v304 = vsel %vm256, %v299, %v303
      %v306 = vshrl.u32 %v205, 16
      %v308 = vrot.slane %v306, 4
      %v309 = vshll.u32 %v205, 16
      %v311 = vrot.slane %v309, 5
      %v312 = vor.u32 %v308, %v311
      %v313 = vrot.slane %v312, 4
      %v315 = vshll.u32 %v206, 16
      %v317 = vrot.slane %v315, 5
      %v318 = vsel %vm256, %v313, %v317
      %v319 = vshrl.u32 %v206, 16
      %v321 = vrot.slane %v319, 4
      %v322 = vor.u32 %v321, %v317
      %v323 = vrot.slane %v322, 4
      %v325 = vshll.u32 %v207, 16
      %v327 = vrot.slane %v325, 5
      %v328 = vsel %vm256, %v323, %v327
      %v330 = vshrl.u32 %v208, 16
      %v332 = vrot.slane %v330, 4
      %v333 = vshll.u32 %v208, 16
      %v335 = vrot.slane %v333, 5
      %v336 = vor.u32 %v332, %v335
      %v337 = vrot.slane %v336, 4
      %v339 = vshll.u32 %v209, 16
      %v341 = vrot.slane %v339, 5
      %v342 = vsel %vm256, %v337, %v341
      %v343 = vshrl.u32 %v209, 16
      %v345 = vrot.slane %v343, 4
      %v346 = vor.u32 %v345, %v341
      %v347 = vrot.slane %v346, 4
      %v349 = vshll.u32 %v210, 16
      %v351 = vrot.slane %v349, 5
      %v352 = vsel %vm256, %v347, %v351
      %v354 = vshrl.u32 %v211, 16
      %v356 = vrot.slane %v354, 4
      %v357 = vshll.u32 %v211, 16
      %v359 = vrot.slane %v357, 5
      %v360 = vor.u32 %v356, %v359
      %v361 = vrot.slane %v360, 4
      %v363 = vshll.u32 %v212, 16
      %v365 = vrot.slane %v363, 5
      %v366 = vsel %vm256, %v361, %v365
      %v367 = vshrl.u32 %v212, 16
      %v369 = vrot.slane %v367, 4
      %v370 = vor.u32 %v369, %v365
      %v371 = vrot.slane %v370, 4
      %v373 = vshll.u32 %v213, 16
      %v375 = vrot.slane %v373, 5
      %v376 = vsel %vm256, %v371, %v375
      %v378 = vshrl.u32 %v214, 16
      %v380 = vrot.slane %v378, 4
      %v381 = vshll.u32 %v214, 16
      %v383 = vrot.slane %v381, 5
      %v384 = vor.u32 %v380, %v383
      %v385 = vrot.slane %v384, 4
      %v387 = vshll.u32 %v215, 16
      %v389 = vrot.slane %v387, 5
      %v390 = vsel %vm256, %v385, %v389
      %v391 = vshrl.u32 %v215, 16
      %v393 = vrot.slane %v391, 4
      %v394 = vor.u32 %v393, %v389
      %v395 = vrot.slane %v394, 4
      %v397 = vshll.u32 %v216, 16
      %v399 = vrot.slane %v397, 5
      %v400 = vsel %vm256, %v395, %v399
      %v402 = vshrl.u32 %v217, 16
      %v404 = vrot.slane %v402, 4
      %v405 = vshll.u32 %v217, 16
      %v407 = vrot.slane %v405, 5
      %v408 = vor.u32 %v404, %v407
      %v409 = vrot.slane %v408, 4
      %v411 = vshll.u32 %v218, 16
      %v413 = vrot.slane %v411, 5
      %v414 = vsel %vm256, %v409, %v413
      %v415 = vshrl.u32 %v218, 16
      %v417 = vrot.slane %v415, 4
      %v418 = vor.u32 %v417, %v413
      %v419 = vrot.slane %v418, 4
      %v421 = vshll.u32 %v219, 16
      %v423 = vrot.slane %v421, 5
      %v424 = vsel %vm256, %v419, %v423
      %v426 = vshrl.u32 %v220, 16
      %v428 = vrot.slane %v426, 4
      %v429 = vshll.u32 %v220, 16
      %v431 = vrot.slane %v429, 5
      %v432 = vor.u32 %v428, %v431
      %v433 = vrot.slane %v432, 4
      %v435 = vshll.u32 %v221, 16
      %v437 = vrot.slane %v435, 5
      %v438 = vsel %vm256, %v433, %v437
      %v439 = vshrl.u32 %v221, 16
      %v441 = vrot.slane %v439, 4
      %v442 = vor.u32 %v441, %v437
      %v443 = vrot.slane %v442, 4
      %v445 = vshll.u32 %v222, 16
      %v447 = vrot.slane %v445, 5
      %v448 = vsel %vm256, %v443, %v447
      %v450 = vshrl.u32 %v223, 16
      %v452 = vrot.slane %v450, 4
      %v453 = vshll.u32 %v223, 16
      %v455 = vrot.slane %v453, 5
      %v456 = vor.u32 %v452, %v455
      %v457 = vrot.slane %v456, 4
      %v459 = vshll.u32 %v224, 16
      %v461 = vrot.slane %v459, 5
      %v462 = vsel %vm256, %v457, %v461
      %v463 = vshrl.u32 %v224, 16
      %v465 = vrot.slane %v463, 4
      %v466 = vor.u32 %v465, %v461
      %v467 = vrot.slane %v466, 4
      %v469 = vshll.u32 %v225, 16
      %v471 = vrot.slane %v469, 5
      %v472 = vsel %vm256, %v467, %v471
      %v474 = vshrl.u32 %v226, 16
      %v476 = vrot.slane %v474, 4
      %v477 = vshll.u32 %v226, 16
      %v479 = vrot.slane %v477, 5
      %v480 = vor.u32 %v476, %v479
      %v481 = vrot.slane %v480, 4
      %v483 = vshll.u32 %v227, 16
      %v485 = vrot.slane %v483, 5
      %v486 = vsel %vm256, %v481, %v485
      %v487 = vshrl.u32 %v227, 16
      %v489 = vrot.slane %v487, 4
      %v490 = vor.u32 %v489, %v485
      %v491 = vrot.slane %v490, 4
      %v493 = vshll.u32 %v228, 16
      %v495 = vrot.slane %v493, 5
      %v496 = vsel %vm256, %v491, %v495
      %v498 = vshrl.u32 %v229, 16
      %v500 = vrot.slane %v498, 4
      %v501 = vshll.u32 %v229, 16
      %v503 = vrot.slane %v501, 5
      %v504 = vor.u32 %v500, %v503
      %v505 = vrot.slane %v504, 4
      %v507 = vshll.u32 %v230, 16
      %v509 = vrot.slane %v507, 5
      %v510 = vsel %vm256, %v505, %v509
      %v511 = vshrl.u32 %v230, 16
      %v513 = vrot.slane %v511, 4
      %v514 = vor.u32 %v513, %v509
      %v515 = vrot.slane %v514, 4
      %v517 = vshll.u32 %v231, 16
      %v519 = vrot.slane %v517, 5
      %v520 = vsel %vm256, %v515, %v519
      %v522 = vshrl.u32 %v232, 16
      %v524 = vrot.slane %v522, 4
      %v525 = vshll.u32 %v232, 16
      %v527 = vrot.slane %v525, 5
      %v528 = vor.u32 %v524, %v527
      %v529 = vrot.slane %v528, 4
      %v531 = vshll.u32 %v233, 16
      %v533 = vrot.slane %v531, 5
      %v534 = vsel %vm256, %v529, %v533
      %v535 = vshrl.u32 %v233, 16
      %v537 = vrot.slane %v535, 4
      %v538 = vor.u32 %v537, %v533
      %v539 = vrot.slane %v538, 4
      %v541 = vshll.u32 %v234, 16
      %v543 = vrot.slane %v541, 5
      %v544 = vsel %vm256, %v539, %v543
      %v546 = vshrl.u32 %v235, 16
      %v548 = vrot.slane %v546, 4
      %v549 = vshll.u32 %v235, 16
      %v551 = vrot.slane %v549, 5
      %v552 = vor.u32 %v548, %v551
      %v553 = vrot.slane %v552, 4
      %v555 = vshll.u32 %v236, 16
      %v557 = vrot.slane %v555, 5
      %v558 = vsel %vm256, %v553, %v557
      %v559 = vshrl.u32 %v236, 16
      %v561 = vrot.slane %v559, 4
      %v562 = vor.u32 %v561, %v557
      %v563 = vrot.slane %v562, 4
      %v565 = vshll.u32 %v237, 16
      %v567 = vrot.slane %v565, 5
      %v568 = vsel %vm256, %v563, %v567
      %v570 = vshrl.u32 %v238, 16
      %v572 = vrot.slane %v570, 4
      %v573 = vshll.u32 %v238, 16
      %v575 = vrot.slane %v573, 5
      %v576 = vor.u32 %v572, %v575
      %v577 = vrot.slane %v576, 4
      %v579 = vshll.u32 %v239, 16
      %v581 = vrot.slane %v579, 5
      %v582 = vsel %vm256, %v577, %v581
      %v583 = vshrl.u32 %v239, 16
      %v585 = vrot.slane %v583, 4
      %v586 = vor.u32 %v585, %v581
      %v587 = vrot.slane %v586, 4
      %v589 = vshll.u32 %v240, 16
      %v591 = vrot.slane %v589, 5
      %v592 = vsel %vm256, %v587, %v591
      %v594 = vshrl.u32 %v241, 16
      %v596 = vrot.slane %v594, 4
      %v597 = vshll.u32 %v241, 16
      %v599 = vrot.slane %v597, 5
      %v600 = vor.u32 %v596, %v599
      %v601 = vrot.slane %v600, 4
      %v603 = vshll.u32 %v242, 16
      %v605 = vrot.slane %v603, 5
      %v606 = vsel %vm256, %v601, %v605
      %v607 = vshrl.u32 %v242, 16
      %v609 = vrot.slane %v607, 4
      %v610 = vor.u32 %v609, %v605
      %v611 = vrot.slane %v610, 4
      %v613 = vshll.u32 %v243, 16
      %v615 = vrot.slane %v613, 5
      %v616 = vsel %vm256, %v611, %v615
      %v618 = vshrl.u32 %v244, 16
      %v620 = vrot.slane %v618, 4
      %v621 = vshll.u32 %v244, 16
      %v623 = vrot.slane %v621, 5
      %v624 = vor.u32 %v620, %v623
      %v625 = vrot.slane %v624, 4
      %v627 = vshll.u32 %v245, 16
      %v629 = vrot.slane %v627, 5
      %v630 = vsel %vm256, %v625, %v629
      %v631 = vshrl.u32 %v245, 16
      %v633 = vrot.slane %v631, 4
      %v634 = vor.u32 %v633, %v629
      %v635 = vrot.slane %v634, 4
      %v637 = vshll.u32 %v246, 16
      %v639 = vrot.slane %v637, 5
      %v640 = vsel %vm256, %v635, %v639
      %s641 = scalar_lea.vmem %s1, 16
      %v642 = vld [vmem:[%s641] sm:$0xf]
      %v643 = vld [vmem:[%s641 + $0x4] sm:$0xf]
      %v644 = vld [vmem:[%s641 + $0x8] sm:$0xf]
      %v645 = vld [vmem:[%s641 + $0xc] sm:$0xf]
      %v646 = vunpack.c.l.b16 %v270
      %v647 = vunpack.c.l.b16 %v280
      %v648 = vunpack.c.l.b16 %v294
      %v649 = vunpack.c.l.b16 %v304
      %v650 = vunpack.c.l.b16 %v318
      %v651 = vunpack.c.l.b16 %v328
      %v652 = vunpack.c.l.b16 %v342
      %v653 = vunpack.c.l.b16 %v352
      %v654 = vunpack.c.l.b16 %v366
      %v655 = vunpack.c.l.b16 %v376
      %v656 = vunpack.c.l.b16 %v390
      %v657 = vunpack.c.l.b16 %v400
      %v658 = vunpack.c.l.b16 %v414
      %v659 = vunpack.c.l.b16 %v424
      %v660 = vunpack.c.l.b16 %v438
      %v661 = vunpack.c.l.b16 %v448
      %v662 = vunpack.c.l.b16 %v462
      %v663 = vunpack.c.l.b16 %v472
      %v664 = vunpack.c.l.b16 %v486
      %v665 = vunpack.c.l.b16 %v496
      %v666 = vunpack.c.l.b16 %v510
      %v667 = vunpack.c.l.b16 %v520
      %v668 = vunpack.c.l.b16 %v534
      %v669 = vunpack.c.l.b16 %v544
      %v670 = vunpack.c.l.b16 %v558
      %v671 = vunpack.c.l.b16 %v568
      %v672 = vunpack.c.l.b16 %v582
      %v673 = vunpack.c.l.b16 %v592
      %v674 = vunpack.c.l.b16 %v606
      %v675 = vunpack.c.l.b16 %v616
      %v676 = vunpack.c.l.b16 %v630
      %v677 = vunpack.c.l.b16 %v640
      %v678 = vpack.c.b16 %v647, %v646
      %v679 = vpack.c.b16 %v649, %v648
      %v680 = vpack.c.b16 %v651, %v650
      %v681 = vpack.c.b16 %v653, %v652
      %v682 = vpack.c.b16 %v655, %v654
      %v683 = vpack.c.b16 %v657, %v656
      %v684 = vpack.c.b16 %v659, %v658
      %v685 = vpack.c.b16 %v661, %v660
      %v686 = vpack.c.b16 %v663, %v662
      %v687 = vpack.c.b16 %v665, %v664
      %v688 = vpack.c.b16 %v667, %v666
      %v689 = vpack.c.b16 %v669, %v668
      %v690 = vpack.c.b16 %v671, %v670
      %v691 = vpack.c.b16 %v673, %v672
      %v692 = vpack.c.b16 %v675, %v674
      %v693 = vpack.c.b16 %v677, %v676
      %v698 = vunpack.c.l.b16 %v642
      %v699 = vunpack.c.l.b16 %v643
      %v700 = vunpack.c.l.b16 %v644
      %v701 = vunpack.c.l.b16 %v645
      %v702 = vpack.c.b16 %v699, %v698
      %v703 = vpack.c.b16 %v701, %v700
      %vm706 = vcmask 261120
      %v708 = vsel %vm706, %v678, 0
      %v711 = vsel %vm706, %v679, 0
      %v714 = vsel %vm706, %v680, 0
      %v717 = vsel %vm706, %v681, 0
      %v720 = vsel %vm706, %v682, 0
      %v723 = vsel %vm706, %v683, 0
      %v726 = vsel %vm706, %v684, 0
      %v729 = vsel %vm706, %v685, 0
      %v732 = vsel %vm706, %v686, 0
      %v735 = vsel %vm706, %v687, 0
      %v738 = vsel %vm706, %v688, 0
      %v741 = vsel %vm706, %v689, 0
      %v744 = vsel %vm706, %v690, 0
      %v747 = vsel %vm706, %v691, 0
      %v750 = vsel %vm706, %v692, 0
      %v753 = vsel %vm706, %v693, 0
      %755 = vmatpush.bf16.msra.mxu0 0
      %756 = vmatpush.bf16.msra.mxu0 0
      %757 = vmatpush.bf16.msra.mxu0 0
      %758 = vmatpush.bf16.msra.mxu0 0
      %759 = vmatpush.bf16.msra.mxu0 0
      %760 = vmatpush.bf16.msra.mxu0 0
      %761 = vmatpush.bf16.msra.mxu0 %v703
      %762 = vmatpush.bf16.msra.mxu0 %v702
      %763 = vmatmul.bf16.gmra.mxu0 %v708
      %v764 = vpop.f32.mrf.mxu0
      %v765 = vadd.f32 0.0, %v764
      %v766 = vpop.f32.mrf.mxu0
      %v767 = vadd.f32 0.0, %v766
      %768 = vmatmul.bf16.gmra.mxu0 %v711
      %v769 = vpop.f32.mrf.mxu0
      %v770 = vadd.f32 0.0, %v769
      %v771 = vpop.f32.mrf.mxu0
      %v772 = vadd.f32 0.0, %v771
      %773 = vmatmul.bf16.gmra.mxu0 %v714
      %v774 = vpop.f32.mrf.mxu0
      %v775 = vadd.f32 0.0, %v774
      %v776 = vpop.f32.mrf.mxu0
      %v777 = vadd.f32 0.0, %v776
      %778 = vmatmul.bf16.gmra.mxu0 %v717
      %v779 = vpop.f32.mrf.mxu0
      %v780 = vadd.f32 0.0, %v779
      %v781 = vpop.f32.mrf.mxu0
      %v782 = vadd.f32 0.0, %v781
      %783 = vmatmul.bf16.gmra.mxu0 %v720
      %v784 = vpop.f32.mrf.mxu0
      %v785 = vadd.f32 0.0, %v784
      %v786 = vpop.f32.mrf.mxu0
      %v787 = vadd.f32 0.0, %v786
      %788 = vmatmul.bf16.gmra.mxu0 %v723
      %v789 = vpop.f32.mrf.mxu0
      %v790 = vadd.f32 0.0, %v789
      %v791 = vpop.f32.mrf.mxu0
      %v792 = vadd.f32 0.0, %v791
      %793 = vmatmul.bf16.gmra.mxu0 %v726
      %v794 = vpop.f32.mrf.mxu0
      %v795 = vadd.f32 0.0, %v794
      %v796 = vpop.f32.mrf.mxu0
      %v797 = vadd.f32 0.0, %v796
      %798 = vmatmul.bf16.gmra.mxu0 %v729
      %v799 = vpop.f32.mrf.mxu0
      %v800 = vadd.f32 0.0, %v799
      %v801 = vpop.f32.mrf.mxu0
      %v802 = vadd.f32 0.0, %v801
      %803 = vmatmul.bf16.gmra.mxu0 %v732
      %v804 = vpop.f32.mrf.mxu0
      %v805 = vadd.f32 0.0, %v804
      %v806 = vpop.f32.mrf.mxu0
      %v807 = vadd.f32 0.0, %v806
      %808 = vmatmul.bf16.gmra.mxu0 %v735
      %v809 = vpop.f32.mrf.mxu0
      %v810 = vadd.f32 0.0, %v809
      %v811 = vpop.f32.mrf.mxu0
      %v812 = vadd.f32 0.0, %v811
      %813 = vmatmul.bf16.gmra.mxu0 %v738
      %v814 = vpop.f32.mrf.mxu0
      %v815 = vadd.f32 0.0, %v814
      %v816 = vpop.f32.mrf.mxu0
      %v817 = vadd.f32 0.0, %v816
      %818 = vmatmul.bf16.gmra.mxu0 %v741
      %v819 = vpop.f32.mrf.mxu0
      %v820 = vadd.f32 0.0, %v819
      %v821 = vpop.f32.mrf.mxu0
      %v822 = vadd.f32 0.0, %v821
      %823 = vmatmul.bf16.gmra.mxu0 %v744
      %v824 = vpop.f32.mrf.mxu0
      %v825 = vadd.f32 0.0, %v824
      %v826 = vpop.f32.mrf.mxu0
      %v827 = vadd.f32 0.0, %v826
      %828 = vmatmul.bf16.gmra.mxu0 %v747
      %v829 = vpop.f32.mrf.mxu0
      %v830 = vadd.f32 0.0, %v829
      %v831 = vpop.f32.mrf.mxu0
      %v832 = vadd.f32 0.0, %v831
      %833 = vmatmul.bf16.gmra.mxu0 %v750
      %v834 = vpop.f32.mrf.mxu0
      %v835 = vadd.f32 0.0, %v834
      %v836 = vpop.f32.mrf.mxu0
      %v837 = vadd.f32 0.0, %v836
      %838 = vmatmul.bf16.gmra.mxu0 %v753
      %v839 = vpop.f32.mrf.mxu0
      %v840 = vadd.f32 0.0, %v839
      %v841 = vpop.f32.mrf.mxu0
      %v842 = vadd.f32 0.0, %v841
      %843 = vdwg.mxu0
      %v876 = vunpack.c.l.b16 %v199
      %v877 = vunpack.c.l.b16 %v200
      %v878 = vunpack.c.l.b16 %v202
      %v879 = vunpack.c.l.b16 %v203
      %v880 = vunpack.c.l.b16 %v205
      %v881 = vunpack.c.l.b16 %v206
      %v882 = vunpack.c.l.b16 %v208
      %v883 = vunpack.c.l.b16 %v209
      %v884 = vunpack.c.l.b16 %v211
      %v885 = vunpack.c.l.b16 %v212
      %v886 = vunpack.c.l.b16 %v214
      %v887 = vunpack.c.l.b16 %v215
      %v888 = vunpack.c.l.b16 %v217
      %v889 = vunpack.c.l.b16 %v218
      %v890 = vunpack.c.l.b16 %v220
      %v891 = vunpack.c.l.b16 %v221
      %v892 = vunpack.c.l.b16 %v223
      %v893 = vunpack.c.l.b16 %v224
      %v894 = vunpack.c.l.b16 %v226
      %v895 = vunpack.c.l.b16 %v227
      %v896 = vunpack.c.l.b16 %v229
      %v897 = vunpack.c.l.b16 %v230
      %v898 = vunpack.c.l.b16 %v232
      %v899 = vunpack.c.l.b16 %v233
      %v900 = vunpack.c.l.b16 %v235
      %v901 = vunpack.c.l.b16 %v236
      %v902 = vunpack.c.l.b16 %v238
      %v903 = vunpack.c.l.b16 %v239
      %v904 = vunpack.c.l.b16 %v241
      %v905 = vunpack.c.l.b16 %v242
      %v906 = vunpack.c.l.b16 %v244
      %v907 = vunpack.c.l.b16 %v245
      %v908 = vpack.c.b16 %v877, %v876
      %v909 = vpack.c.b16 %v879, %v878
      %v910 = vpack.c.b16 %v881, %v880
      %v911 = vpack.c.b16 %v883, %v882
      %v912 = vpack.c.b16 %v885, %v884
      %v913 = vpack.c.b16 %v887, %v886
      %v914 = vpack.c.b16 %v889, %v888
      %v915 = vpack.c.b16 %v891, %v890
      %v916 = vpack.c.b16 %v893, %v892
      %v917 = vpack.c.b16 %v895, %v894
      %v918 = vpack.c.b16 %v897, %v896
      %v919 = vpack.c.b16 %v899, %v898
      %v920 = vpack.c.b16 %v901, %v900
      %v921 = vpack.c.b16 %v903, %v902
      %v922 = vpack.c.b16 %v905, %v904
      %v923 = vpack.c.b16 %v907, %v906
      %v928 = vunpack.c.l.b16 %v250
      %v929 = vunpack.c.l.b16 %v251
      %v930 = vunpack.c.l.b16 %v252
      %v931 = vunpack.c.l.b16 %v253
      %v932 = vpack.c.b16 %v929, %v928
      %v933 = vpack.c.b16 %v931, %v930
      %v937 = vsel %vm706, %v908, 0
      %v940 = vsel %vm706, %v909, 0
      %v943 = vsel %vm706, %v910, 0
      %v946 = vsel %vm706, %v911, 0
      %v949 = vsel %vm706, %v912, 0
      %v952 = vsel %vm706, %v913, 0
      %v955 = vsel %vm706, %v914, 0
      %v958 = vsel %vm706, %v915, 0
      %v961 = vsel %vm706, %v916, 0
      %v964 = vsel %vm706, %v917, 0
      %v967 = vsel %vm706, %v918, 0
      %v970 = vsel %vm706, %v919, 0
      %v973 = vsel %vm706, %v920, 0
      %v976 = vsel %vm706, %v921, 0
      %v979 = vsel %vm706, %v922, 0
      %v982 = vsel %vm706, %v923, 0
      %984 = vmatpush.bf16.msra.mxu0 0
      %985 = vmatpush.bf16.msra.mxu0 0
      %986 = vmatpush.bf16.msra.mxu0 0
      %987 = vmatpush.bf16.msra.mxu0 0
      %988 = vmatpush.bf16.msra.mxu0 0
      %989 = vmatpush.bf16.msra.mxu0 0
      %990 = vmatpush.bf16.msra.mxu0 %v933
      %991 = vmatpush.bf16.msra.mxu0 %v932
      %992 = vmatmul.bf16.gmra.mxu0 %v937
      %v993 = vpop.f32.mrf.mxu0
      %v994 = vadd.f32 %v765, %v993
      %v995 = vpop.f32.mrf.mxu0
      %v996 = vadd.f32 %v767, %v995
      %997 = vmatmul.bf16.gmra.mxu0 %v940
      %v998 = vpop.f32.mrf.mxu0
      %v999 = vadd.f32 %v770, %v998
      %v1000 = vpop.f32.mrf.mxu0
      %v1001 = vadd.f32 %v772, %v1000
      %1002 = vmatmul.bf16.gmra.mxu0 %v943
      %v1003 = vpop.f32.mrf.mxu0
      %v1004 = vadd.f32 %v775, %v1003
      %v1005 = vpop.f32.mrf.mxu0
      %v1006 = vadd.f32 %v777, %v1005
      %1007 = vmatmul.bf16.gmra.mxu0 %v946
      %v1008 = vpop.f32.mrf.mxu0
      %v1009 = vadd.f32 %v780, %v1008
      %v1010 = vpop.f32.mrf.mxu0
      %v1011 = vadd.f32 %v782, %v1010
      %1012 = vmatmul.bf16.gmra.mxu0 %v949
      %v1013 = vpop.f32.mrf.mxu0
      %v1014 = vadd.f32 %v785, %v1013
      %v1015 = vpop.f32.mrf.mxu0
      %v1016 = vadd.f32 %v787, %v1015
      %1017 = vmatmul.bf16.gmra.mxu0 %v952
      %v1018 = vpop.f32.mrf.mxu0
      %v1019 = vadd.f32 %v790, %v1018
      %v1020 = vpop.f32.mrf.mxu0
      %v1021 = vadd.f32 %v792, %v1020
      %1022 = vmatmul.bf16.gmra.mxu0 %v955
      %v1023 = vpop.f32.mrf.mxu0
      %v1024 = vadd.f32 %v795, %v1023
      %v1025 = vpop.f32.mrf.mxu0
      %v1026 = vadd.f32 %v797, %v1025
      %1027 = vmatmul.bf16.gmra.mxu0 %v958
      %v1028 = vpop.f32.mrf.mxu0
      %v1029 = vadd.f32 %v800, %v1028
      %v1030 = vpop.f32.mrf.mxu0
      %v1031 = vadd.f32 %v802, %v1030
      %1032 = vmatmul.bf16.gmra.mxu0 %v961
      %v1033 = vpop.f32.mrf.mxu0
      %v1034 = vadd.f32 %v805, %v1033
      %v1035 = vpop.f32.mrf.mxu0
      %v1036 = vadd.f32 %v807, %v1035
      %1037 = vmatmul.bf16.gmra.mxu0 %v964
      %v1038 = vpop.f32.mrf.mxu0
      %v1039 = vadd.f32 %v810, %v1038
      %v1040 = vpop.f32.mrf.mxu0
      %v1041 = vadd.f32 %v812, %v1040
      %1042 = vmatmul.bf16.gmra.mxu0 %v967
      %v1043 = vpop.f32.mrf.mxu0
      %v1044 = vadd.f32 %v815, %v1043
      %v1045 = vpop.f32.mrf.mxu0
      %v1046 = vadd.f32 %v817, %v1045
      %1047 = vmatmul.bf16.gmra.mxu0 %v970
      %v1048 = vpop.f32.mrf.mxu0
      %v1049 = vadd.f32 %v820, %v1048
      %v1050 = vpop.f32.mrf.mxu0
      %v1051 = vadd.f32 %v822, %v1050
      %1052 = vmatmul.bf16.gmra.mxu0 %v973
      %v1053 = vpop.f32.mrf.mxu0
      %v1054 = vadd.f32 %v825, %v1053
      %v1055 = vpop.f32.mrf.mxu0
      %v1056 = vadd.f32 %v827, %v1055
      %1057 = vmatmul.bf16.gmra.mxu0 %v976
      %v1058 = vpop.f32.mrf.mxu0
      %v1059 = vadd.f32 %v830, %v1058
      %v1060 = vpop.f32.mrf.mxu0
      %v1061 = vadd.f32 %v832, %v1060
      %1062 = vmatmul.bf16.gmra.mxu0 %v979
      %v1063 = vpop.f32.mrf.mxu0
      %v1064 = vadd.f32 %v835, %v1063
      %v1065 = vpop.f32.mrf.mxu0
      %v1066 = vadd.f32 %v837, %v1065
      %1067 = vmatmul.bf16.gmra.mxu0 %v982
      %v1068 = vpop.f32.mrf.mxu0
      %v1069 = vadd.f32 %v840, %v1068
      %v1070 = vpop.f32.mrf.mxu0
      %v1071 = vadd.f32 %v842, %v1070
      %1072 = vdwg.mxu0
      %s1073 = scalar_lea.vmem %s1, 32
      %v1074 = vld [vmem:[%s1073] sm:$0xf]
      %v1075 = vld [vmem:[%s1073 + $0x4] sm:$0xf]
      %v1076 = vld [vmem:[%s1073 + $0x8] sm:$0xf]
      %v1077 = vld [vmem:[%s1073 + $0xc] sm:$0xf]
      %v1080 = vunpack.c.l.b16 %v247
      %v1081 = vunpack.c.l.b16 %v248
      %v1082 = vpack.c.b16 %v1081, %v1080
      %v1087 = vunpack.c.l.b16 %v1074
      %v1088 = vunpack.c.l.b16 %v1075
      %v1089 = vunpack.c.l.b16 %v1076
      %v1090 = vunpack.c.l.b16 %v1077
      %v1091 = vpack.c.b16 %v1088, %v1087
      %v1092 = vpack.c.b16 %v1090, %v1089
      %v1096 = vsel %vm706, %v1082, 0
      %1098 = vmatpush.bf16.msra.mxu0 0
      %1099 = vmatpush.bf16.msra.mxu0 0
      %1100 = vmatpush.bf16.msra.mxu0 0
      %1101 = vmatpush.bf16.msra.mxu0 0
      %1102 = vmatpush.bf16.msra.mxu0 0
      %1103 = vmatpush.bf16.msra.mxu0 0
      %1104 = vmatpush.bf16.msra.mxu0 %v1092
      %1105 = vmatpush.bf16.msra.mxu0 %v1091
      %1106 = vmatmul.bf16.gmra.mxu0 %v940
      %v1107 = vpop.f32.mrf.mxu0
      %v1108 = vadd.f32 0.0, %v1107
      %v1109 = vpop.f32.mrf.mxu0
      %v1110 = vadd.f32 0.0, %v1109
      %1111 = vmatmul.bf16.gmra.mxu0 %v943
      %v1112 = vpop.f32.mrf.mxu0
      %v1113 = vadd.f32 0.0, %v1112
      %v1114 = vpop.f32.mrf.mxu0
      %v1115 = vadd.f32 0.0, %v1114
      %1116 = vmatmul.bf16.gmra.mxu0 %v946
      %v1117 = vpop.f32.mrf.mxu0
      %v1118 = vadd.f32 0.0, %v1117
      %v1119 = vpop.f32.mrf.mxu0
      %v1120 = vadd.f32 0.0, %v1119
      %1121 = vmatmul.bf16.gmra.mxu0 %v949
      %v1122 = vpop.f32.mrf.mxu0
      %v1123 = vadd.f32 0.0, %v1122
      %v1124 = vpop.f32.mrf.mxu0
      %v1125 = vadd.f32 0.0, %v1124
      %1126 = vmatmul.bf16.gmra.mxu0 %v952
      %v1127 = vpop.f32.mrf.mxu0
      %v1128 = vadd.f32 0.0, %v1127
      %v1129 = vpop.f32.mrf.mxu0
      %v1130 = vadd.f32 0.0, %v1129
      %1131 = vmatmul.bf16.gmra.mxu0 %v955
      %v1132 = vpop.f32.mrf.mxu0
      %v1133 = vadd.f32 0.0, %v1132
      %v1134 = vpop.f32.mrf.mxu0
      %v1135 = vadd.f32 0.0, %v1134
      %1136 = vmatmul.bf16.gmra.mxu0 %v958
      %v1137 = vpop.f32.mrf.mxu0
      %v1138 = vadd.f32 0.0, %v1137
      %v1139 = vpop.f32.mrf.mxu0
      %v1140 = vadd.f32 0.0, %v1139
      %1141 = vmatmul.bf16.gmra.mxu0 %v961
      %v1142 = vpop.f32.mrf.mxu0
      %v1143 = vadd.f32 0.0, %v1142
      %v1144 = vpop.f32.mrf.mxu0
      %v1145 = vadd.f32 0.0, %v1144
      %1146 = vmatmul.bf16.gmra.mxu0 %v964
      %v1147 = vpop.f32.mrf.mxu0
      %v1148 = vadd.f32 0.0, %v1147
      %v1149 = vpop.f32.mrf.mxu0
      %v1150 = vadd.f32 0.0, %v1149
      %1151 = vmatmul.bf16.gmra.mxu0 %v967
      %v1152 = vpop.f32.mrf.mxu0
      %v1153 = vadd.f32 0.0, %v1152
      %v1154 = vpop.f32.mrf.mxu0
      %v1155 = vadd.f32 0.0, %v1154
      %1156 = vmatmul.bf16.gmra.mxu0 %v970
      %v1157 = vpop.f32.mrf.mxu0
      %v1158 = vadd.f32 0.0, %v1157
      %v1159 = vpop.f32.mrf.mxu0
      %v1160 = vadd.f32 0.0, %v1159
      %1161 = vmatmul.bf16.gmra.mxu0 %v973
      %v1162 = vpop.f32.mrf.mxu0
      %v1163 = vadd.f32 0.0, %v1162
      %v1164 = vpop.f32.mrf.mxu0
      %v1165 = vadd.f32 0.0, %v1164
      %1166 = vmatmul.bf16.gmra.mxu0 %v976
      %v1167 = vpop.f32.mrf.mxu0
      %v1168 = vadd.f32 0.0, %v1167
      %v1169 = vpop.f32.mrf.mxu0
      %v1170 = vadd.f32 0.0, %v1169
      %1171 = vmatmul.bf16.gmra.mxu0 %v979
      %v1172 = vpop.f32.mrf.mxu0
      %v1173 = vadd.f32 0.0, %v1172
      %v1174 = vpop.f32.mrf.mxu0
      %v1175 = vadd.f32 0.0, %v1174
      %1176 = vmatmul.bf16.gmra.mxu0 %v982
      %v1177 = vpop.f32.mrf.mxu0
      %v1178 = vadd.f32 0.0, %v1177
      %v1179 = vpop.f32.mrf.mxu0
      %v1180 = vadd.f32 0.0, %v1179
      %1181 = vmatmul.bf16.gmra.mxu0 %v1096
      %v1182 = vpop.f32.mrf.mxu0
      %v1183 = vadd.f32 0.0, %v1182
      %v1184 = vpop.f32.mrf.mxu0
      %v1185 = vadd.f32 0.0, %v1184
      %1186 = vdwg.mxu0
      %v1187 = vadd.f32 %v994, %v1108
      %v1188 = vadd.f32 %v996, %v1110
      %v1189 = vadd.f32 %v999, %v1113
      %v1190 = vadd.f32 %v1001, %v1115
      %v1191 = vadd.f32 %v1004, %v1118
      %v1192 = vadd.f32 %v1006, %v1120
      %v1193 = vadd.f32 %v1009, %v1123
      %v1194 = vadd.f32 %v1011, %v1125
      %v1195 = vadd.f32 %v1014, %v1128
      %v1196 = vadd.f32 %v1016, %v1130
      %v1197 = vadd.f32 %v1019, %v1133
      %v1198 = vadd.f32 %v1021, %v1135
      %v1199 = vadd.f32 %v1024, %v1138
      %v1200 = vadd.f32 %v1026, %v1140
      %v1201 = vadd.f32 %v1029, %v1143
      %v1202 = vadd.f32 %v1031, %v1145
      %v1203 = vadd.f32 %v1034, %v1148
      %v1204 = vadd.f32 %v1036, %v1150
      %v1205 = vadd.f32 %v1039, %v1153
      %v1206 = vadd.f32 %v1041, %v1155
      %v1207 = vadd.f32 %v1044, %v1158
      %v1208 = vadd.f32 %v1046, %v1160
      %v1209 = vadd.f32 %v1049, %v1163
      %v1210 = vadd.f32 %v1051, %v1165
      %v1211 = vadd.f32 %v1054, %v1168
      %v1212 = vadd.f32 %v1056, %v1170
      %v1213 = vadd.f32 %v1059, %v1173
      %v1214 = vadd.f32 %v1061, %v1175
      %v1215 = vadd.f32 %v1064, %v1178
      %v1216 = vadd.f32 %v1066, %v1180
      %v1217 = vadd.f32 %v1069, %v1183
      %v1218 = vadd.f32 %v1071, %v1185
      %v1220 = vshrl.u32 %v247, 16
      %v1222 = vrot.slane %v1220, 4
      %v1223 = vshll.u32 %v247, 16
      %v1225 = vrot.slane %v1223, 5
      %v1226 = vor.u32 %v1222, %v1225
      %v1227 = vrot.slane %v1226, 4
      %v1229 = vshll.u32 %v248, 16
      %v1231 = vrot.slane %v1229, 5
      %v1232 = vsel %vm256, %v1227, %v1231
      %v1233 = vshrl.u32 %v248, 16
      %v1235 = vrot.slane %v1233, 4
      %v1236 = vor.u32 %v1235, %v1231
      %v1237 = vrot.slane %v1236, 4
      %v1239 = vshll.u32 %v249, 16
      %v1241 = vrot.slane %v1239, 5
      %v1242 = vsel %vm256, %v1237, %v1241
      %s1243 = scalar_lea.vmem %s1, 48
      %v1244 = vld [vmem:[%s1243] sm:$0xf]
      %v1245 = vld [vmem:[%s1243 + $0x4] sm:$0xf]
      %v1246 = vld [vmem:[%s1243 + $0x8] sm:$0xf]
      %v1247 = vld [vmem:[%s1243 + $0xc] sm:$0xf]
      %v1248 = vunpack.c.l.b16 %v1232
      %v1249 = vunpack.c.l.b16 %v1242
      %v1250 = vpack.c.b16 %v1249, %v1248
      %v1255 = vunpack.c.l.b16 %v1244
      %v1256 = vunpack.c.l.b16 %v1245
      %v1257 = vunpack.c.l.b16 %v1246
      %v1258 = vunpack.c.l.b16 %v1247
      %v1259 = vpack.c.b16 %v1256, %v1255
      %v1260 = vpack.c.b16 %v1258, %v1257
      %v1264 = vsel %vm706, %v1250, 0
      %1266 = vmatpush.bf16.msra.mxu0 0
      %1267 = vmatpush.bf16.msra.mxu0 0
      %1268 = vmatpush.bf16.msra.mxu0 0
      %1269 = vmatpush.bf16.msra.mxu0 0
      %1270 = vmatpush.bf16.msra.mxu0 0
      %1271 = vmatpush.bf16.msra.mxu0 0
      %1272 = vmatpush.bf16.msra.mxu0 %v1260
      %1273 = vmatpush.bf16.msra.mxu0 %v1259
      %1274 = vmatmul.bf16.gmra.mxu0 %v711
      %v1275 = vpop.f32.mrf.mxu0
      %v1276 = vadd.f32 0.0, %v1275
      %v1277 = vpop.f32.mrf.mxu0
      %v1278 = vadd.f32 0.0, %v1277
      %1279 = vmatmul.bf16.gmra.mxu0 %v714
      %v1280 = vpop.f32.mrf.mxu0
      %v1281 = vadd.f32 0.0, %v1280
      %v1282 = vpop.f32.mrf.mxu0
      %v1283 = vadd.f32 0.0, %v1282
      %1284 = vmatmul.bf16.gmra.mxu0 %v717
      %v1285 = vpop.f32.mrf.mxu0
      %v1286 = vadd.f32 0.0, %v1285
      %v1287 = vpop.f32.mrf.mxu0
      %v1288 = vadd.f32 0.0, %v1287
      %1289 = vmatmul.bf16.gmra.mxu0 %v720
      %v1290 = vpop.f32.mrf.mxu0
      %v1291 = vadd.f32 0.0, %v1290
      %v1292 = vpop.f32.mrf.mxu0
      %v1293 = vadd.f32 0.0, %v1292
      %1294 = vmatmul.bf16.gmra.mxu0 %v723
      %v1295 = vpop.f32.mrf.mxu0
      %v1296 = vadd.f32 0.0, %v1295
      %v1297 = vpop.f32.mrf.mxu0
      %v1298 = vadd.f32 0.0, %v1297
      %1299 = vmatmul.bf16.gmra.mxu0 %v726
      %v1300 = vpop.f32.mrf.mxu0
      %v1301 = vadd.f32 0.0, %v1300
      %v1302 = vpop.f32.mrf.mxu0
      %v1303 = vadd.f32 0.0, %v1302
      %1304 = vmatmul.bf16.gmra.mxu0 %v729
      %v1305 = vpop.f32.mrf.mxu0
      %v1306 = vadd.f32 0.0, %v1305
      %v1307 = vpop.f32.mrf.mxu0
      %v1308 = vadd.f32 0.0, %v1307
      %1309 = vmatmul.bf16.gmra.mxu0 %v732
      %v1310 = vpop.f32.mrf.mxu0
      %v1311 = vadd.f32 0.0, %v1310
      %v1312 = vpop.f32.mrf.mxu0
      %v1313 = vadd.f32 0.0, %v1312
      %1314 = vmatmul.bf16.gmra.mxu0 %v735
      %v1315 = vpop.f32.mrf.mxu0
      %v1316 = vadd.f32 0.0, %v1315
      %v1317 = vpop.f32.mrf.mxu0
      %v1318 = vadd.f32 0.0, %v1317
      %1319 = vmatmul.bf16.gmra.mxu0 %v738
      %v1320 = vpop.f32.mrf.mxu0
      %v1321 = vadd.f32 0.0, %v1320
      %v1322 = vpop.f32.mrf.mxu0
      %v1323 = vadd.f32 0.0, %v1322
      %1324 = vmatmul.bf16.gmra.mxu0 %v741
      %v1325 = vpop.f32.mrf.mxu0
      %v1326 = vadd.f32 0.0, %v1325
      %v1327 = vpop.f32.mrf.mxu0
      %v1328 = vadd.f32 0.0, %v1327
      %1329 = vmatmul.bf16.gmra.mxu0 %v744
      %v1330 = vpop.f32.mrf.mxu0
      %v1331 = vadd.f32 0.0, %v1330
      %v1332 = vpop.f32.mrf.mxu0
      %v1333 = vadd.f32 0.0, %v1332
      %1334 = vmatmul.bf16.gmra.mxu0 %v747
      %v1335 = vpop.f32.mrf.mxu0
      %v1336 = vadd.f32 0.0, %v1335
      %v1337 = vpop.f32.mrf.mxu0
      %v1338 = vadd.f32 0.0, %v1337
      %1339 = vmatmul.bf16.gmra.mxu0 %v750
      %v1340 = vpop.f32.mrf.mxu0
      %v1341 = vadd.f32 0.0, %v1340
      %v1342 = vpop.f32.mrf.mxu0
      %v1343 = vadd.f32 0.0, %v1342
      %1344 = vmatmul.bf16.gmra.mxu0 %v753
      %v1345 = vpop.f32.mrf.mxu0
      %v1346 = vadd.f32 0.0, %v1345
      %v1347 = vpop.f32.mrf.mxu0
      %v1348 = vadd.f32 0.0, %v1347
      %1349 = vmatmul.bf16.gmra.mxu0 %v1264
      %v1350 = vpop.f32.mrf.mxu0
      %v1351 = vadd.f32 0.0, %v1350
      %v1352 = vpop.f32.mrf.mxu0
      %v1353 = vadd.f32 0.0, %v1352
      %1354 = vdwg.mxu0
      %v1355 = vadd.f32 %v1187, %v1276
      %v1356 = vadd.f32 %v1188, %v1278
      %v1357 = vadd.f32 %v1189, %v1281
      %v1358 = vadd.f32 %v1190, %v1283
      %v1359 = vadd.f32 %v1191, %v1286
      %v1360 = vadd.f32 %v1192, %v1288
      %v1361 = vadd.f32 %v1193, %v1291
      %v1362 = vadd.f32 %v1194, %v1293
      %v1363 = vadd.f32 %v1195, %v1296
      %v1364 = vadd.f32 %v1196, %v1298
      %v1365 = vadd.f32 %v1197, %v1301
      %v1366 = vadd.f32 %v1198, %v1303
      %v1367 = vadd.f32 %v1199, %v1306
      %v1368 = vadd.f32 %v1200, %v1308
      %v1369 = vadd.f32 %v1201, %v1311
      %v1370 = vadd.f32 %v1202, %v1313
      %v1371 = vadd.f32 %v1203, %v1316
      %v1372 = vadd.f32 %v1204, %v1318
      %v1373 = vadd.f32 %v1205, %v1321
      %v1374 = vadd.f32 %v1206, %v1323
      %v1375 = vadd.f32 %v1207, %v1326
      %v1376 = vadd.f32 %v1208, %v1328
      %v1377 = vadd.f32 %v1209, %v1331
      %v1378 = vadd.f32 %v1210, %v1333
      %v1379 = vadd.f32 %v1211, %v1336
      %v1380 = vadd.f32 %v1212, %v1338
      %v1381 = vadd.f32 %v1213, %v1341
      %v1382 = vadd.f32 %v1214, %v1343
      %v1383 = vadd.f32 %v1215, %v1346
      %v1384 = vadd.f32 %v1216, %v1348
      %v1385 = vadd.f32 %v1217, %v1351
      %v1386 = vadd.f32 %v1218, %v1353
      %v1387 = vld [vmem:[%s2] sm:$0x1]
      %v1388 = vld [vmem:[%s3] sm:$0x1]
      %vm1389 = vcmask 130048
      %v1390 = vsel %vm1389, %v1355, 0.0
      %v1391 = vsel %vm1389, %v1356, 0.0
      %v1392 = vadd.f32 %v1390, %v1391
      %v1393 = vsel %vm1389, %v1357, 0.0
      %v1394 = vadd.f32 %v1392, %v1393
      %v1395 = vsel %vm1389, %v1358, 0.0
      %v1396 = vadd.f32 %v1394, %v1395
      %v1397 = vsel %vm1389, %v1359, 0.0
      %v1398 = vadd.f32 %v1396, %v1397
      %v1399 = vsel %vm1389, %v1360, 0.0
      %v1400 = vadd.f32 %v1398, %v1399
      %v1401 = vsel %vm1389, %v1361, 0.0
      %v1402 = vadd.f32 %v1400, %v1401
      %v1403 = vsel %vm1389, %v1362, 0.0
      %v1404 = vadd.f32 %v1402, %v1403
      %v1405 = vsel %vm1389, %v1363, 0.0
      %v1406 = vadd.f32 %v1404, %v1405
      %v1407 = vsel %vm1389, %v1364, 0.0
      %v1408 = vadd.f32 %v1406, %v1407
      %v1409 = vsel %vm1389, %v1365, 0.0
      %v1410 = vadd.f32 %v1408, %v1409
      %v1411 = vsel %vm1389, %v1366, 0.0
      %v1412 = vadd.f32 %v1410, %v1411
      %v1413 = vsel %vm1389, %v1367, 0.0
      %v1414 = vadd.f32 %v1412, %v1413
      %v1415 = vsel %vm1389, %v1368, 0.0
      %v1416 = vadd.f32 %v1414, %v1415
      %v1417 = vsel %vm1389, %v1369, 0.0
      %v1418 = vadd.f32 %v1416, %v1417
      %v1419 = vsel %vm1389, %v1370, 0.0
      %v1420 = vadd.f32 %v1418, %v1419
      %v1421 = vsel %vm1389, %v1371, 0.0
      %v1422 = vadd.f32 %v1420, %v1421
      %v1423 = vsel %vm1389, %v1372, 0.0
      %v1424 = vadd.f32 %v1422, %v1423
      %v1425 = vsel %vm1389, %v1373, 0.0
      %v1426 = vadd.f32 %v1424, %v1425
      %v1427 = vsel %vm1389, %v1374, 0.0
      %v1428 = vadd.f32 %v1426, %v1427
      %v1429 = vsel %vm1389, %v1375, 0.0
      %v1430 = vadd.f32 %v1428, %v1429
      %v1431 = vsel %vm1389, %v1376, 0.0
      %v1432 = vadd.f32 %v1430, %v1431
      %v1433 = vsel %vm1389, %v1377, 0.0
      %v1434 = vadd.f32 %v1432, %v1433
      %v1435 = vsel %vm1389, %v1378, 0.0
      %v1436 = vadd.f32 %v1434, %v1435
      %v1437 = vsel %vm1389, %v1379, 0.0
      %v1438 = vadd.f32 %v1436, %v1437
      %v1439 = vsel %vm1389, %v1380, 0.0
      %v1440 = vadd.f32 %v1438, %v1439
      %v1441 = vsel %vm1389, %v1381, 0.0
      %v1442 = vadd.f32 %v1440, %v1441
      %v1443 = vsel %vm1389, %v1382, 0.0
      %v1444 = vadd.f32 %v1442, %v1443
      %v1445 = vsel %vm1389, %v1383, 0.0
      %v1446 = vadd.f32 %v1444, %v1445
      %v1447 = vsel %vm1389, %v1384, 0.0
      %v1448 = vadd.f32 %v1446, %v1447
      %v1449 = vsel %vm1389, %v1385, 0.0
      %v1450 = vadd.f32 %v1448, %v1449
      %v1451 = vsel %vm1389, %v1386, 0.0
      %v1452 = vadd.f32 %v1450, %v1451
      %v1453 = vrot.slane %v1452, 4
      %v1454 = vadd.f32 %v1452, %v1453
      %v1455 = vrot.slane %v1454, 2
      %v1456 = vadd.f32 %v1454, %v1455
      %v1457 = vrot.slane %v1456, 1
      %v1458 = vadd.f32 %v1456, %v1457
      %v1459 = vmul.f32 %v1458, 0.00390625
      %v1460 = vsub.f32 %v1355, %v1459
      %v1461 = vsub.f32 %v1356, %v1459
      %v1462 = vsub.f32 %v1357, %v1459
      %v1463 = vsub.f32 %v1358, %v1459
      %v1464 = vsub.f32 %v1359, %v1459
      %v1465 = vsub.f32 %v1360, %v1459
      %v1466 = vsub.f32 %v1361, %v1459
      %v1467 = vsub.f32 %v1362, %v1459
      %v1468 = vsub.f32 %v1363, %v1459
      %v1469 = vsub.f32 %v1364, %v1459
      %v1470 = vsub.f32 %v1365, %v1459
      %v1471 = vsub.f32 %v1366, %v1459
      %v1472 = vsub.f32 %v1367, %v1459
      %v1473 = vsub.f32 %v1368, %v1459
      %v1474 = vsub.f32 %v1369, %v1459
      %v1475 = vsub.f32 %v1370, %v1459
      %v1476 = vsub.f32 %v1371, %v1459
      %v1477 = vsub.f32 %v1372, %v1459
      %v1478 = vsub.f32 %v1373, %v1459
      %v1479 = vsub.f32 %v1374, %v1459
      %v1480 = vsub.f32 %v1375, %v1459
      %v1481 = vsub.f32 %v1376, %v1459
      %v1482 = vsub.f32 %v1377, %v1459
      %v1483 = vsub.f32 %v1378, %v1459
      %v1484 = vsub.f32 %v1379, %v1459
      %v1485 = vsub.f32 %v1380, %v1459
      %v1486 = vsub.f32 %v1381, %v1459
      %v1487 = vsub.f32 %v1382, %v1459
      %v1488 = vsub.f32 %v1383, %v1459
      %v1489 = vsub.f32 %v1384, %v1459
      %v1490 = vsub.f32 %v1385, %v1459
      %v1491 = vsub.f32 %v1386, %v1459
      %v1492 = vmul.f32 %v1460, %v1460
      %v1493 = vmul.f32 %v1461, %v1461
      %v1494 = vmul.f32 %v1462, %v1462
      %v1495 = vmul.f32 %v1463, %v1463
      %v1496 = vmul.f32 %v1464, %v1464
      %v1497 = vmul.f32 %v1465, %v1465
      %v1498 = vmul.f32 %v1466, %v1466
      %v1499 = vmul.f32 %v1467, %v1467
      %v1500 = vmul.f32 %v1468, %v1468
      %v1501 = vmul.f32 %v1469, %v1469
      %v1502 = vmul.f32 %v1470, %v1470
      %v1503 = vmul.f32 %v1471, %v1471
      %v1504 = vmul.f32 %v1472, %v1472
      %v1505 = vmul.f32 %v1473, %v1473
      %v1506 = vmul.f32 %v1474, %v1474
      %v1507 = vmul.f32 %v1475, %v1475
      %v1508 = vmul.f32 %v1476, %v1476
      %v1509 = vmul.f32 %v1477, %v1477
      %v1510 = vmul.f32 %v1478, %v1478
      %v1511 = vmul.f32 %v1479, %v1479
      %v1512 = vmul.f32 %v1480, %v1480
      %v1513 = vmul.f32 %v1481, %v1481
      %v1514 = vmul.f32 %v1482, %v1482
      %v1515 = vmul.f32 %v1483, %v1483
      %v1516 = vmul.f32 %v1484, %v1484
      %v1517 = vmul.f32 %v1485, %v1485
      %v1518 = vmul.f32 %v1486, %v1486
      %v1519 = vmul.f32 %v1487, %v1487
      %v1520 = vmul.f32 %v1488, %v1488
      %v1521 = vmul.f32 %v1489, %v1489
      %v1522 = vmul.f32 %v1490, %v1490
      %v1523 = vmul.f32 %v1491, %v1491
      %v1524 = vsel %vm1389, %v1492, 0.0
      %v1525 = vsel %vm1389, %v1493, 0.0
      %v1526 = vadd.f32 %v1524, %v1525
      %v1527 = vsel %vm1389, %v1494, 0.0
      %v1528 = vadd.f32 %v1526, %v1527
      %v1529 = vsel %vm1389, %v1495, 0.0
      %v1530 = vadd.f32 %v1528, %v1529
      %v1531 = vsel %vm1389, %v1496, 0.0
      %v1532 = vadd.f32 %v1530, %v1531
      %v1533 = vsel %vm1389, %v1497, 0.0
      %v1534 = vadd.f32 %v1532, %v1533
      %v1535 = vsel %vm1389, %v1498, 0.0
      %v1536 = vadd.f32 %v1534, %v1535
      %v1537 = vsel %vm1389, %v1499, 0.0
      %v1538 = vadd.f32 %v1536, %v1537
      %v1539 = vsel %vm1389, %v1500, 0.0
      %v1540 = vadd.f32 %v1538, %v1539
      %v1541 = vsel %vm1389, %v1501, 0.0
      %v1542 = vadd.f32 %v1540, %v1541
      %v1543 = vsel %vm1389, %v1502, 0.0
      %v1544 = vadd.f32 %v1542, %v1543
      %v1545 = vsel %vm1389, %v1503, 0.0
      %v1546 = vadd.f32 %v1544, %v1545
      %v1547 = vsel %vm1389, %v1504, 0.0
      %v1548 = vadd.f32 %v1546, %v1547
      %v1549 = vsel %vm1389, %v1505, 0.0
      %v1550 = vadd.f32 %v1548, %v1549
      %v1551 = vsel %vm1389, %v1506, 0.0
      %v1552 = vadd.f32 %v1550, %v1551
      %v1553 = vsel %vm1389, %v1507, 0.0
      %v1554 = vadd.f32 %v1552, %v1553
      %v1555 = vsel %vm1389, %v1508, 0.0
      %v1556 = vadd.f32 %v1554, %v1555
      %v1557 = vsel %vm1389, %v1509, 0.0
      %v1558 = vadd.f32 %v1556, %v1557
      %v1559 = vsel %vm1389, %v1510, 0.0
      %v1560 = vadd.f32 %v1558, %v1559
      %v1561 = vsel %vm1389, %v1511, 0.0
      %v1562 = vadd.f32 %v1560, %v1561
      %v1563 = vsel %vm1389, %v1512, 0.0
      %v1564 = vadd.f32 %v1562, %v1563
      %v1565 = vsel %vm1389, %v1513, 0.0
      %v1566 = vadd.f32 %v1564, %v1565
      %v1567 = vsel %vm1389, %v1514, 0.0
      %v1568 = vadd.f32 %v1566, %v1567
      %v1569 = vsel %vm1389, %v1515, 0.0
      %v1570 = vadd.f32 %v1568, %v1569
      %v1571 = vsel %vm1389, %v1516, 0.0
      %v1572 = vadd.f32 %v1570, %v1571
      %v1573 = vsel %vm1389, %v1517, 0.0
      %v1574 = vadd.f32 %v1572, %v1573
      %v1575 = vsel %vm1389, %v1518, 0.0
      %v1576 = vadd.f32 %v1574, %v1575
      %v1577 = vsel %vm1389, %v1519, 0.0
      %v1578 = vadd.f32 %v1576, %v1577
      %v1579 = vsel %vm1389, %v1520, 0.0
      %v1580 = vadd.f32 %v1578, %v1579
      %v1581 = vsel %vm1389, %v1521, 0.0
      %v1582 = vadd.f32 %v1580, %v1581
      %v1583 = vsel %vm1389, %v1522, 0.0
      %v1584 = vadd.f32 %v1582, %v1583
      %v1585 = vsel %vm1389, %v1523, 0.0
      %v1586 = vadd.f32 %v1584, %v1585
      %v1587 = vrot.slane %v1586, 4
      %v1588 = vadd.f32 %v1586, %v1587
      %v1589 = vrot.slane %v1588, 2
      %v1590 = vadd.f32 %v1588, %v1589
      %v1591 = vrot.slane %v1590, 1
      %v1592 = vadd.f32 %v1590, %v1591
      %v1593 = vmul.f32 %v1592, 0.00390625
      %v1594 = vadd.f32 %v1593, 1e-05
      %v1595 = vrsqrt.pop %v1594
      %v1596 = vmul.f32 %v1595, %v1594
      %v1597 = vmul.f32 %v1596, %v1595
      %v1598 = vmul.f32 0.5, %v1597
      %v1599 = vsub.f32 1.5, %v1598
      %v1600 = vmul.f32 %v1595, %v1599
      %vm1601 = vweird.f32 %v1594
      %vm1602 = vweird.f32 %v1595
      %vm1603 = vmor %vm1601, %vm1602
      %v1604 = vsel %vm1603, %v1595, %v1600
      %v1605 = vmul.f32 %v1460, %v1604
      %v1606 = vmul.f32 %v1461, %v1604
      %v1607 = vmul.f32 %v1462, %v1604
      %v1608 = vmul.f32 %v1463, %v1604
      %v1609 = vmul.f32 %v1464, %v1604
      %v1610 = vmul.f32 %v1465, %v1604
      %v1611 = vmul.f32 %v1466, %v1604
      %v1612 = vmul.f32 %v1467, %v1604
      %v1613 = vmul.f32 %v1468, %v1604
      %v1614 = vmul.f32 %v1469, %v1604
      %v1615 = vmul.f32 %v1470, %v1604
      %v1616 = vmul.f32 %v1471, %v1604
      %v1617 = vmul.f32 %v1472, %v1604
      %v1618 = vmul.f32 %v1473, %v1604
      %v1619 = vmul.f32 %v1474, %v1604
      %v1620 = vmul.f32 %v1475, %v1604
      %v1621 = vmul.f32 %v1476, %v1604
      %v1622 = vmul.f32 %v1477, %v1604
      %v1623 = vmul.f32 %v1478, %v1604
      %v1624 = vmul.f32 %v1479, %v1604
      %v1625 = vmul.f32 %v1480, %v1604
      %v1626 = vmul.f32 %v1481, %v1604
      %v1627 = vmul.f32 %v1482, %v1604
      %v1628 = vmul.f32 %v1483, %v1604
      %v1629 = vmul.f32 %v1484, %v1604
      %v1630 = vmul.f32 %v1485, %v1604
      %v1631 = vmul.f32 %v1486, %v1604
      %v1632 = vmul.f32 %v1487, %v1604
      %v1633 = vmul.f32 %v1488, %v1604
      %v1634 = vmul.f32 %v1489, %v1604
      %v1635 = vmul.f32 %v1490, %v1604
      %v1636 = vmul.f32 %v1491, %v1604
      %v1638 = vperm.slane %v1387, 0
      %v1640 = vmul.f32 %v1605, %v1638
      %v1641 = vmul.f32 %v1606, %v1638
      %v1642 = vmul.f32 %v1607, %v1638
      %v1643 = vmul.f32 %v1608, %v1638
      %v1644 = vmul.f32 %v1609, %v1638
      %v1645 = vmul.f32 %v1610, %v1638
      %v1646 = vmul.f32 %v1611, %v1638
      %v1647 = vmul.f32 %v1612, %v1638
      %v1648 = vmul.f32 %v1613, %v1638
      %v1649 = vmul.f32 %v1614, %v1638
      %v1650 = vmul.f32 %v1615, %v1638
      %v1651 = vmul.f32 %v1616, %v1638
      %v1652 = vmul.f32 %v1617, %v1638
      %v1653 = vmul.f32 %v1618, %v1638
      %v1654 = vmul.f32 %v1619, %v1638
      %v1655 = vmul.f32 %v1620, %v1638
      %v1656 = vmul.f32 %v1621, %v1638
      %v1657 = vmul.f32 %v1622, %v1638
      %v1658 = vmul.f32 %v1623, %v1638
      %v1659 = vmul.f32 %v1624, %v1638
      %v1660 = vmul.f32 %v1625, %v1638
      %v1661 = vmul.f32 %v1626, %v1638
      %v1662 = vmul.f32 %v1627, %v1638
      %v1663 = vmul.f32 %v1628, %v1638
      %v1664 = vmul.f32 %v1629, %v1638
      %v1665 = vmul.f32 %v1630, %v1638
      %v1666 = vmul.f32 %v1631, %v1638
      %v1667 = vmul.f32 %v1632, %v1638
      %v1668 = vmul.f32 %v1633, %v1638
      %v1669 = vmul.f32 %v1634, %v1638
      %v1670 = vmul.f32 %v1635, %v1638
      %v1671 = vmul.f32 %v1636, %v1638
      %v1673 = vperm.slane %v1388, 0
      %v1675 = vadd.f32 %v1640, %v1673
      %v1676 = vadd.f32 %v1641, %v1673
      %v1677 = vadd.f32 %v1642, %v1673
      %v1678 = vadd.f32 %v1643, %v1673
      %v1679 = vadd.f32 %v1644, %v1673
      %v1680 = vadd.f32 %v1645, %v1673
      %v1681 = vadd.f32 %v1646, %v1673
      %v1682 = vadd.f32 %v1647, %v1673
      %v1683 = vadd.f32 %v1648, %v1673
      %v1684 = vadd.f32 %v1649, %v1673
      %v1685 = vadd.f32 %v1650, %v1673
      %v1686 = vadd.f32 %v1651, %v1673
      %v1687 = vadd.f32 %v1652, %v1673
      %v1688 = vadd.f32 %v1653, %v1673
      %v1689 = vadd.f32 %v1654, %v1673
      %v1690 = vadd.f32 %v1655, %v1673
      %v1691 = vadd.f32 %v1656, %v1673
      %v1692 = vadd.f32 %v1657, %v1673
      %v1693 = vadd.f32 %v1658, %v1673
      %v1694 = vadd.f32 %v1659, %v1673
      %v1695 = vadd.f32 %v1660, %v1673
      %v1696 = vadd.f32 %v1661, %v1673
      %v1697 = vadd.f32 %v1662, %v1673
      %v1698 = vadd.f32 %v1663, %v1673
      %v1699 = vadd.f32 %v1664, %v1673
      %v1700 = vadd.f32 %v1665, %v1673
      %v1701 = vadd.f32 %v1666, %v1673
      %v1702 = vadd.f32 %v1667, %v1673
      %v1703 = vadd.f32 %v1668, %v1673
      %v1704 = vadd.f32 %v1669, %v1673
      %v1705 = vadd.f32 %v1670, %v1673
      %v1706 = vadd.f32 %v1671, %v1673
      %vm1707 = vcmp.ge.f32.partialorder %v1675, 0.0
      %vm1708 = vcmp.ge.f32.partialorder %v1676, 0.0
      %vm1709 = vcmp.ge.f32.partialorder %v1677, 0.0
      %vm1710 = vcmp.ge.f32.partialorder %v1678, 0.0
      %vm1711 = vcmp.ge.f32.partialorder %v1679, 0.0
      %vm1712 = vcmp.ge.f32.partialorder %v1680, 0.0
      %vm1713 = vcmp.ge.f32.partialorder %v1681, 0.0
      %vm1714 = vcmp.ge.f32.partialorder %v1682, 0.0
      %vm1715 = vcmp.ge.f32.partialorder %v1683, 0.0
      %vm1716 = vcmp.ge.f32.partialorder %v1684, 0.0
      %vm1717 = vcmp.ge.f32.partialorder %v1685, 0.0
      %vm1718 = vcmp.ge.f32.partialorder %v1686, 0.0
      %vm1719 = vcmp.ge.f32.partialorder %v1687, 0.0
      %vm1720 = vcmp.ge.f32.partialorder %v1688, 0.0
      %vm1721 = vcmp.ge.f32.partialorder %v1689, 0.0
      %vm1722 = vcmp.ge.f32.partialorder %v1690, 0.0
      %vm1723 = vcmp.ge.f32.partialorder %v1691, 0.0
      %vm1724 = vcmp.ge.f32.partialorder %v1692, 0.0
      %vm1725 = vcmp.ge.f32.partialorder %v1693, 0.0
      %vm1726 = vcmp.ge.f32.partialorder %v1694, 0.0
      %vm1727 = vcmp.ge.f32.partialorder %v1695, 0.0
      %vm1728 = vcmp.ge.f32.partialorder %v1696, 0.0
      %vm1729 = vcmp.ge.f32.partialorder %v1697, 0.0
      %vm1730 = vcmp.ge.f32.partialorder %v1698, 0.0
      %vm1731 = vcmp.ge.f32.partialorder %v1699, 0.0
      %vm1732 = vcmp.ge.f32.partialorder %v1700, 0.0
      %vm1733 = vcmp.ge.f32.partialorder %v1701, 0.0
      %vm1734 = vcmp.ge.f32.partialorder %v1702, 0.0
      %vm1735 = vcmp.ge.f32.partialorder %v1703, 0.0
      %vm1736 = vcmp.ge.f32.partialorder %v1704, 0.0
      %vm1737 = vcmp.ge.f32.partialorder %v1705, 0.0
      %vm1738 = vcmp.ge.f32.partialorder %v1706, 0.0
      %v1739 = vmul.f32 %v1675, 0.2
      %v1740 = vmul.f32 %v1676, 0.2
      %v1741 = vmul.f32 %v1677, 0.2
      %v1742 = vmul.f32 %v1678, 0.2
      %v1743 = vmul.f32 %v1679, 0.2
      %v1744 = vmul.f32 %v1680, 0.2
      %v1745 = vmul.f32 %v1681, 0.2
      %v1746 = vmul.f32 %v1682, 0.2
      %v1747 = vmul.f32 %v1683, 0.2
      %v1748 = vmul.f32 %v1684, 0.2
      %v1749 = vmul.f32 %v1685, 0.2
      %v1750 = vmul.f32 %v1686, 0.2
      %v1751 = vmul.f32 %v1687, 0.2
      %v1752 = vmul.f32 %v1688, 0.2
      %v1753 = vmul.f32 %v1689, 0.2
      %v1754 = vmul.f32 %v1690, 0.2
      %v1755 = vmul.f32 %v1691, 0.2
      %v1756 = vmul.f32 %v1692, 0.2
      %v1757 = vmul.f32 %v1693, 0.2
      %v1758 = vmul.f32 %v1694, 0.2
      %v1759 = vmul.f32 %v1695, 0.2
      %v1760 = vmul.f32 %v1696, 0.2
      %v1761 = vmul.f32 %v1697, 0.2
      %v1762 = vmul.f32 %v1698, 0.2
      %v1763 = vmul.f32 %v1699, 0.2
      %v1764 = vmul.f32 %v1700, 0.2
      %v1765 = vmul.f32 %v1701, 0.2
      %v1766 = vmul.f32 %v1702, 0.2
      %v1767 = vmul.f32 %v1703, 0.2
      %v1768 = vmul.f32 %v1704, 0.2
      %v1769 = vmul.f32 %v1705, 0.2
      %v1770 = vmul.f32 %v1706, 0.2
      %v1771 = vsel %vm1707, %v1675, %v1739
      %v1772 = vsel %vm1708, %v1676, %v1740
      %v1773 = vsel %vm1709, %v1677, %v1741
      %v1774 = vsel %vm1710, %v1678, %v1742
      %v1775 = vsel %vm1711, %v1679, %v1743
      %v1776 = vsel %vm1712, %v1680, %v1744
      %v1777 = vsel %vm1713, %v1681, %v1745
      %v1778 = vsel %vm1714, %v1682, %v1746
      %v1779 = vsel %vm1715, %v1683, %v1747
      %v1780 = vsel %vm1716, %v1684, %v1748
      %v1781 = vsel %vm1717, %v1685, %v1749
      %v1782 = vsel %vm1718, %v1686, %v1750
      %v1783 = vsel %vm1719, %v1687, %v1751
      %v1784 = vsel %vm1720, %v1688, %v1752
      %v1785 = vsel %vm1721, %v1689, %v1753
      %v1786 = vsel %vm1722, %v1690, %v1754
      %v1787 = vsel %vm1723, %v1691, %v1755
      %v1788 = vsel %vm1724, %v1692, %v1756
      %v1789 = vsel %vm1725, %v1693, %v1757
      %v1790 = vsel %vm1726, %v1694, %v1758
      %v1791 = vsel %vm1727, %v1695, %v1759
      %v1792 = vsel %vm1728, %v1696, %v1760
      %v1793 = vsel %vm1729, %v1697, %v1761
      %v1794 = vsel %vm1730, %v1698, %v1762
      %v1795 = vsel %vm1731, %v1699, %v1763
      %v1796 = vsel %vm1732, %v1700, %v1764
      %v1797 = vsel %vm1733, %v1701, %v1765
      %v1798 = vsel %vm1734, %v1702, %v1766
      %v1799 = vsel %vm1735, %v1703, %v1767
      %v1800 = vsel %vm1736, %v1704, %v1768
      %v1801 = vsel %vm1737, %v1705, %v1769
      %v1802 = vsel %vm1738, %v1706, %v1770
      %1803 = vxpose.xlu0.b32.start [1/16] %v1771, 128
      %1804 = vxpose.xlu0.b32.cont [2/16] %v1772, 128
      %1805 = vxpose.xlu0.b32.cont [3/16] %v1773, 128
      %1806 = vxpose.xlu0.b32.cont [4/16] %v1774, 128
      %1807 = vxpose.xlu0.b32.cont [5/16] %v1775, 128
      %1808 = vxpose.xlu0.b32.cont [6/16] %v1776, 128
      %1809 = vxpose.xlu0.b32.cont [7/16] %v1777, 128
      %1810 = vxpose.xlu0.b32.cont [8/16] %v1778, 128
      %1811 = vxpose.xlu0.b32.cont [9/16] %v1779, 128
      %1812 = vxpose.xlu0.b32.cont [10/16] %v1780, 128
      %1813 = vxpose.xlu0.b32.cont [11/16] %v1781, 128
      %1814 = vxpose.xlu0.b32.cont [12/16] %v1782, 128
      %1815 = vxpose.xlu0.b32.cont [13/16] %v1783, 128
      %1816 = vxpose.xlu0.b32.cont [14/16] %v1784, 128
      %1817 = vxpose.xlu0.b32.cont [15/16] %v1785, 128
      %1818 = vxpose.xlu0.b32.end [16/16] %v1786, 128
      %v1819 = vpop.trf.xlu0
      %v1820 = vpop.trf.xlu0
      %v1821 = vpop.trf.xlu0
      %v1822 = vpop.trf.xlu0
      %v1823 = vpop.trf.xlu0
      %v1824 = vpop.trf.xlu0
      %v1825 = vpop.trf.xlu0
      %v1826 = vpop.trf.xlu0
      %v1827 = vpop.trf.xlu0
      %v1828 = vpop.trf.xlu0
      %v1829 = vpop.trf.xlu0
      %v1830 = vpop.trf.xlu0
      %v1831 = vpop.trf.xlu0
      %v1832 = vpop.trf.xlu0
      %v1833 = vpop.trf.xlu0
      %v1834 = vpop.trf.xlu0
      %1835 = vxpose.xlu0.b32.start [1/16] %v1787, 128
      %1836 = vxpose.xlu0.b32.cont [2/16] %v1788, 128
      %1837 = vxpose.xlu0.b32.cont [3/16] %v1789, 128
      %1838 = vxpose.xlu0.b32.cont [4/16] %v1790, 128
      %1839 = vxpose.xlu0.b32.cont [5/16] %v1791, 128
      %1840 = vxpose.xlu0.b32.cont [6/16] %v1792, 128
      %1841 = vxpose.xlu0.b32.cont [7/16] %v1793, 128
      %1842 = vxpose.xlu0.b32.cont [8/16] %v1794, 128
      %1843 = vxpose.xlu0.b32.cont [9/16] %v1795, 128
      %1844 = vxpose.xlu0.b32.cont [10/16] %v1796, 128
      %1845 = vxpose.xlu0.b32.cont [11/16] %v1797, 128
      %1846 = vxpose.xlu0.b32.cont [12/16] %v1798, 128
      %1847 = vxpose.xlu0.b32.cont [13/16] %v1799, 128
      %1848 = vxpose.xlu0.b32.cont [14/16] %v1800, 128
      %1849 = vxpose.xlu0.b32.cont [15/16] %v1801, 128
      %1850 = vxpose.xlu0.b32.end [16/16] %v1802, 128
      %v1851 = vpop.trf.xlu0
      %v1852 = vpop.trf.xlu0
      %v1853 = vpop.trf.xlu0
      %v1854 = vpop.trf.xlu0
      %v1855 = vpop.trf.xlu0
      %v1856 = vpop.trf.xlu0
      %v1857 = vpop.trf.xlu0
      %v1858 = vpop.trf.xlu0
      %v1859 = vpop.trf.xlu0
      %v1860 = vpop.trf.xlu0
      %v1861 = vpop.trf.xlu0
      %v1862 = vpop.trf.xlu0
      %v1863 = vpop.trf.xlu0
      %v1864 = vpop.trf.xlu0
      %v1865 = vpop.trf.xlu0
      %v1866 = vpop.trf.xlu0
      %v1867 = vpack.c.bf16 %v1851, %v1819
      %v1868 = vpack.c.bf16 %v1852, %v1820
      %1869 = vst [vmem:[%s197] sm:$0xff] %v1867
      %1870 = vst [vmem:[%s197 + $0x8] sm:$0xff] %v1868
      %p1871 = scmp.lt.s32.totalorder %s15, 1
      %s1872 = scalar_select %p1871, %s15, 1
      %s1873 = smul.addr %s1872, 4
      %s1874 = smul.addr %s1873, 4
      %s1875 = scalar_lea.vmem %s4, %s1874
      // Predicated region
      $region37: #{discriminator_forward.5} parent=35 // pred_check
        %p1876 = pneg %p122
      $region38: #{discriminator_forward.5} parent=35 // pred_check_branch
        %1878 = sbr.rel (%p1876) target = $region40
      $region39: #{discriminator_forward.5} parent=35 // pred_region
        _
      $region40: #{discriminator_forward.5} parent=35 // pred_fallthru
        _
    $region36: #{discriminator_forward.5} parent=5 // pred_fallthru
      _
    %p1879 = scmp.le.s32.totalorder 2, %s10
    // Predicated region
    $region41: #{discriminator_forward.5} parent=5 // pred_check
      %p1880 = pneg %p1879
    $region42: #{discriminator_forward.5} parent=5 // pred_check_branch
      %1882 = sbr.rel (%p1880) target = $region44
    $region43: #{discriminator_forward.5} parent=5 // pred_region
      %s1883 = ssub.s32 %s10, 2
      // Predicated region
      $region45: #{discriminator_forward.5} parent=43 // pred_check
        %p1884 = pneg %p128
      $region46: #{discriminator_forward.5} parent=43 // pred_check_branch
        %1886 = sbr.rel (%p1884) target = $region48
      $region47: #{discriminator_forward.5} parent=43 // pred_region
        %p1887 = scmp.lt.s32.totalorder %s16, 1
        %s1888 = scalar_select %p1887, %s16, 1
        %s1889 = smul.addr %s1888, 4
        %s1890 = smul.addr %s1889, 4
        %s1891 = scalar_lea.vmem %s4, %s1890
      $region48: #{discriminator_forward.5} parent=43 // pred_fallthru
        _
    $region44: #{discriminator_forward.5} parent=5 // pred_fallthru
      _
  $region6: #{discriminator_forward.5} parent=0 // loop_footer
    %s14 = sadd.s32 1, %s10
  $region7: #{discriminator_forward.5} parent=0 // loop_footer_branch
    %9 = sbr.rel target = $region3
  $region8: #{discriminator_forward.5} parent=0 // loop_exit
    _

// kernel: discriminator_forward.6
$region0: #{discriminator_forward.6}
  #allocation0 [shape = 'u32[]', space=smem, size = 0x4, offset = 0x4, fixed_abs, tag = 'smem constant byte address 0x4 - core index']
  #allocation1 [shape = 'u32[72,128]{1,0:T(1,128)}', space=vmem, size = 0x9000, scoped, tag = 'internal scratch']
  %s0 = inlined_call_operand.vmem [shape: bf16[2,9,9,64], index: 0, kind: input, shape index: {}]
  %s1 = inlined_call_operand.vmem [shape: bf16[4,64,32], index: 1, kind: input, shape index: {}]
  %s2 = inlined_call_operand.vmem [shape: f32[1,32], index: 2, kind: input, shape index: {}]
  %s3 = inlined_call_operand.vmem [shape: f32[1,32], index: 3, kind: input, shape index: {}]
  %s4 = inlined_call_operand.vmem [shape: bf16[2,32,64], index: 4, kind: output, shape index: {}]
  %s5 = sld [smem:[#allocation0]]
  $region49: #{discriminator_forward.6} parent=0
    _
  %s7 = ssub.s32 1, %s5
  %s8 = scalar_select 0, %s7, %s5
  loop: start=0, step=1, limit=4
  $region2: #{discriminator_forward.6} parent=0 // loop_pre_header
    _
  $region3: #{discriminator_forward.6} parent=0 // loop_header
    %s10 = sphi 0, %s14
    %p11 = scmp.ge.s32.totalorder %s10, 4
    %s20 = sphi 0, %s22
    %s23 = sphi 0, %s20
    %s24 = sphi 0, %s23
    %s40 = sphi 0, %s24
    %s44 = sphi 0, %s44
    %s46 = sphi 0, %s44
    %s47 = sphi 0, %s46
    %s61 = sphi 0, %s47
    %s65 = sphi 0, %s65
    %s67 = sphi 0, %s65
    %s68 = sphi 0, %s67
    %s82 = sphi 0, %s68
    %s86 = sphi 0, %s86
    %s88 = sphi 0, %s86
    %s89 = sphi 0, %s88
    %s103 = sphi 0, %s89
    %s109 = sphi 0, %s111
    %s112 = sphi 0, %s109
    %s113 = sphi 0, %s112
    %s129 = sphi 0, %s113
  $region4: #{discriminator_forward.6} parent=0 // loop_header_branch
    %13 = sbr.rel (%p11) target = $region8
  $region5: #{discriminator_forward.6} parent=0 // loop_body
    %s15 = ssub.s32 %s10, 1
    %s16 = ssub.s32 %s10, 2
    %s17 = sadd.s32 %s10, 1
    %s18 = ssub.s32 %s10, %s17
    %p19 = scmp.eq.s32.totalorder %s18, 0
    %s21 = sadd.s32 %s20, 1
    %s22 = scalar_select %p19, %s20, %s21
    %p25 = pneg %p19
    %p26 = scmp.eq.s32.totalorder %s10, 1
    %p27 = por %p25, %p26
    %p28 = scmp.ne.s32.totalorder %s20, %s23
    %p29 = scmp.eq.s32.totalorder %s10, 0
    %p30 = por %p28, %p29
    %p31 = scmp.ne.s32.totalorder %s20, %s23
    %p32 = scmp.eq.s32.totalorder %s15, 1
    %p33 = por %p31, %p32
    %p34 = scmp.ne.s32.totalorder %s23, %s24
    %p35 = scmp.eq.s32.totalorder %s15, 0
    %p36 = por %p34, %p35
    %p37 = scmp.ne.s32.totalorder %s23, %s24
    %p38 = scmp.eq.s32.totalorder %s16, 1
    %p39 = por %p37, %p38
    %p41 = scmp.ne.s32.totalorder %s24, %s40
    %p42 = scmp.eq.s32.totalorder %s16, 0
    %p43 = por %p41, %p42
    %s45 = sadd.s32 %s44, 1
    %p48 = scmp.eq.s32.totalorder %s10, 1
    %p49 = scmp.ne.s32.totalorder %s44, %s46
    %p50 = scmp.eq.s32.totalorder %s10, 0
    %p51 = por %p49, %p50
    %p52 = scmp.ne.s32.totalorder %s44, %s46
    %p53 = scmp.eq.s32.totalorder %s15, 1
    %p54 = por %p52, %p53
    %p55 = scmp.ne.s32.totalorder %s46, %s47
    %p56 = scmp.eq.s32.totalorder %s15, 0
    %p57 = por %p55, %p56
    %p58 = scmp.ne.s32.totalorder %s46, %s47
    %p59 = scmp.eq.s32.totalorder %s16, 1
    %p60 = por %p58, %p59
    %p62 = scmp.ne.s32.totalorder %s47, %s61
    %p63 = scmp.eq.s32.totalorder %s16, 0
    %p64 = por %p62, %p63
    %s66 = sadd.s32 %s65, 1
    %p69 = scmp.eq.s32.totalorder %s10, 1
    %p70 = scmp.ne.s32.totalorder %s65, %s67
    %p71 = scmp.eq.s32.totalorder %s10, 0
    %p72 = por %p70, %p71
    %p73 = scmp.ne.s32.totalorder %s65, %s67
    %p74 = scmp.eq.s32.totalorder %s15, 1
    %p75 = por %p73, %p74
    %p76 = scmp.ne.s32.totalorder %s67, %s68
    %p77 = scmp.eq.s32.totalorder %s15, 0
    %p78 = por %p76, %p77
    %p79 = scmp.ne.s32.totalorder %s67, %s68
    %p80 = scmp.eq.s32.totalorder %s16, 1
    %p81 = por %p79, %p80
    %p83 = scmp.ne.s32.totalorder %s68, %s82
    %p84 = scmp.eq.s32.totalorder %s16, 0
    %p85 = por %p83, %p84
    %s87 = sadd.s32 %s86, 1
    %p90 = scmp.eq.s32.totalorder %s10, 1
    %p91 = scmp.ne.s32.totalorder %s86, %s88
    %p92 = scmp.eq.s32.totalorder %s10, 0
    %p93 = por %p91, %p92
    %p94 = scmp.ne.s32.totalorder %s86, %s88
    %p95 = scmp.eq.s32.totalorder %s15, 1
    %p96 = por %p94, %p95
    %p97 = scmp.ne.s32.totalorder %s88, %s89
    %p98 = scmp.eq.s32.totalorder %s15, 0
    %p99 = por %p97, %p98
    %p100 = scmp.ne.s32.totalorder %s88, %s89
    %p101 = scmp.eq.s32.totalorder %s16, 1
    %p102 = por %p100, %p101
    %p104 = scmp.ne.s32.totalorder %s89, %s103
    %p105 = scmp.eq.s32.totalorder %s16, 0
    %p106 = por %p104, %p105
    %s107 = ssub.s32 %s10, %s17
    %p108 = scmp.eq.s32.totalorder %s107, 0
    %s110 = sadd.s32 %s109, 1
    %s111 = scalar_select %p108, %s109, %s110
    %p114 = pneg %p108
    %p115 = scmp.eq.s32.totalorder %s10, 1
    %p116 = por %p114, %p115
    %p117 = scmp.ne.s32.totalorder %s109, %s112
    %p118 = scmp.eq.s32.totalorder %s10, 0
    %p119 = por %p117, %p118
    %p120 = scmp.ne.s32.totalorder %s109, %s112
    %p121 = scmp.eq.s32.totalorder %s15, 1
    %p122 = por %p120, %p121
    %p123 = scmp.ne.s32.totalorder %s112, %s113
    %p124 = scmp.eq.s32.totalorder %s15, 0
    %p125 = por %p123, %p124
    %p126 = scmp.ne.s32.totalorder %s112, %s113
    %p127 = scmp.eq.s32.totalorder %s16, 1
    %p128 = por %p126, %p127
    %p130 = scmp.ne.s32.totalorder %s113, %s129
    %p131 = scmp.eq.s32.totalorder %s16, 0
    %p132 = por %p130, %p131
    %p133 = scmp.le.s32.totalorder 1, %s10
    %p134 = scmp.lt.s32.totalorder %s10, 3
    %p135 = pnand %p133, %p134
    %p136 = pneg %p135
    // Predicated region
    $region9: #{discriminator_forward.6} parent=5 // pred_check
      _
    $region10: #{discriminator_forward.6} parent=5 // pred_check_branch
      %138 = sbr.rel (%p135) target = $region12
    $region11: #{discriminator_forward.6} parent=5 // pred_region
      %s139 = ssub.s32 %s10, 1
      // Predicated region
      $region13: #{discriminator_forward.6} parent=11 // pred_check
        %p140 = pneg %p57
      $region14: #{discriminator_forward.6} parent=11 // pred_check_branch
        %142 = sbr.rel (%p140) target = $region16
      $region15: #{discriminator_forward.6} parent=11 // pred_region
        _
      $region16: #{discriminator_forward.6} parent=11 // pred_fallthru
        _
      // Predicated region
      $region17: #{discriminator_forward.6} parent=11 // pred_check
        %p143 = pneg %p78
      $region18: #{discriminator_forward.6} parent=11 // pred_check_branch
        %145 = sbr.rel (%p143) target = $region20
      $region19: #{discriminator_forward.6} parent=11 // pred_region
        _
      $region20: #{discriminator_forward.6} parent=11 // pred_fallthru
        _
      // Predicated region
      $region21: #{discriminator_forward.6} parent=11 // pred_check
        %p146 = pneg %p99
      $region22: #{discriminator_forward.6} parent=11 // pred_check_branch
        %148 = sbr.rel (%p146) target = $region24
      $region23: #{discriminator_forward.6} parent=11 // pred_region
        _
      $region24: #{discriminator_forward.6} parent=11 // pred_fallthru
        _
    $region12: #{discriminator_forward.6} parent=5 // pred_fallthru
      _
    %p149 = scmp.lt.s32.totalorder %s10, 2
    // Predicated region
    $region25: #{discriminator_forward.6} parent=5 // pred_check
      %p150 = pneg %p149
    $region26: #{discriminator_forward.6} parent=5 // pred_check_branch
      %152 = sbr.rel (%p150) target = $region28
    $region27: #{discriminator_forward.6} parent=5 // pred_region
      // Predicated region
      $region29: #{discriminator_forward.6} parent=27 // pred_check
        %p153 = pneg %p30
      $region30: #{discriminator_forward.6} parent=27 // pred_check_branch
        %155 = sbr.rel (%p153) target = $region32
      $region31: #{discriminator_forward.6} parent=27 // pred_region
        %p156 = scmp.lt.s32.totalorder %s10, 1
        %s157 = scalar_select %p156, %s10, 1
        %s158 = smul.addr %s157, 18
        %s159 = smul.addr %s158, 4
        %s160 = scalar_lea.vmem %s0, %s159
      $region32: #{discriminator_forward.6} parent=27 // pred_fallthru
        _
    $region28: #{discriminator_forward.6} parent=5 // pred_fallthru
      _
    %p161 = scmp.le.s32.totalorder 1, %s10
    %p162 = scmp.lt.s32.totalorder %s10, 3
    %p163 = pnand %p161, %p162
    %p164 = pneg %p163
    // Predicated region
    $region33: #{discriminator_forward.6} parent=5 // pred_check
      _
    $region34: #{discriminator_forward.6} parent=5 // pred_check_branch
      %166 = sbr.rel (%p163) target = $region36
    $region35: #{discriminator_forward.6} parent=5 // pred_region
      %s167 = ssub.s32 %s10, 1
      %p168 = scmp.lt.s32.totalorder %s15, 1
      %s169 = scalar_select %p168, %s15, 1
      %s170 = smul.addr %s169, 18
      %s171 = smul.addr %s170, 4
      %s172 = scalar_lea.vmem %s0, %s171
      %p173 = pneg %p36
      %p174 = pneg %p33
      %p175 = pneg %p57
      %p176 = pneg %p54
      %p177 = pneg %p78
      %p178 = pneg %p75
      %p179 = pneg %p99
      %p180 = pneg %p96
      %p181 = pneg %p125
      %p182 = pneg %p122
      %p183 = scmp.lt.s32.totalorder %s15, 1
      %s184 = scalar_select %p183, %s15, 1
      %s185 = smul.addr %s184, 4
      %s186 = smul.addr %s185, 4
      %s187 = scalar_lea.vmem %s4, %s186
      %p188 = scmp.lt.s32.totalorder %s15, 1
      %s189 = scalar_select %p188, %s15, 1
      %s190 = smul.addr %s189, 18
      %s191 = smul.addr %s190, 4
      %s192 = scalar_lea.vmem %s0, %s191
      %p193 = scmp.lt.s32.totalorder %s15, 1
      %s194 = scalar_select %p193, %s15, 1
      %s195 = smul.addr %s194, 4
      %s196 = smul.addr %s195, 4
      %s197 = scalar_lea.vmem %s4, %s196
      %v199 = vld [vmem:[%s192] sm:$0xf]
      %v200 = vld [vmem:[%s192 + $0x4] sm:$0x1]
      %v201 = vld [vmem:[%s192 + $0x8] sm:$0xf]
      %v202 = vld [vmem:[%s192 + $0xc] sm:$0x1]
      %v203 = vld [vmem:[%s192 + $0x10] sm:$0xf]
      %v204 = vld [vmem:[%s192 + $0x14] sm:$0x1]
      %v205 = vld [vmem:[%s192 + $0x18] sm:$0xf]
      %v206 = vld [vmem:[%s192 + $0x1c] sm:$0x1]
      %v207 = vld [vmem:[%s192 + $0x20] sm:$0xf]
      %v208 = vld [vmem:[%s192 + $0x24] sm:$0x1]
      %v209 = vld [vmem:[%s192 + $0x28] sm:$0xf]
      %v210 = vld [vmem:[%s192 + $0x2c] sm:$0x1]
      %v211 = vld [vmem:[%s192 + $0x30] sm:$0xf]
      %v212 = vld [vmem:[%s192 + $0x34] sm:$0x1]
      %v213 = vld [vmem:[%s192 + $0x38] sm:$0xf]
      %v214 = vld [vmem:[%s192 + $0x3c] sm:$0x1]
      %v215 = vld [vmem:[%s192 + $0x40] sm:$0xf]
      %v216 = vld [vmem:[%s192 + $0x44] sm:$0x1]
      %v217 = vld [vmem:[%s1] sm:$0xf]
      %v218 = vld [vmem:[%s1 + $0x4] sm:$0xf]
      %v219 = vld [vmem:[%s1 + $0x8] sm:$0xf]
      %v220 = vld [vmem:[%s1 + $0xc] sm:$0xf]
      %v221 = vld [vmem:[%s1 + $0x10] sm:$0xf]
      %v222 = vld [vmem:[%s1 + $0x14] sm:$0xf]
      %v223 = vld [vmem:[%s1 + $0x18] sm:$0xf]
      %v224 = vld [vmem:[%s1 + $0x1c] sm:$0xf]
      %vm225 = vsmask.f32 3328
      %vm226 = vsmask.f32 7440
      %vm227 = vmor %vm225, %vm226
      %v229 = vshrl.u32 %v199, 16
      %v231 = vrot.slane %v229, 4
      %v232 = vshll.u32 %v199, 16
      %v234 = vrot.slane %v232, 5
      %v235 = vor.u32 %v231, %v234
      %v236 = vrot.slane %v235, 4
      %v238 = vshll.u32 %v200, 16
      %v240 = vrot.slane %v238, 5
      %v241 = vsel %vm227, %v236, %v240
      %v243 = vshrl.u32 %v201, 16
      %v245 = vrot.slane %v243, 4
      %v246 = vshll.u32 %v201, 16
      %v248 = vrot.slane %v246, 5
      %v249 = vor.u32 %v245, %v248
      %v250 = vrot.slane %v249, 4
      %v252 = vshll.u32 %v202, 16
      %v254 = vrot.slane %v252, 5
      %v255 = vsel %vm227, %v250, %v254
      %v257 = vshrl.u32 %v203, 16
      %v259 = vrot.slane %v257, 4
      %v260 = vshll.u32 %v203, 16
      %v262 = vrot.slane %v260, 5
      %v263 = vor.u32 %v259, %v262
      %v264 = vrot.slane %v263, 4
      %v266 = vshll.u32 %v204, 16
      %v268 = vrot.slane %v266, 5
      %v269 = vsel %vm227, %v264, %v268
      %v271 = vshrl.u32 %v205, 16
      %v273 = vrot.slane %v271, 4
      %v274 = vshll.u32 %v205, 16
      %v276 = vrot.slane %v274, 5
      %v277 = vor.u32 %v273, %v276
      %v278 = vrot.slane %v277, 4
      %v280 = vshll.u32 %v206, 16
      %v282 = vrot.slane %v280, 5
      %v283 = vsel %vm227, %v278, %v282
      %v285 = vshrl.u32 %v207, 16
      %v287 = vrot.slane %v285, 4
      %v288 = vshll.u32 %v207, 16
      %v290 = vrot.slane %v288, 5
      %v291 = vor.u32 %v287, %v290
      %v292 = vrot.slane %v291, 4
      %v294 = vshll.u32 %v208, 16
      %v296 = vrot.slane %v294, 5
      %v297 = vsel %vm227, %v292, %v296
      %v299 = vshrl.u32 %v209, 16
      %v301 = vrot.slane %v299, 4
      %v302 = vshll.u32 %v209, 16
      %v304 = vrot.slane %v302, 5
      %v305 = vor.u32 %v301, %v304
      %v306 = vrot.slane %v305, 4
      %v308 = vshll.u32 %v210, 16
      %v310 = vrot.slane %v308, 5
      %v311 = vsel %vm227, %v306, %v310
      %v313 = vshrl.u32 %v211, 16
      %v315 = vrot.slane %v313, 4
      %v316 = vshll.u32 %v211, 16
      %v318 = vrot.slane %v316, 5
      %v319 = vor.u32 %v315, %v318
      %v320 = vrot.slane %v319, 4
      %v322 = vshll.u32 %v212, 16
      %v324 = vrot.slane %v322, 5
      %v325 = vsel %vm227, %v320, %v324
      %v327 = vshrl.u32 %v213, 16
      %v329 = vrot.slane %v327, 4
      %v330 = vshll.u32 %v213, 16
      %v332 = vrot.slane %v330, 5
      %v333 = vor.u32 %v329, %v332
      %v334 = vrot.slane %v333, 4
      %v336 = vshll.u32 %v214, 16
      %v338 = vrot.slane %v336, 5
      %v339 = vsel %vm227, %v334, %v338
      %s340 = scalar_lea.vmem %s1, 32
      %v341 = vld [vmem:[%s340] sm:$0xf]
      %v342 = vld [vmem:[%s340 + $0x4] sm:$0xf]
      %v343 = vld [vmem:[%s340 + $0x8] sm:$0xf]
      %v344 = vld [vmem:[%s340 + $0xc] sm:$0xf]
      %v345 = vld [vmem:[%s340 + $0x10] sm:$0xf]
      %v346 = vld [vmem:[%s340 + $0x14] sm:$0xf]
      %v347 = vld [vmem:[%s340 + $0x18] sm:$0xf]
      %v348 = vld [vmem:[%s340 + $0x1c] sm:$0xf]
      %v349 = vunpack.c.l.b16 %v241
      %v350 = vunpack.c.l.b16 %v255
      %v351 = vunpack.c.l.b16 %v269
      %v352 = vunpack.c.l.b16 %v283
      %v353 = vunpack.c.l.b16 %v297
      %v354 = vunpack.c.l.b16 %v311
      %v355 = vunpack.c.l.b16 %v325
      %v356 = vunpack.c.l.b16 %v339
      %v357 = vpack.c.b16 %v350, %v349
      %v358 = vpack.c.b16 %v352, %v351
      %v359 = vpack.c.b16 %v354, %v353
      %v360 = vpack.c.b16 %v356, %v355
      %v369 = vunpack.c.l.b16 %v341
      %v370 = vunpack.c.l.b16 %v342
      %v371 = vunpack.c.l.b16 %v343
      %v372 = vunpack.c.l.b16 %v344
      %v373 = vunpack.c.l.b16 %v345
      %v374 = vunpack.c.l.b16 %v346
      %v375 = vunpack.c.l.b16 %v347
      %v376 = vunpack.c.l.b16 %v348
      %v377 = vpack.c.b16 %v370, %v369
      %v378 = vpack.c.b16 %v372, %v371
      %v379 = vpack.c.b16 %v374, %v373
      %v380 = vpack.c.b16 %v376, %v375
      %vm385 = vcmask 523264
      %v387 = vsel %vm385, %v357, 0
      %v390 = vsel %vm385, %v358, 0
      %v393 = vsel %vm385, %v359, 0
      %v396 = vsel %vm385, %v360, 0
      %398 = vmatpush.bf16.msra.mxu0 0
      %399 = vmatpush.bf16.msra.mxu0 0
      %400 = vmatpush.bf16.msra.mxu0 0
      %401 = vmatpush.bf16.msra.mxu0 0
      %402 = vmatpush.bf16.msra.mxu0 %v380
      %403 = vmatpush.bf16.msra.mxu0 %v379
      %404 = vmatpush.bf16.msra.mxu0 %v378
      %405 = vmatpush.bf16.msra.mxu0 %v377
      %406 = vmatmul.bf16.gmra.mxu0 %v387
      %v407 = vpop.f32.mrf.mxu0
      %v408 = vadd.f32 0.0, %v407
      %v409 = vpop.f32.mrf.mxu0
      %v410 = vadd.f32 0.0, %v409
      %411 = vmatmul.bf16.gmra.mxu0 %v390
      %v412 = vpop.f32.mrf.mxu0
      %v413 = vadd.f32 0.0, %v412
      %v414 = vpop.f32.mrf.mxu0
      %v415 = vadd.f32 0.0, %v414
      %416 = vmatmul.bf16.gmra.mxu0 %v393
      %v417 = vpop.f32.mrf.mxu0
      %v418 = vadd.f32 0.0, %v417
      %v419 = vpop.f32.mrf.mxu0
      %v420 = vadd.f32 0.0, %v419
      %421 = vmatmul.bf16.gmra.mxu0 %v396
      %v422 = vpop.f32.mrf.mxu0
      %v423 = vadd.f32 0.0, %v422
      %v424 = vpop.f32.mrf.mxu0
      %v425 = vadd.f32 0.0, %v424
      %426 = vdwg.mxu0
      %v435 = vunpack.c.l.b16 %v199
      %v436 = vunpack.c.l.b16 %v201
      %v437 = vunpack.c.l.b16 %v203
      %v438 = vunpack.c.l.b16 %v205
      %v439 = vunpack.c.l.b16 %v207
      %v440 = vunpack.c.l.b16 %v209
      %v441 = vunpack.c.l.b16 %v211
      %v442 = vunpack.c.l.b16 %v213
      %v443 = vpack.c.b16 %v436, %v435
      %v444 = vpack.c.b16 %v438, %v437
      %v445 = vpack.c.b16 %v440, %v439
      %v446 = vpack.c.b16 %v442, %v441
      %v455 = vunpack.c.l.b16 %v217
      %v456 = vunpack.c.l.b16 %v218
      %v457 = vunpack.c.l.b16 %v219
      %v458 = vunpack.c.l.b16 %v220
      %v459 = vunpack.c.l.b16 %v221
      %v460 = vunpack.c.l.b16 %v222
      %v461 = vunpack.c.l.b16 %v223
      %v462 = vunpack.c.l.b16 %v224
      %v463 = vpack.c.b16 %v456, %v455
      %v464 = vpack.c.b16 %v458, %v457
      %v465 = vpack.c.b16 %v460, %v459
      %v466 = vpack.c.b16 %v462, %v461
      %v472 = vsel %vm385, %v443, 0
      %v475 = vsel %vm385, %v444, 0
      %v478 = vsel %vm385, %v445, 0
      %v481 = vsel %vm385, %v446, 0
      %483 = vmatpush.bf16.msra.mxu0 0
      %484 = vmatpush.bf16.msra.mxu0 0
      %485 = vmatpush.bf16.msra.mxu0 0
      %486 = vmatpush.bf16.msra.mxu0 0
      %487 = vmatpush.bf16.msra.mxu0 %v466
      %488 = vmatpush.bf16.msra.mxu0 %v465
      %489 = vmatpush.bf16.msra.mxu0 %v464
      %490 = vmatpush.bf16.msra.mxu0 %v463
      %491 = vmatmul.bf16.gmra.mxu0 %v472
      %v492 = vpop.f32.mrf.mxu0
      %v493 = vadd.f32 %v408, %v492
      %v494 = vpop.f32.mrf.mxu0
      %v495 = vadd.f32 %v410, %v494
      %496 = vmatmul.bf16.gmra.mxu0 %v475
      %v497 = vpop.f32.mrf.mxu0
      %v498 = vadd.f32 %v413, %v497
      %v499 = vpop.f32.mrf.mxu0
      %v500 = vadd.f32 %v415, %v499
      %501 = vmatmul.bf16.gmra.mxu0 %v478
      %v502 = vpop.f32.mrf.mxu0
      %v503 = vadd.f32 %v418, %v502
      %v504 = vpop.f32.mrf.mxu0
      %v505 = vadd.f32 %v420, %v504
      %506 = vmatmul.bf16.gmra.mxu0 %v481
      %v507 = vpop.f32.mrf.mxu0
      %v508 = vadd.f32 %v423, %v507
      %v509 = vpop.f32.mrf.mxu0
      %v510 = vadd.f32 %v425, %v509
      %511 = vdwg.mxu0
      %s512 = scalar_lea.vmem %s1, 64
      %v513 = vld [vmem:[%s512] sm:$0xf]
      %v514 = vld [vmem:[%s512 + $0x4] sm:$0xf]
      %v515 = vld [vmem:[%s512 + $0x8] sm:$0xf]
      %v516 = vld [vmem:[%s512 + $0xc] sm:$0xf]
      %v517 = vld [vmem:[%s512 + $0x10] sm:$0xf]
      %v518 = vld [vmem:[%s512 + $0x14] sm:$0xf]
      %v519 = vld [vmem:[%s512 + $0x18] sm:$0xf]
      %v520 = vld [vmem:[%s512 + $0x1c] sm:$0xf]
      %v522 = vunpack.c.l.b16 %v215
      %v523 = vpack.c.b16 %v437, %v436
      %v524 = vpack.c.b16 %v439, %v438
      %v525 = vpack.c.b16 %v441, %v440
      %v526 = vpack.c.b16 %v522, %v442
      %v535 = vunpack.c.l.b16 %v513
      %v536 = vunpack.c.l.b16 %v514
      %v537 = vunpack.c.l.b16 %v515
      %v538 = vunpack.c.l.b16 %v516
      %v539 = vunpack.c.l.b16 %v517
      %v540 = vunpack.c.l.b16 %v518
      %v541 = vunpack.c.l.b16 %v519
      %v542 = vunpack.c.l.b16 %v520
      %v543 = vpack.c.b16 %v536, %v535
      %v544 = vpack.c.b16 %v538, %v537
      %v545 = vpack.c.b16 %v540, %v539
      %v546 = vpack.c.b16 %v542, %v541
      %v552 = vsel %vm385, %v523, 0
      %v555 = vsel %vm385, %v524, 0
      %v558 = vsel %vm385, %v525, 0
      %v561 = vsel %vm385, %v526, 0
      %563 = vmatpush.bf16.msra.mxu0 0
      %564 = vmatpush.bf16.msra.mxu0 0
      %565 = vmatpush.bf16.msra.mxu0 0
      %566 = vmatpush.bf16.msra.mxu0 0
      %567 = vmatpush.bf16.msra.mxu0 %v546
      %568 = vmatpush.bf16.msra.mxu0 %v545
      %569 = vmatpush.bf16.msra.mxu0 %v544
      %570 = vmatpush.bf16.msra.mxu0 %v543
      %571 = vmatmul.bf16.gmra.mxu0 %v552
      %v572 = vpop.f32.mrf.mxu0
      %v573 = vadd.f32 0.0, %v572
      %v574 = vpop.f32.mrf.mxu0
      %v575 = vadd.f32 0.0, %v574
      %576 = vmatmul.bf16.gmra.mxu0 %v555
      %v577 = vpop.f32.mrf.mxu0
      %v578 = vadd.f32 0.0, %v577
      %v579 = vpop.f32.mrf.mxu0
      %v580 = vadd.f32 0.0, %v579
      %581 = vmatmul.bf16.gmra.mxu0 %v558
      %v582 = vpop.f32.mrf.mxu0
      %v583 = vadd.f32 0.0, %v582
      %v584 = vpop.f32.mrf.mxu0
      %v585 = vadd.f32 0.0, %v584
      %586 = vmatmul.bf16.gmra.mxu0 %v561
      %v587 = vpop.f32.mrf.mxu0
      %v588 = vadd.f32 0.0, %v587
      %v589 = vpop.f32.mrf.mxu0
      %v590 = vadd.f32 0.0, %v589
      %591 = vdwg.mxu0
      %v592 = vadd.f32 %v493, %v573
      %v593 = vadd.f32 %v495, %v575
      %v594 = vadd.f32 %v498, %v578
      %v595 = vadd.f32 %v500, %v580
      %v596 = vadd.f32 %v503, %v583
      %v597 = vadd.f32 %v505, %v585
      %v598 = vadd.f32 %v508, %v588
      %v599 = vadd.f32 %v510, %v590
      %v601 = vshrl.u32 %v215, 16
      %v603 = vrot.slane %v601, 4
      %v604 = vshll.u32 %v215, 16
      %v606 = vrot.slane %v604, 5
      %v607 = vor.u32 %v603, %v606
      %v608 = vrot.slane %v607, 4
      %v610 = vshll.u32 %v216, 16
      %v612 = vrot.slane %v610, 5
      %v613 = vsel %vm227, %v608, %v612
      %s614 = scalar_lea.vmem %s1, 96
      %v615 = vld [vmem:[%s614] sm:$0xf]
      %v616 = vld [vmem:[%s614 + $0x4] sm:$0xf]
      %v617 = vld [vmem:[%s614 + $0x8] sm:$0xf]
      %v618 = vld [vmem:[%s614 + $0xc] sm:$0xf]
      %v619 = vld [vmem:[%s614 + $0x10] sm:$0xf]
      %v620 = vld [vmem:[%s614 + $0x14] sm:$0xf]
      %v621 = vld [vmem:[%s614 + $0x18] sm:$0xf]
      %v622 = vld [vmem:[%s614 + $0x1c] sm:$0xf]
      %v623 = vunpack.c.l.b16 %v613
      %v624 = vpack.c.b16 %v351, %v350
      %v625 = vpack.c.b16 %v353, %v352
      %v626 = vpack.c.b16 %v355, %v354
      %v627 = vpack.c.b16 %v623, %v356
      %v636 = vunpack.c.l.b16 %v615
      %v637 = vunpack.c.l.b16 %v616
      %v638 = vunpack.c.l.b16 %v617
      %v639 = vunpack.c.l.b16 %v618
      %v640 = vunpack.c.l.b16 %v619
      %v641 = vunpack.c.l.b16 %v620
      %v642 = vunpack.c.l.b16 %v621
      %v643 = vunpack.c.l.b16 %v622
      %v644 = vpack.c.b16 %v637, %v636
      %v645 = vpack.c.b16 %v639, %v638
      %v646 = vpack.c.b16 %v641, %v640
      %v647 = vpack.c.b16 %v643, %v642
      %v653 = vsel %vm385, %v624, 0
      %v656 = vsel %vm385, %v625, 0
      %v659 = vsel %vm385, %v626, 0
      %v662 = vsel %vm385, %v627, 0
      %664 = vmatpush.bf16.msra.mxu0 0
      %665 = vmatpush.bf16.msra.mxu0 0
      %666 = vmatpush.bf16.msra.mxu0 0
      %667 = vmatpush.bf16.msra.mxu0 0
      %668 = vmatpush.bf16.msra.mxu0 %v647
      %669 = vmatpush.bf16.msra.mxu0 %v646
      %670 = vmatpush.bf16.msra.mxu0 %v645
      %671 = vmatpush.bf16.msra.mxu0 %v644
      %672 = vmatmul.bf16.gmra.mxu0 %v653
      %v673 = vpop.f32.mrf.mxu0
      %v674 = vadd.f32 0.0, %v673
      %v675 = vpop.f32.mrf.mxu0
      %v676 = vadd.f32 0.0, %v675
      %677 = vmatmul.bf16.gmra.mxu0 %v656
      %v678 = vpop.f32.mrf.mxu0
      %v679 = vadd.f32 0.0, %v678
      %v680 = vpop.f32.mrf.mxu0
      %v681 = vadd.f32 0.0, %v680
      %682 = vmatmul.bf16.gmra.mxu0 %v659
      %v683 = vpop.f32.mrf.mxu0
      %v684 = vadd.f32 0.0, %v683
      %v685 = vpop.f32.mrf.mxu0
      %v686 = vadd.f32 0.0, %v685
      %687 = vmatmul.bf16.gmra.mxu0 %v662
      %v688 = vpop.f32.mrf.mxu0
      %v689 = vadd.f32 0.0, %v688
      %v690 = vpop.f32.mrf.mxu0
      %v691 = vadd.f32 0.0, %v690
      %692 = vdwg.mxu0
      %v693 = vadd.f32 %v592, %v674
      %v694 = vadd.f32 %v593, %v676
      %v695 = vadd.f32 %v594, %v679
      %v696 = vadd.f32 %v595, %v681
      %v697 = vadd.f32 %v596, %v684
      %v698 = vadd.f32 %v597, %v686
      %v699 = vadd.f32 %v598, %v689
      %v700 = vadd.f32 %v599, %v691
      %v701 = vld [vmem:[%s2] sm:$0x1]
      %v702 = vld [vmem:[%s3] sm:$0x1]
      %vm703 = vcmask 261120
      %v704 = vsel %vm703, %v693, 0.0
      %v705 = vsel %vm703, %v694, 0.0
      %v706 = vadd.f32 %v704, %v705
      %v707 = vsel %vm703, %v695, 0.0
      %v708 = vadd.f32 %v706, %v707
      %v709 = vsel %vm703, %v696, 0.0
      %v710 = vadd.f32 %v708, %v709
      %v711 = vsel %vm703, %v697, 0.0
      %v712 = vadd.f32 %v710, %v711
      %v713 = vsel %vm703, %v698, 0.0
      %v714 = vadd.f32 %v712, %v713
      %v715 = vsel %vm703, %v699, 0.0
      %v716 = vadd.f32 %v714, %v715
      %v717 = vsel %vm703, %v700, 0.0
      %v718 = vadd.f32 %v716, %v717
      %v719 = vrot.slane %v718, 4
      %v720 = vadd.f32 %v718, %v719
      %v721 = vrot.slane %v720, 2
      %v722 = vadd.f32 %v720, %v721
      %v723 = vrot.slane %v722, 1
      %v724 = vadd.f32 %v722, %v723
      %v725 = vmul.f32 %v724, 0.015625
      %v726 = vsub.f32 %v693, %v725
      %v727 = vsub.f32 %v694, %v725
      %v728 = vsub.f32 %v695, %v725
      %v729 = vsub.f32 %v696, %v725
      %v730 = vsub.f32 %v697, %v725
      %v731 = vsub.f32 %v698, %v725
      %v732 = vsub.f32 %v699, %v725
      %v733 = vsub.f32 %v700, %v725
      %v734 = vmul.f32 %v726, %v726
      %v735 = vmul.f32 %v727, %v727
      %v736 = vmul.f32 %v728, %v728
      %v737 = vmul.f32 %v729, %v729
      %v738 = vmul.f32 %v730, %v730
      %v739 = vmul.f32 %v731, %v731
      %v740 = vmul.f32 %v732, %v732
      %v741 = vmul.f32 %v733, %v733
      %v742 = vsel %vm703, %v734, 0.0
      %v743 = vsel %vm703, %v735, 0.0
      %v744 = vadd.f32 %v742, %v743
      %v745 = vsel %vm703, %v736, 0.0
      %v746 = vadd.f32 %v744, %v745
      %v747 = vsel %vm703, %v737, 0.0
      %v748 = vadd.f32 %v746, %v747
      %v749 = vsel %vm703, %v738, 0.0
      %v750 = vadd.f32 %v748, %v749
      %v751 = vsel %vm703, %v739, 0.0
      %v752 = vadd.f32 %v750, %v751
      %v753 = vsel %vm703, %v740, 0.0
      %v754 = vadd.f32 %v752, %v753
      %v755 = vsel %vm703, %v741, 0.0
      %v756 = vadd.f32 %v754, %v755
      %v757 = vrot.slane %v756, 4
      %v758 = vadd.f32 %v756, %v757
      %v759 = vrot.slane %v758, 2
      %v760 = vadd.f32 %v758, %v759
      %v761 = vrot.slane %v760, 1
      %v762 = vadd.f32 %v760, %v761
      %v763 = vmul.f32 %v762, 0.015625
      %v764 = vadd.f32 %v763, 1e-05
      %v765 = vrsqrt.pop %v764
      %v766 = vmul.f32 %v765, %v764
      %v767 = vmul.f32 %v766, %v765
      %v768 = vmul.f32 0.5, %v767
      %v769 = vsub.f32 1.5, %v768
      %v770 = vmul.f32 %v765, %v769
      %vm771 = vweird.f32 %v764
      %vm772 = vweird.f32 %v765
      %vm773 = vmor %vm771, %vm772
      %v774 = vsel %vm773, %v765, %v770
      %v775 = vmul.f32 %v726, %v774
      %v776 = vmul.f32 %v727, %v774
      %v777 = vmul.f32 %v728, %v774
      %v778 = vmul.f32 %v729, %v774
      %v779 = vmul.f32 %v730, %v774
      %v780 = vmul.f32 %v731, %v774
      %v781 = vmul.f32 %v732, %v774
      %v782 = vmul.f32 %v733, %v774
      %v784 = vperm.slane %v701, 0
      %v786 = vmul.f32 %v775, %v784
      %v787 = vmul.f32 %v776, %v784
      %v788 = vmul.f32 %v777, %v784
      %v789 = vmul.f32 %v778, %v784
      %v790 = vmul.f32 %v779, %v784
      %v791 = vmul.f32 %v780, %v784
      %v792 = vmul.f32 %v781, %v784
      %v793 = vmul.f32 %v782, %v784
      %v795 = vperm.slane %v702, 0
      %v797 = vadd.f32 %v786, %v795
      %v798 = vadd.f32 %v787, %v795
      %v799 = vadd.f32 %v788, %v795
      %v800 = vadd.f32 %v789, %v795
      %v801 = vadd.f32 %v790, %v795
      %v802 = vadd.f32 %v791, %v795
      %v803 = vadd.f32 %v792, %v795
      %v804 = vadd.f32 %v793, %v795
      %vm805 = vcmp.ge.f32.partialorder %v797, 0.0
      %vm806 = vcmp.ge.f32.partialorder %v798, 0.0
      %vm807 = vcmp.ge.f32.partialorder %v799, 0.0
      %vm808 = vcmp.ge.f32.partialorder %v800, 0.0
      %vm809 = vcmp.ge.f32.partialorder %v801, 0.0
      %vm810 = vcmp.ge.f32.partialorder %v802, 0.0
      %vm811 = vcmp.ge.f32.partialorder %v803, 0.0
      %vm812 = vcmp.ge.f32.partialorder %v804, 0.0
      %v813 = vmul.f32 %v797, 0.2
      %v814 = vmul.f32 %v798, 0.2
      %v815 = vmul.f32 %v799, 0.2
      %v816 = vmul.f32 %v800, 0.2
      %v817 = vmul.f32 %v801, 0.2
      %v818 = vmul.f32 %v802, 0.2
      %v819 = vmul.f32 %v803, 0.2
      %v820 = vmul.f32 %v804, 0.2
      %v821 = vsel %vm805, %v797, %v813
      %v822 = vsel %vm806, %v798, %v814
      %v823 = vsel %vm807, %v799, %v815
      %v824 = vsel %vm808, %v800, %v816
      %v825 = vsel %vm809, %v801, %v817
      %v826 = vsel %vm810, %v802, %v818
      %v827 = vsel %vm811, %v803, %v819
      %v828 = vsel %vm812, %v804, %v820
      %829 = vxpose.xlu0.b32.start [1/16] %v821, 128
      %830 = vxpose.xlu0.b32.cont [2/16] %v822, 128
      %831 = vxpose.xlu0.b32.cont [3/16] %v823, 128
      %832 = vxpose.xlu0.b32.cont [4/16] %v824, 128
      %833 = vxpose.xlu0.b32.cont [5/16] %v825, 128
      %834 = vxpose.xlu0.b32.cont [6/16] %v826, 128
      %835 = vxpose.xlu0.b32.cont [7/16] %v827, 128
      %836 = vxpose.xlu0.b32.cont [8/16] %v828, 128
      %837 = vxpose.xlu0.b32.cont [9/16] 0.0, 128
      %838 = vxpose.xlu0.b32.cont [10/16] 0.0, 128
      %839 = vxpose.xlu0.b32.cont [11/16] 0.0, 128
      %840 = vxpose.xlu0.b32.cont [12/16] 0.0, 128
      %841 = vxpose.xlu0.b32.cont [13/16] 0.0, 128
      %842 = vxpose.xlu0.b32.cont [14/16] 0.0, 128
      %843 = vxpose.xlu0.b32.cont [15/16] 0.0, 128
      %844 = vxpose.xlu0.b32.end [16/16] 0.0, 128
      %v845 = vpop.trf.xlu0
      %v846 = vpop.trf.xlu0
      %v847 = vpop.trf.xlu0
      %v848 = vpop.trf.xlu0
      %v849 = vpop.trf.xlu0
      %v850 = vpop.trf.xlu0
      %v851 = vpop.trf.xlu0
      %v852 = vpop.trf.xlu0
      %v853 = vpop.trf.xlu0
      %v854 = vpop.trf.xlu0
      %v855 = vpop.trf.xlu0
      %v856 = vpop.trf.xlu0
      %v857 = vpop.trf.xlu0
      %v858 = vpop.trf.xlu0
      %v859 = vpop.trf.xlu0
      %v860 = vpop.trf.xlu0
      %v861 = vpack.c.bf16 %v845, %v845
      %v862 = vpack.c.bf16 %v846, %v846
      %v863 = vpack.c.bf16 %v847, %v847
      %v864 = vpack.c.bf16 %v848, %v848
      %vm865 = vcmask 519168
      %866 = vst.msk [vmem:[%s197] sm:$0xf] %vm865, %v861
      %867 = vst.msk [vmem:[%s197 + $0x4] sm:$0xf] %vm865, %v862
      %868 = vst.msk [vmem:[%s197 + $0x8] sm:$0xf] %vm865, %v863
      %869 = vst.msk [vmem:[%s197 + $0xc] sm:$0xf] %vm865, %v864
      %p870 = scmp.lt.s32.totalorder %s15, 1
      %s871 = scalar_select %p870, %s15, 1
      %s872 = smul.addr %s871, 4
      %s873 = smul.addr %s872, 4
      %s874 = scalar_lea.vmem %s4, %s873
      // Predicated region
      $region37: #{discriminator_forward.6} parent=35 // pred_check
        %p875 = pneg %p122
      $region38: #{discriminator_forward.6} parent=35 // pred_check_branch
        %877 = sbr.rel (%p875) target = $region40
      $region39: #{discriminator_forward.6} parent=35 // pred_region
        _
      $region40: #{discriminator_forward.6} parent=35 // pred_fallthru
        _
    $region36: #{discriminator_forward.6} parent=5 // pred_fallthru
      _
    %p878 = scmp.le.s32.totalorder 2, %s10
    // Predicated region
    $region41: #{discriminator_forward.6} parent=5 // pred_check
      %p879 = pneg %p878
    $region42: #{discriminator_forward.6} parent=5 // pred_check_branch
      %881 = sbr.rel (%p879) target = $region44
    $region43: #{discriminator_forward.6} parent=5 // pred_region
      %s882 = ssub.s32 %s10, 2
      // Predicated region
      $region45: #{discriminator_forward.6} parent=43 // pred_check
        %p883 = pneg %p128
      $region46: #{discriminator_forward.6} parent=43 // pred_check_branch
        %885 = sbr.rel (%p883) target = $region48
      $region47: #{discriminator_forward.6} parent=43 // pred_region
        %p886 = scmp.lt.s32.totalorder %s16, 1
        %s887 = scalar_select %p886, %s16, 1
        %s888 = smul.addr %s887, 4
        %s889 = smul.addr %s888, 4
        %s890 = scalar_lea.vmem %s4, %s889
      $region48: #{discriminator_forward.6} parent=43 // pred_fallthru
        _
    $region44: #{discriminator_forward.6} parent=5 // pred_fallthru
      _
  $region6: #{discriminator_forward.6} parent=0 // loop_footer
    %s14 = sadd.s32 1, %s10
  $region7: #{discriminator_forward.6} parent=0 // loop_footer_branch
    %9 = sbr.rel target = $region3
  $region8: #{discriminator_forward.6} parent=0 // loop_exit
    _

// kernel: discriminator_forward.7
$region0: #{discriminator_forward.7}
  #allocation0 [shape = 'u32[]', space=smem, size = 0x4, offset = 0x4, fixed_abs, tag = 'smem constant byte address 0x4 - core index']
  #allocation1 [shape = 'u32[72,128]{1,0:T(1,128)}', space=vmem, size = 0x9000, scoped, tag = 'internal scratch']
  #allocation2 [shape = 'f32[1,1]{1,0:T(1,128)S(1)}', space=vmem, size = 0x200, scoped, tag = 'scoped memory for discriminator_forward.7']
  %s0 = inlined_call_operand.vmem [shape: bf16[2,5,5,128], index: 0, kind: input, shape index: {}]
  %s1 = inlined_call_operand.vmem [shape: bf16[4,128,64], index: 1, kind: input, shape index: {}]
  %s2 = inlined_call_operand.vmem [shape: f32[1,64], index: 2, kind: input, shape index: {}]
  %s3 = inlined_call_operand.vmem [shape: f32[1,64], index: 3, kind: input, shape index: {}]
  %s4 = inlined_call_operand.vmem [shape: f32[16,64], index: 4, kind: input, shape index: {}]
  %s5 = inlined_call_operand.<no memory space> [shape: f32[1,1], index: 5, kind: input, shape index: {}]
  %s6 = inlined_call_operand.vmem [shape: f32[2,1,1], index: 6, kind: output, shape index: {}]
  %s7 = sld [smem:[#allocation0]]
  $region57: #{discriminator_forward.7} parent=0
    _
  %s9 = ssub.s32 1, %s7
  %s10 = scalar_select 0, %s9, %s7
  %v11 = vstv %s5
  %12 = vst [vmem:[#allocation2] sm:$0x1] %v11
  loop: start=0, step=1, limit=4
  $region2: #{discriminator_forward.7} parent=0 // loop_pre_header
    _
  $region3: #{discriminator_forward.7} parent=0 // loop_header
    %s14 = sphi 0, %s18
    %p15 = scmp.ge.s32.totalorder %s14, 4
    %s24 = sphi 0, %s26
    %s27 = sphi 0, %s24
    %s28 = sphi 0, %s27
    %s44 = sphi 0, %s28
    %s48 = sphi 0, %s48
    %s50 = sphi 0, %s48
    %s51 = sphi 0, %s50
    %s65 = sphi 0, %s51
    %s69 = sphi 0, %s69
    %s71 = sphi 0, %s69
    %s72 = sphi 0, %s71
    %s86 = sphi 0, %s72
    %s90 = sphi 0, %s90
    %s92 = sphi 0, %s90
    %s93 = sphi 0, %s92
    %s107 = sphi 0, %s93
    %s111 = sphi 0, %s111
    %s113 = sphi 0, %s111
    %s114 = sphi 0, %s113
    %s128 = sphi 0, %s114
    %s132 = sphi 0, %s132
    %s134 = sphi 0, %s132
    %s135 = sphi 0, %s134
    %s149 = sphi 0, %s135
    %s155 = sphi 0, %s157
    %s158 = sphi 0, %s155
    %s159 = sphi 0, %s158
    %s175 = sphi 0, %s159
  $region4: #{discriminator_forward.7} parent=0 // loop_header_branch
    %17 = sbr.rel (%p15) target = $region8
  $region5: #{discriminator_forward.7} parent=0 // loop_body
    %s19 = ssub.s32 %s14, 1
    %s20 = ssub.s32 %s14, 2
    %s21 = sadd.s32 %s14, 1
    %s22 = ssub.s32 %s14, %s21
    %p23 = scmp.eq.s32.totalorder %s22, 0
    %s25 = sadd.s32 %s24, 1
    %s26 = scalar_select %p23, %s24, %s25
    %p29 = pneg %p23
    %p30 = scmp.eq.s32.totalorder %s14, 1
    %p31 = por %p29, %p30
    %p32 = scmp.ne.s32.totalorder %s24, %s27
    %p33 = scmp.eq.s32.totalorder %s14, 0
    %p34 = por %p32, %p33
    %p35 = scmp.ne.s32.totalorder %s24, %s27
    %p36 = scmp.eq.s32.totalorder %s19, 1
    %p37 = por %p35, %p36
    %p38 = scmp.ne.s32.totalorder %s27, %s28
    %p39 = scmp.eq.s32.totalorder %s19, 0
    %p40 = por %p38, %p39
    %p41 = scmp.ne.s32.totalorder %s27, %s28
    %p42 = scmp.eq.s32.totalorder %s20, 1
    %p43 = por %p41, %p42
    %p45 = scmp.ne.s32.totalorder %s28, %s44
    %p46 = scmp.eq.s32.totalorder %s20, 0
    %p47 = por %p45, %p46
    %s49 = sadd.s32 %s48, 1
    %p52 = scmp.eq.s32.totalorder %s14, 1
    %p53 = scmp.ne.s32.totalorder %s48, %s50
    %p54 = scmp.eq.s32.totalorder %s14, 0
    %p55 = por %p53, %p54
    %p56 = scmp.ne.s32.totalorder %s48, %s50
    %p57 = scmp.eq.s32.totalorder %s19, 1
    %p58 = por %p56, %p57
    %p59 = scmp.ne.s32.totalorder %s50, %s51
    %p60 = scmp.eq.s32.totalorder %s19, 0
    %p61 = por %p59, %p60
    %p62 = scmp.ne.s32.totalorder %s50, %s51
    %p63 = scmp.eq.s32.totalorder %s20, 1
    %p64 = por %p62, %p63
    %p66 = scmp.ne.s32.totalorder %s51, %s65
    %p67 = scmp.eq.s32.totalorder %s20, 0
    %p68 = por %p66, %p67
    %s70 = sadd.s32 %s69, 1
    %p73 = scmp.eq.s32.totalorder %s14, 1
    %p74 = scmp.ne.s32.totalorder %s69, %s71
    %p75 = scmp.eq.s32.totalorder %s14, 0
    %p76 = por %p74, %p75
    %p77 = scmp.ne.s32.totalorder %s69, %s71
    %p78 = scmp.eq.s32.totalorder %s19, 1
    %p79 = por %p77, %p78
    %p80 = scmp.ne.s32.totalorder %s71, %s72
    %p81 = scmp.eq.s32.totalorder %s19, 0
    %p82 = por %p80, %p81
    %p83 = scmp.ne.s32.totalorder %s71, %s72
    %p84 = scmp.eq.s32.totalorder %s20, 1
    %p85 = por %p83, %p84
    %p87 = scmp.ne.s32.totalorder %s72, %s86
    %p88 = scmp.eq.s32.totalorder %s20, 0
    %p89 = por %p87, %p88
    %s91 = sadd.s32 %s90, 1
    %p94 = scmp.eq.s32.totalorder %s14, 1
    %p95 = scmp.ne.s32.totalorder %s90, %s92
    %p96 = scmp.eq.s32.totalorder %s14, 0
    %p97 = por %p95, %p96
    %p98 = scmp.ne.s32.totalorder %s90, %s92
    %p99 = scmp.eq.s32.totalorder %s19, 1
    %p100 = por %p98, %p99
    %p101 = scmp.ne.s32.totalorder %s92, %s93
    %p102 = scmp.eq.s32.totalorder %s19, 0
    %p103 = por %p101, %p102
    %p104 = scmp.ne.s32.totalorder %s92, %s93
    %p105 = scmp.eq.s32.totalorder %s20, 1
    %p106 = por %p104, %p105
    %p108 = scmp.ne.s32.totalorder %s93, %s107
    %p109 = scmp.eq.s32.totalorder %s20, 0
    %p110 = por %p108, %p109
    %s112 = sadd.s32 %s111, 1
    %p115 = scmp.eq.s32.totalorder %s14, 1
    %p116 = scmp.ne.s32.totalorder %s111, %s113
    %p117 = scmp.eq.s32.totalorder %s14, 0
    %p118 = por %p116, %p117
    %p119 = scmp.ne.s32.totalorder %s111, %s113
    %p120 = scmp.eq.s32.totalorder %s19, 1
    %p121 = por %p119, %p120
    %p122 = scmp.ne.s32.totalorder %s113, %s114
    %p123 = scmp.eq.s32.totalorder %s19, 0
    %p124 = por %p122, %p123
    %p125 = scmp.ne.s32.totalorder %s113, %s114
    %p126 = scmp.eq.s32.totalorder %s20, 1
    %p127 = por %p125, %p126
    %p129 = scmp.ne.s32.totalorder %s114, %s128
    %p130 = scmp.eq.s32.totalorder %s20, 0
    %p131 = por %p129, %p130
    %s133 = sadd.s32 %s132, 1
    %p136 = scmp.eq.s32.totalorder %s14, 1
    %p137 = scmp.ne.s32.totalorder %s132, %s134
    %p138 = scmp.eq.s32.totalorder %s14, 0
    %p139 = por %p137, %p138
    %p140 = scmp.ne.s32.totalorder %s132, %s134
    %p141 = scmp.eq.s32.totalorder %s19, 1
    %p142 = por %p140, %p141
    %p143 = scmp.ne.s32.totalorder %s134, %s135
    %p144 = scmp.eq.s32.totalorder %s19, 0
    %p145 = por %p143, %p144
    %p146 = scmp.ne.s32.totalorder %s134, %s135
    %p147 = scmp.eq.s32.totalorder %s20, 1
    %p148 = por %p146, %p147
    %p150 = scmp.ne.s32.totalorder %s135, %s149
    %p151 = scmp.eq.s32.totalorder %s20, 0
    %p152 = por %p150, %p151
    %s153 = ssub.s32 %s14, %s21
    %p154 = scmp.eq.s32.totalorder %s153, 0
    %s156 = sadd.s32 %s155, 1
    %s157 = scalar_select %p154, %s155, %s156
    %p160 = pneg %p154
    %p161 = scmp.eq.s32.totalorder %s14, 1
    %p162 = por %p160, %p161
    %p163 = scmp.ne.s32.totalorder %s155, %s158
    %p164 = scmp.eq.s32.totalorder %s14, 0
    %p165 = por %p163, %p164
    %p166 = scmp.ne.s32.totalorder %s155, %s158
    %p167 = scmp.eq.s32.totalorder %s19, 1
    %p168 = por %p166, %p167
    %p169 = scmp.ne.s32.totalorder %s158, %s159
    %p170 = scmp.eq.s32.totalorder %s19, 0
    %p171 = por %p169, %p170
    %p172 = scmp.ne.s32.totalorder %s158, %s159
    %p173 = scmp.eq.s32.totalorder %s20, 1
    %p174 = por %p172, %p173
    %p176 = scmp.ne.s32.totalorder %s159, %s175
    %p177 = scmp.eq.s32.totalorder %s20, 0
    %p178 = por %p176, %p177
    %p179 = scmp.le.s32.totalorder 1, %s14
    %p180 = scmp.lt.s32.totalorder %s14, 3
    %p181 = pnand %p179, %p180
    %p182 = pneg %p181
    // Predicated region
    $region9: #{discriminator_forward.7} parent=5 // pred_check
      _
    $region10: #{discriminator_forward.7} parent=5 // pred_check_branch
      %184 = sbr.rel (%p181) target = $region12
    $region11: #{discriminator_forward.7} parent=5 // pred_region
      %s185 = ssub.s32 %s14, 1
      // Predicated region
      $region13: #{discriminator_forward.7} parent=11 // pred_check
        %p186 = pneg %p61
      $region14: #{discriminator_forward.7} parent=11 // pred_check_branch
        %188 = sbr.rel (%p186) target = $region16
      $region15: #{discriminator_forward.7} parent=11 // pred_region
        _
      $region16: #{discriminator_forward.7} parent=11 // pred_fallthru
        _
      // Predicated region
      $region17: #{discriminator_forward.7} parent=11 // pred_check
        %p189 = pneg %p82
      $region18: #{discriminator_forward.7} parent=11 // pred_check_branch
        %191 = sbr.rel (%p189) target = $region20
      $region19: #{discriminator_forward.7} parent=11 // pred_region
        _
      $region20: #{discriminator_forward.7} parent=11 // pred_fallthru
        _
      // Predicated region
      $region21: #{discriminator_forward.7} parent=11 // pred_check
        %p192 = pneg %p103
      $region22: #{discriminator_forward.7} parent=11 // pred_check_branch
        %194 = sbr.rel (%p192) target = $region24
      $region23: #{discriminator_forward.7} parent=11 // pred_region
        _
      $region24: #{discriminator_forward.7} parent=11 // pred_fallthru
        _
      // Predicated region
      $region25: #{discriminator_forward.7} parent=11 // pred_check
        %p195 = pneg %p124
      $region26: #{discriminator_forward.7} parent=11 // pred_check_branch
        %197 = sbr.rel (%p195) target = $region28
      $region27: #{discriminator_forward.7} parent=11 // pred_region
        _
      $region28: #{discriminator_forward.7} parent=11 // pred_fallthru
        _
      // Predicated region
      $region29: #{discriminator_forward.7} parent=11 // pred_check
        %p198 = pneg %p145
      $region30: #{discriminator_forward.7} parent=11 // pred_check_branch
        %200 = sbr.rel (%p198) target = $region32
      $region31: #{discriminator_forward.7} parent=11 // pred_region
        _
      $region32: #{discriminator_forward.7} parent=11 // pred_fallthru
        _
    $region12: #{discriminator_forward.7} parent=5 // pred_fallthru
      _
    %p201 = scmp.lt.s32.totalorder %s14, 2
    // Predicated region
    $region33: #{discriminator_forward.7} parent=5 // pred_check
      %p202 = pneg %p201
    $region34: #{discriminator_forward.7} parent=5 // pred_check_branch
      %204 = sbr.rel (%p202) target = $region36
    $region35: #{discriminator_forward.7} parent=5 // pred_region
      // Predicated region
      $region37: #{discriminator_forward.7} parent=35 // pred_check
        %p205 = pneg %p34
      $region38: #{discriminator_forward.7} parent=35 // pred_check_branch
        %207 = sbr.rel (%p205) target = $region40
      $region39: #{discriminator_forward.7} parent=35 // pred_region
        %p208 = scmp.lt.s32.totalorder %s14, 1
        %s209 = scalar_select %p208, %s14, 1
        %s210 = smul.addr %s209, 5
        %s211 = smul.addr %s210, 4
        %s212 = scalar_lea.vmem %s0, %s211
      $region40: #{discriminator_forward.7} parent=35 // pred_fallthru
        _
    $region36: #{discriminator_forward.7} parent=5 // pred_fallthru
      _
    %p213 = scmp.le.s32.totalorder 1, %s14
    %p214 = scmp.lt.s32.totalorder %s14, 3
    %p215 = pnand %p213, %p214
    %p216 = pneg %p215
    // Predicated region
    $region41: #{discriminator_forward.7} parent=5 // pred_check
      _
    $region42: #{discriminator_forward.7} parent=5 // pred_check_branch
      %218 = sbr.rel (%p215) target = $region44
    $region43: #{discriminator_forward.7} parent=5 // pred_region
      %s219 = ssub.s32 %s14, 1
      %p220 = scmp.lt.s32.totalorder %s19, 1
      %s221 = scalar_select %p220, %s19, 1
      %s222 = smul.addr %s221, 5
      %s223 = smul.addr %s222, 4
      %s224 = scalar_lea.vmem %s0, %s223
      %p225 = pneg %p40
      %p226 = pneg %p37
      %p227 = pneg %p61
      %p228 = pneg %p58
      %p229 = pneg %p82
      %p230 = pneg %p79
      %p231 = pneg %p103
      %p232 = pneg %p100
      %p233 = pneg %p124
      %p234 = pneg %p121
      %p235 = pneg %p145
      %p236 = pneg %p142
      %p237 = pneg %p171
      %p238 = pneg %p168
      %p239 = scmp.lt.s32.totalorder %s19, 1
      %s240 = scalar_select %p239, %s19, 1
      %s241 = scalar_lea.vmem %s6, %s240
      %p242 = scmp.lt.s32.totalorder %s19, 1
      %s243 = scalar_select %p242, %s19, 1
      %s244 = smul.addr %s243, 5
      %s245 = smul.addr %s244, 4
      %s246 = scalar_lea.vmem %s0, %s245
      %p247 = scmp.lt.s32.totalorder %s19, 1
      %s248 = scalar_select %p247, %s19, 1
      %s249 = scalar_lea.vmem %s6, %s248
      %v250 = vld [vmem:[%s246] sm:$0x7]
      %v251 = vld [vmem:[%s246 + $0x4] sm:$0x7]
      %v252 = vld [vmem:[%s246 + $0x8] sm:$0x7]
      %v253 = vld [vmem:[%s246 + $0xc] sm:$0x7]
      %v254 = vld [vmem:[%s246 + $0x10] sm:$0x7]
      %v255 = vld [vmem:[%s1] sm:$0xf]
      %v256 = vld [vmem:[%s1 + $0x4] sm:$0xf]
      %v257 = vld [vmem:[%s1 + $0x8] sm:$0xf]
      %v258 = vld [vmem:[%s1 + $0xc] sm:$0xf]
      %v259 = vld [vmem:[%s1 + $0x10] sm:$0xf]
      %v260 = vld [vmem:[%s1 + $0x14] sm:$0xf]
      %v261 = vld [vmem:[%s1 + $0x18] sm:$0xf]
      %v262 = vld [vmem:[%s1 + $0x1c] sm:$0xf]
      %v263 = vld [vmem:[%s1 + $0x20] sm:$0xf]
      %v264 = vld [vmem:[%s1 + $0x24] sm:$0xf]
      %v265 = vld [vmem:[%s1 + $0x28] sm:$0xf]
      %v266 = vld [vmem:[%s1 + $0x2c] sm:$0xf]
      %v267 = vld [vmem:[%s1 + $0x30] sm:$0xf]
      %v268 = vld [vmem:[%s1 + $0x34] sm:$0xf]
      %v269 = vld [vmem:[%s1 + $0x38] sm:$0xf]
      %v270 = vld [vmem:[%s1 + $0x3c] sm:$0xf]
      %v275 = vrot.slane %v250, 2
      %v276 = vrot.slane %v251, 2
      %v277 = vrot.slane %v252, 2
      %v278 = vrot.slane %v253, 2
      %vm279 = vcmask 1041408
      %v282 = vsel %vm279, %v250, %v275
      %vm283 = vcmask 1043458
      %v284 = vsel %vm283, %v250, %v275
      %v286 = vrot.slane %v284, 2
      %v289 = vsel %vm279, %v251, %v276
      %v290 = vsel %vm283, %v251, %v276
      %v292 = vrot.slane %v290, 2
      %v295 = vsel %vm279, %v252, %v277
      %v296 = vsel %vm283, %v252, %v277
      %v298 = vrot.slane %v296, 2
      %v301 = vsel %vm279, %v253, %v278
      %v302 = vsel %vm283, %v253, %v278
      %v304 = vrot.slane %v302, 2
      %vm305 = vsmask.f32 1280
      %vm306 = vsmask.f32 3336
      %vm307 = vmor %vm305, %vm306
      %vm308 = vsmask.f32 5392
      %vm309 = vmor %vm307, %vm308
      %vm310 = vsmask.f32 7448
      %vm311 = vmor %vm309, %vm310
      %v312 = vshrl.u32 %v282, 16
      %v314 = vrot.slane %v312, 6
      %v315 = vshll.u32 %v282, 16
      %v317 = vrot.slane %v315, 7
      %v318 = vor.u32 %v314, %v317
      %v319 = vrot.slane %v318, 2
      %v321 = vshll.u32 %v286, 16
      %v323 = vrot.slane %v321, 7
      %v324 = vsel %vm311, %v319, %v323
      %v325 = vshrl.u32 %v289, 16
      %v327 = vrot.slane %v325, 6
      %v328 = vshll.u32 %v289, 16
      %v330 = vrot.slane %v328, 7
      %v331 = vor.u32 %v327, %v330
      %v332 = vrot.slane %v331, 2
      %v334 = vshll.u32 %v292, 16
      %v336 = vrot.slane %v334, 7
      %v337 = vsel %vm311, %v332, %v336
      %v338 = vshrl.u32 %v295, 16
      %v340 = vrot.slane %v338, 6
      %v341 = vshll.u32 %v295, 16
      %v343 = vrot.slane %v341, 7
      %v344 = vor.u32 %v340, %v343
      %v345 = vrot.slane %v344, 2
      %v347 = vshll.u32 %v298, 16
      %v349 = vrot.slane %v347, 7
      %v350 = vsel %vm311, %v345, %v349
      %v351 = vshrl.u32 %v301, 16
      %v353 = vrot.slane %v351, 6
      %v354 = vshll.u32 %v301, 16
      %v356 = vrot.slane %v354, 7
      %v357 = vor.u32 %v353, %v356
      %v358 = vrot.slane %v357, 2
      %v360 = vshll.u32 %v304, 16
      %v362 = vrot.slane %v360, 7
      %v363 = vsel %vm311, %v358, %v362
      %s364 = scalar_lea.vmem %s1, 64
      %v365 = vld [vmem:[%s364] sm:$0xf]
      %v366 = vld [vmem:[%s364 + $0x4] sm:$0xf]
      %v367 = vld [vmem:[%s364 + $0x8] sm:$0xf]
      %v368 = vld [vmem:[%s364 + $0xc] sm:$0xf]
      %v369 = vld [vmem:[%s364 + $0x10] sm:$0xf]
      %v370 = vld [vmem:[%s364 + $0x14] sm:$0xf]
      %v371 = vld [vmem:[%s364 + $0x18] sm:$0xf]
      %v372 = vld [vmem:[%s364 + $0x1c] sm:$0xf]
      %v373 = vld [vmem:[%s364 + $0x20] sm:$0xf]
      %v374 = vld [vmem:[%s364 + $0x24] sm:$0xf]
      %v375 = vld [vmem:[%s364 + $0x28] sm:$0xf]
      %v376 = vld [vmem:[%s364 + $0x2c] sm:$0xf]
      %v377 = vld [vmem:[%s364 + $0x30] sm:$0xf]
      %v378 = vld [vmem:[%s364 + $0x34] sm:$0xf]
      %v379 = vld [vmem:[%s364 + $0x38] sm:$0xf]
      %v380 = vld [vmem:[%s364 + $0x3c] sm:$0xf]
      %382 = vst [vmem:[#allocation1] ss:$4 sm:$0xff] %v324
      %s384 = scalar_lea.vmem [#allocation1], 1
      %385 = vst [vmem:[%s384] ss:$4 sm:$0xff] %v337
      %s387 = scalar_lea.vmem [#allocation1], 2
      %388 = vst [vmem:[%s387] ss:$4 sm:$0xff] %v350
      %s390 = scalar_lea.vmem [#allocation1], 3
      %391 = vst [vmem:[%s390] ss:$4 sm:$0xff] %v363
      %v392 = vld.sshfl [vmem:[#allocation1] sm:$0xff pattern:$0x73625140]
      %v410 = vunpack.c.l.b16 %v365
      %v411 = vunpack.c.l.b16 %v366
      %v412 = vunpack.c.l.b16 %v367
      %v413 = vunpack.c.l.b16 %v368
      %v414 = vunpack.c.l.b16 %v369
      %v415 = vunpack.c.l.b16 %v370
      %v416 = vunpack.c.l.b16 %v371
      %v417 = vunpack.c.l.b16 %v372
      %v418 = vunpack.c.l.b16 %v373
      %v419 = vunpack.c.l.b16 %v374
      %v420 = vunpack.c.l.b16 %v375
      %v421 = vunpack.c.l.b16 %v376
      %v422 = vunpack.c.l.b16 %v377
      %v423 = vunpack.c.l.b16 %v378
      %v424 = vunpack.c.l.b16 %v379
      %v425 = vunpack.c.l.b16 %v380
      %v426 = vpack.c.b16 %v411, %v410
      %v427 = vpack.c.b16 %v413, %v412
      %v428 = vpack.c.b16 %v415, %v414
      %v429 = vpack.c.b16 %v417, %v416
      %v430 = vpack.c.b16 %v419, %v418
      %v431 = vpack.c.b16 %v421, %v420
      %v432 = vpack.c.b16 %v423, %v422
      %v433 = vpack.c.b16 %v425, %v424
      %442 = vmatpush.bf16.msra.mxu0 %v433
      %443 = vmatpush.bf16.msra.mxu0 %v432
      %444 = vmatpush.bf16.msra.mxu0 %v431
      %445 = vmatpush.bf16.msra.mxu0 %v430
      %446 = vmatpush.bf16.msra.mxu0 %v429
      %447 = vmatpush.bf16.msra.mxu0 %v428
      %448 = vmatpush.bf16.msra.mxu0 %v427
      %449 = vmatpush.bf16.msra.mxu0 %v426
      %450 = vmatmul.bf16.gmra.mxu0 %v392
      %v451 = vpop.f32.mrf.mxu0
      %v452 = vadd.f32 0.0, %v451
      %v453 = vpop.f32.mrf.mxu0
      %v454 = vadd.f32 0.0, %v453
      %455 = vdwg.mxu0
      %456 = vst [vmem:[#allocation1] ss:$4 sm:$0xff] %v250
      %s457 = scalar_lea.vmem [#allocation1], 1
      %458 = vst [vmem:[%s457] ss:$4 sm:$0xff] %v251
      %s459 = scalar_lea.vmem [#allocation1], 2
      %460 = vst [vmem:[%s459] ss:$4 sm:$0xff] %v252
      %s461 = scalar_lea.vmem [#allocation1], 3
      %462 = vst [vmem:[%s461] ss:$4 sm:$0xff] %v253
      %v463 = vld.sshfl [vmem:[#allocation1] sm:$0xff pattern:$0x73625140]
      %v481 = vunpack.c.l.b16 %v255
      %v482 = vunpack.c.l.b16 %v256
      %v483 = vunpack.c.l.b16 %v257
      %v484 = vunpack.c.l.b16 %v258
      %v485 = vunpack.c.l.b16 %v259
      %v486 = vunpack.c.l.b16 %v260
      %v487 = vunpack.c.l.b16 %v261
      %v488 = vunpack.c.l.b16 %v262
      %v489 = vunpack.c.l.b16 %v263
      %v490 = vunpack.c.l.b16 %v264
      %v491 = vunpack.c.l.b16 %v265
      %v492 = vunpack.c.l.b16 %v266
      %v493 = vunpack.c.l.b16 %v267
      %v494 = vunpack.c.l.b16 %v268
      %v495 = vunpack.c.l.b16 %v269
      %v496 = vunpack.c.l.b16 %v270
      %v497 = vpack.c.b16 %v482, %v481
      %v498 = vpack.c.b16 %v484, %v483
      %v499 = vpack.c.b16 %v486, %v485
      %v500 = vpack.c.b16 %v488, %v487
      %v501 = vpack.c.b16 %v490, %v489
      %v502 = vpack.c.b16 %v492, %v491
      %v503 = vpack.c.b16 %v494, %v493
      %v504 = vpack.c.b16 %v496, %v495
      %513 = vmatpush.bf16.msra.mxu0 %v504
      %514 = vmatpush.bf16.msra.mxu0 %v503
      %515 = vmatpush.bf16.msra.mxu0 %v502
      %516 = vmatpush.bf16.msra.mxu0 %v501
      %517 = vmatpush.bf16.msra.mxu0 %v500
      %518 = vmatpush.bf16.msra.mxu0 %v499
      %519 = vmatpush.bf16.msra.mxu0 %v498
      %520 = vmatpush.bf16.msra.mxu0 %v497
      %521 = vmatmul.bf16.gmra.mxu0 %v463
      %v522 = vpop.f32.mrf.mxu0
      %v523 = vadd.f32 %v452, %v522
      %v524 = vpop.f32.mrf.mxu0
      %v525 = vadd.f32 %v454, %v524
      %526 = vdwg.mxu0
      %s527 = scalar_lea.vmem %s1, 128
      %v528 = vld [vmem:[%s527] sm:$0xf]
      %v529 = vld [vmem:[%s527 + $0x4] sm:$0xf]
      %v530 = vld [vmem:[%s527 + $0x8] sm:$0xf]
      %v531 = vld [vmem:[%s527 + $0xc] sm:$0xf]
      %v532 = vld [vmem:[%s527 + $0x10] sm:$0xf]
      %v533 = vld [vmem:[%s527 + $0x14] sm:$0xf]
      %v534 = vld [vmem:[%s527 + $0x18] sm:$0xf]
      %v535 = vld [vmem:[%s527 + $0x1c] sm:$0xf]
      %v536 = vld [vmem:[%s527 + $0x20] sm:$0xf]
      %v537 = vld [vmem:[%s527 + $0x24] sm:$0xf]
      %v538 = vld [vmem:[%s527 + $0x28] sm:$0xf]
      %v539 = vld [vmem:[%s527 + $0x2c] sm:$0xf]
      %v540 = vld [vmem:[%s527 + $0x30] sm:$0xf]
      %v541 = vld [vmem:[%s527 + $0x34] sm:$0xf]
      %v542 = vld [vmem:[%s527 + $0x38] sm:$0xf]
      %v543 = vld [vmem:[%s527 + $0x3c] sm:$0xf]
      %544 = vst [vmem:[#allocation1] ss:$4 sm:$0xff] %v251
      %s545 = scalar_lea.vmem [#allocation1], 1
      %546 = vst [vmem:[%s545] ss:$4 sm:$0xff] %v252
      %s547 = scalar_lea.vmem [#allocation1], 2
      %548 = vst [vmem:[%s547] ss:$4 sm:$0xff] %v253
      %s550 = scalar_lea.vmem [#allocation1], 3
      %551 = vst [vmem:[%s550] ss:$4 sm:$0xff] %v254
      %v552 = vld.sshfl [vmem:[#allocation1] sm:$0xff pattern:$0x73625140]
      %v570 = vunpack.c.l.b16 %v528
      %v571 = vunpack.c.l.b16 %v529
      %v572 = vunpack.c.l.b16 %v530
      %v573 = vunpack.c.l.b16 %v531
      %v574 = vunpack.c.l.b16 %v532
      %v575 = vunpack.c.l.b16 %v533
      %v576 = vunpack.c.l.b16 %v534
      %v577 = vunpack.c.l.b16 %v535
      %v578 = vunpack.c.l.b16 %v536
      %v579 = vunpack.c.l.b16 %v537
      %v580 = vunpack.c.l.b16 %v538
      %v581 = vunpack.c.l.b16 %v539
      %v582 = vunpack.c.l.b16 %v540
      %v583 = vunpack.c.l.b16 %v541
      %v584 = vunpack.c.l.b16 %v542
      %v585 = vunpack.c.l.b16 %v543
      %v586 = vpack.c.b16 %v571, %v570
      %v587 = vpack.c.b16 %v573, %v572
      %v588 = vpack.c.b16 %v575, %v574
      %v589 = vpack.c.b16 %v577, %v576
      %v590 = vpack.c.b16 %v579, %v578
      %v591 = vpack.c.b16 %v581, %v580
      %v592 = vpack.c.b16 %v583, %v582
      %v593 = vpack.c.b16 %v585, %v584
      %602 = vmatpush.bf16.msra.mxu0 %v593
      %603 = vmatpush.bf16.msra.mxu0 %v592
      %604 = vmatpush.bf16.msra.mxu0 %v591
      %605 = vmatpush.bf16.msra.mxu0 %v590
      %606 = vmatpush.bf16.msra.mxu0 %v589
      %607 = vmatpush.bf16.msra.mxu0 %v588
      %608 = vmatpush.bf16.msra.mxu0 %v587
      %609 = vmatpush.bf16.msra.mxu0 %v586
      %610 = vmatmul.bf16.gmra.mxu0 %v552
      %v611 = vpop.f32.mrf.mxu0
      %v612 = vadd.f32 0.0, %v611
      %v613 = vpop.f32.mrf.mxu0
      %v614 = vadd.f32 0.0, %v613
      %615 = vdwg.mxu0
      %v616 = vadd.f32 %v523, %v612
      %v617 = vadd.f32 %v525, %v614
      %v619 = vrot.slane %v254, 2
      %v621 = vsel %vm279, %v254, %v619
      %v622 = vsel %vm283, %v254, %v619
      %v624 = vrot.slane %v622, 2
      %v625 = vshrl.u32 %v621, 16
      %v627 = vrot.slane %v625, 6
      %v628 = vshll.u32 %v621, 16
      %v630 = vrot.slane %v628, 7
      %v631 = vor.u32 %v627, %v630
      %v632 = vrot.slane %v631, 2
      %v634 = vshll.u32 %v624, 16
      %v636 = vrot.slane %v634, 7
      %v637 = vsel %vm311, %v632, %v636
      %s638 = scalar_lea.vmem %s1, 192
      %v639 = vld [vmem:[%s638] sm:$0xf]
      %v640 = vld [vmem:[%s638 + $0x4] sm:$0xf]
      %v641 = vld [vmem:[%s638 + $0x8] sm:$0xf]
      %v642 = vld [vmem:[%s638 + $0xc] sm:$0xf]
      %v643 = vld [vmem:[%s638 + $0x10] sm:$0xf]
      %v644 = vld [vmem:[%s638 + $0x14] sm:$0xf]
      %v645 = vld [vmem:[%s638 + $0x18] sm:$0xf]
      %v646 = vld [vmem:[%s638 + $0x1c] sm:$0xf]
      %v647 = vld [vmem:[%s638 + $0x20] sm:$0xf]
      %v648 = vld [vmem:[%s638 + $0x24] sm:$0xf]
      %v649 = vld [vmem:[%s638 + $0x28] sm:$0xf]
      %v650 = vld [vmem:[%s638 + $0x2c] sm:$0xf]
      %v651 = vld [vmem:[%s638 + $0x30] sm:$0xf]
      %v652 = vld [vmem:[%s638 + $0x34] sm:$0xf]
      %v653 = vld [vmem:[%s638 + $0x38] sm:$0xf]
      %v654 = vld [vmem:[%s638 + $0x3c] sm:$0xf]
      %655 = vst [vmem:[#allocation1] ss:$4 sm:$0xff] %v337
      %s656 = scalar_lea.vmem [#allocation1], 1
      %657 = vst [vmem:[%s656] ss:$4 sm:$0xff] %v350
      %s658 = scalar_lea.vmem [#allocation1], 2
      %659 = vst [vmem:[%s658] ss:$4 sm:$0xff] %v363
      %s661 = scalar_lea.vmem [#allocation1], 3
      %662 = vst [vmem:[%s661] ss:$4 sm:$0xff] %v637
      %v663 = vld.sshfl [vmem:[#allocation1] sm:$0xff pattern:$0x73625140]
      %v681 = vunpack.c.l.b16 %v639
      %v682 = vunpack.c.l.b16 %v640
      %v683 = vunpack.c.l.b16 %v641
      %v684 = vunpack.c.l.b16 %v642
      %v685 = vunpack.c.l.b16 %v643
      %v686 = vunpack.c.l.b16 %v644
      %v687 = vunpack.c.l.b16 %v645
      %v688 = vunpack.c.l.b16 %v646
      %v689 = vunpack.c.l.b16 %v647
      %v690 = vunpack.c.l.b16 %v648
      %v691 = vunpack.c.l.b16 %v649
      %v692 = vunpack.c.l.b16 %v650
      %v693 = vunpack.c.l.b16 %v651
      %v694 = vunpack.c.l.b16 %v652
      %v695 = vunpack.c.l.b16 %v653
      %v696 = vunpack.c.l.b16 %v654
      %v697 = vpack.c.b16 %v682, %v681
      %v698 = vpack.c.b16 %v684, %v683
      %v699 = vpack.c.b16 %v686, %v685
      %v700 = vpack.c.b16 %v688, %v687
      %v701 = vpack.c.b16 %v690, %v689
      %v702 = vpack.c.b16 %v692, %v691
      %v703 = vpack.c.b16 %v694, %v693
      %v704 = vpack.c.b16 %v696, %v695
      %713 = vmatpush.bf16.msra.mxu0 %v704
      %714 = vmatpush.bf16.msra.mxu0 %v703
      %715 = vmatpush.bf16.msra.mxu0 %v702
      %716 = vmatpush.bf16.msra.mxu0 %v701
      %717 = vmatpush.bf16.msra.mxu0 %v700
      %718 = vmatpush.bf16.msra.mxu0 %v699
      %719 = vmatpush.bf16.msra.mxu0 %v698
      %720 = vmatpush.bf16.msra.mxu0 %v697
      %721 = vmatmul.bf16.gmra.mxu0 %v663
      %v722 = vpop.f32.mrf.mxu0
      %v723 = vadd.f32 0.0, %v722
      %v724 = vpop.f32.mrf.mxu0
      %v725 = vadd.f32 0.0, %v724
      %726 = vdwg.mxu0
      %v727 = vadd.f32 %v616, %v723
      %v728 = vadd.f32 %v617, %v725
      %v729 = vld [vmem:[%s2] sm:$0x1]
      %v730 = vld [vmem:[%s3] sm:$0x1]
      %vm731 = vcmask 523264
      %v732 = vsel %vm731, %v727, 0.0
      %v733 = vsel %vm731, %v728, 0.0
      %v734 = vadd.f32 %v732, %v733
      %v735 = vrot.slane %v734, 4
      %v736 = vadd.f32 %v734, %v735
      %v737 = vrot.slane %v736, 2
      %v738 = vadd.f32 %v736, %v737
      %v739 = vrot.slane %v738, 1
      %v740 = vadd.f32 %v738, %v739
      %v741 = vmul.f32 %v740, 0.0625
      %v742 = vsub.f32 %v727, %v741
      %v743 = vsub.f32 %v728, %v741
      %v744 = vmul.f32 %v742, %v742
      %v745 = vmul.f32 %v743, %v743
      %v746 = vsel %vm731, %v744, 0.0
      %v747 = vsel %vm731, %v745, 0.0
      %v748 = vadd.f32 %v746, %v747
      %v749 = vrot.slane %v748, 4
      %v750 = vadd.f32 %v748, %v749
      %v751 = vrot.slane %v750, 2
      %v752 = vadd.f32 %v750, %v751
      %v753 = vrot.slane %v752, 1
      %v754 = vadd.f32 %v752, %v753
      %v755 = vmul.f32 %v754, 0.0625
      %v756 = vadd.f32 %v755, 1e-05
      %v757 = vrsqrt.pop %v756
      %v758 = vmul.f32 %v757, %v756
      %v759 = vmul.f32 %v758, %v757
      %v760 = vmul.f32 0.5, %v759
      %v761 = vsub.f32 1.5, %v760
      %v762 = vmul.f32 %v757, %v761
      %vm763 = vweird.f32 %v756
      %vm764 = vweird.f32 %v757
      %vm765 = vmor %vm763, %vm764
      %v766 = vsel %vm765, %v757, %v762
      %v767 = vmul.f32 %v742, %v766
      %v768 = vmul.f32 %v743, %v766
      %v770 = vperm.slane %v729, 0
      %v772 = vmul.f32 %v767, %v770
      %v773 = vmul.f32 %v768, %v770
      %v775 = vperm.slane %v730, 0
      %v777 = vadd.f32 %v772, %v775
      %v778 = vadd.f32 %v773, %v775
      %vm779 = vcmp.ge.f32.partialorder %v777, 0.0
      %vm780 = vcmp.ge.f32.partialorder %v778, 0.0
      %v781 = vmul.f32 %v777, 0.2
      %v782 = vmul.f32 %v778, 0.2
      %v783 = vsel %vm779, %v777, %v781
      %v784 = vsel %vm780, %v778, %v782
      %v785 = vld [vmem:[%s4] sm:$0xff]
      %v786 = vld [vmem:[%s4 + $0x8] sm:$0xff]
      %v787 = vmul.f32 %v783, %v785
      %v788 = vmul.f32 %v784, %v786
      %v789 = vsel %vm731, %v787, 0.0
      %790 = vadd.xlane.f32.xlu0 %v789
      %v791 = vpop.xlane.xlu0 %790
      %v792 = vsel %vm731, %v788, 0.0
      %793 = vadd.xlane.f32.xlu0 %v792
      %v794 = vpop.xlane.xlu0 %793
      %v795 = vadd.f32 %v791, %v794
      %v796 = vrot.slane %v795, 4
      %v797 = vadd.f32 %v795, %v796
      %v798 = vrot.slane %v797, 2
      %v799 = vadd.f32 %v797, %v798
      %v800 = vrot.slane %v799, 1
      %v801 = vadd.f32 %v799, %v800
      %v802 = vld [vmem:[#allocation2] sm:$0x1]
      %v803 = vadd.f32 %v801, %v802
      %vm804 = vcmask 0
      %805 = vst.msk [vmem:[%s249] sm:$0x1] %vm804, %v803
      %p806 = scmp.lt.s32.totalorder %s19, 1
      %s807 = scalar_select %p806, %s19, 1
      %s808 = scalar_lea.vmem %s6, %s807
      // Predicated region
      $region45: #{discriminator_forward.7} parent=43 // pred_check
        %p809 = pneg %p168
      $region46: #{discriminator_forward.7} parent=43 // pred_check_branch
        %811 = sbr.rel (%p809) target = $region48
      $region47: #{discriminator_forward.7} parent=43 // pred_region
        _
      $region48: #{discriminator_forward.7} parent=43 // pred_fallthru
        _
    $region44: #{discriminator_forward.7} parent=5 // pred_fallthru
      _
    %p812 = scmp.le.s32.totalorder 2, %s14
    // Predicated region
    $region49: #{discriminator_forward.7} parent=5 // pred_check
      %p813 = pneg %p812
    $region50: #{discriminator_forward.7} parent=5 // pred_check_branch
      %815 = sbr.rel (%p813) target = $region52
    $region51: #{discriminator_forward.7} parent=5 // pred_region
      %s816 = ssub.s32 %s14, 2
      // Predicated region
      $region53: #{discriminator_forward.7} parent=51 // pred_check
        %p817 = pneg %p174
      $region54: #{discriminator_forward.7} parent=51 // pred_check_branch
        %819 = sbr.rel (%p817) target = $region56
      $region55: #{discriminator_forward.7} parent=51 // pred_region
        %p820 = scmp.lt.s32.totalorder %s20, 1
        %s821 = scalar_select %p820, %s20, 1
        %s822 = scalar_lea.vmem %s6, %s821
      $region56: #{discriminator_forward.7} parent=51 // pred_fallthru
        _
    $region52: #{discriminator_forward.7} parent=5 // pred_fallthru
      _
  $region6: #{discriminator_forward.7} parent=0 // loop_footer
    %s18 = sadd.s32 1, %s14
  $region7: #{discriminator_forward.7} parent=0 // loop_footer_branch
    %13 = sbr.rel target = $region3
  $region8: #{discriminator_forward.7} parent=0 // loop_exit
    _

</llo_original>
